<compile_context>
chip_gen: v6e
topology: v6e:2x2x1
jax: 0.10.0
libtpu: 0.0.40
codegen_flags: <defaults>
</compile_context>

<pallas_src>
import functools

import numpy as np
import jax
import jax.numpy as jnp
from jax.experimental import pallas as pl
from jax.experimental.pallas import tpu as pltpu


def bilinear_matrix(out_size, in_size):
    """Matrix M with y = M @ x reproducing F.interpolate(mode='bilinear',
    align_corners=False) along one axis (PyTorch half-pixel convention)."""
    dst = np.arange(out_size, dtype=np.float64)
    src = np.maximum((dst + 0.5) * (in_size / out_size) - 0.5, 0.0)
    i0 = np.minimum(np.floor(src).astype(np.int64), in_size - 1)
    i1 = np.minimum(i0 + 1, in_size - 1)
    w1 = src - i0
    w0 = 1.0 - w1
    m = np.zeros((out_size, in_size), np.float64)
    m[np.arange(out_size), i0] += w0
    m[np.arange(out_size), i1] += w1
    return m.astype(np.float32)


def _bev_fusion_kernel(x_ref, aw_ref, wk_ref, bias_ref, o_ref, zp_ref, *,
                       tile_h, out_h, out_w, h_in, c_in):
    # x_ref:    (1, h_in, w_in, c_in)  bf16, one batch element (NHWC, channels on lanes)
    # aw_ref:   (out_w+2, w_in)        bf16, W-interp matrix; zero first/last rows = conv W-pad
    # wk_ref:   (9, c_in, cout_p)      bf16, per-tap conv weights with BN scale folded in
    # bias_ref: (1, cout_p)            f32, folded BN bias (inference)
    # o_ref:    (1, tile_h, out_w, cout_p) f32
    # zp_ref:   (tile_h+2, out_w+2, c_in)  bf16 VMEM scratch (padded, resized tile)
    t = pl.program_id(1)
    aw = aw_ref[...]                                    # (out_w+2, w_in) bf16
    h_scale = float(h_in) / float(out_h)

    # ---- bilinear resize into the padded scratch ------------------------------
    # H axis: 2-row lerp (indices/weights derived from the global padded row id;
    #         zero weights on the conv's zero-padding rows).
    # W axis: one small matmul per row; aw already carries the W zero padding.
    for p in range(tile_h + 2):
        g = t * tile_h + p                              # padded global row in [0, out_h+2)
        is_pad = jnp.logical_or(g == 0, g == out_h + 1)
        r = (g - 1).astype(jnp.float32)                 # resized row index (may be -1 / out_h at pads)
        src = jnp.maximum((r + 0.5) * h_scale - 0.5, 0.0)
        i0 = jnp.minimum(jnp.floor(src), float(h_in - 1)).astype(jnp.int32)
        i1 = jnp.minimum(i0 + 1, h_in - 1)
        w1 = src - i0.astype(jnp.float32)
        w0 = 1.0 - w1
        w0 = jnp.where(is_pad, 0.0, w0)
        w1 = jnp.where(is_pad, 0.0, w1)
        row = (w0 * x_ref[0, i0, :, :].astype(jnp.float32)
               + w1 * x_ref[0, i1, :, :].astype(jnp.float32))        # (w_in, c_in) f32
        zp_ref[p] = jnp.dot(aw, row.astype(jnp.bfloat16),
                            preferred_element_type=jnp.float32
                            ).astype(jnp.bfloat16)                   # (out_w+2, c_in)

    # ---- 3x3 conv (padding already baked into zp) as 9 shifted matmuls --------
    cout_p = o_ref.shape[-1]
    acc = jnp.zeros((tile_h * out_w, cout_p), jnp.float32)
    for k in range(9):
        dy, dx = divmod(k, 3)
        patch = zp_ref[dy:dy + tile_h, dx:dx + out_w, :]             # (tile_h, out_w, c_in) bf16
        acc = acc + jnp.dot(patch.reshape(tile_h * out_w, c_in), wk_ref[k],
                            preferred_element_type=jnp.float32)

    # ---- folded BatchNorm bias + ReLU (f32 epilogue) ---------------------------
    out = jnp.maximum(acc + bias_ref[...], 0.0)
    o_ref[0] = out.reshape(tile_h, out_w, cout_p)


class BEVFusionPallas:
    """Pallas implementation of BEVFusion (pts_feats path, inference mode)."""

    def __init__(self, in_channels, out_channels, out_h, out_w, *, key,
                 vtransform_feat_level=0, vtransform=None):
        self.in_channels = in_channels
        self.out_channels = out_channels
        self.out_h = out_h
        self.out_w = out_w
        self.eps = 1e-5

        # Deterministic synthetic parameters (not a checkpoint).
        fan_in = in_channels * 9
        self.w_conv = (jax.random.normal(
            key, (out_channels, in_channels, 3, 3), jnp.float32)
            * np.sqrt(2.0 / fan_in))
        c = jnp.arange(out_channels, dtype=jnp.float32)
        self.gamma = 1.0 + 0.1 * c / out_channels
        self.beta = 0.05 * c
        self.running_mean = 0.02 * (c - out_channels / 2.0)
        self.running_var = 1.0 + 0.1 * c / out_channels

        # ---- constants built ONCE (inference-only BN fold into conv weights) ----
        scale = self.gamma / jnp.sqrt(self.running_var + self.eps)          # (Cout,)
        self.bias_vec = self.beta - self.running_mean * scale               # (Cout,) f32
        w_folded = self.w_conv * scale[:, None, None, None]
        # master copy rounded to bf16 (the dtype the MXU sees); reference uses the same values
        self.w_folded_f32 = w_folded.astype(jnp.bfloat16).astype(jnp.float32)

        # pad Cout to a multiple of 128 -> lane-dense output stores
        self.cout_p = ((out_channels + 127) // 128) * 128
        wf = np.asarray(self.w_folded_f32)                                  # (Cout, Cin, 3, 3)
        wk = np.zeros((9, in_channels, self.cout_p), np.float32)
        for k in range(9):
            dy, dx = divmod(k, 3)
            wk[k, :, :out_channels] = wf[:, :, dy, dx].T                    # (Cin, Cout)
        self.wk = jnp.asarray(wk, jnp.bfloat16)
        bias_p = np.zeros((1, self.cout_p), np.float32)
        bias_p[0, :out_channels] = np.asarray(self.bias_vec)
        self.bias_p = jnp.asarray(bias_p)

        self.tile_h = 8 if out_h % 8 == 0 else out_h                        # out_h tile (grid axis)
        self._aw_cache = {}                                                 # w_in -> (aw_pad bf16, aw_core f32)

    # ------------------------------------------------------------------ #
    def _get_aw(self, w_in):
        if w_in not in self._aw_cache:
            aw_core = bilinear_matrix(self.out_w, w_in)                     # (out_w, w_in) f32
            aw_pad = np.zeros((self.out_w + 2, w_in), np.float32)
            aw_pad[1:-1] = aw_core                                          # zero rows = conv W-pad
            aw_pad_bf16 = jnp.asarray(aw_pad, jnp.bfloat16)
            aw_core_f32 = (jnp.asarray(aw_core, jnp.float32)
                           .astype(jnp.bfloat16).astype(jnp.float32))       # same values the kernel uses
            self._aw_cache[w_in] = (aw_pad_bf16, aw_core_f32)
        return self._aw_cache[w_in]

    # ------------------------------------------------------------------ #
    def _forward_pts(self, pts_feat):
        B, c_in, h_in, w_in = pts_feat.shape
        assert c_in == self.in_channels
        out_h, out_w, cout_p, tile_h = self.out_h, self.out_w, self.cout_p, self.tile_h
        num_tiles = out_h // tile_h

        aw_pad_bf16, _ = self._get_aw(w_in)

        # NCHW -> NHWC bf16 (layout glue; channels end up on the lane axis)
        x = jnp.transpose(pts_feat, (0, 2, 3, 1)).astype(jnp.bfloat16)      # (B, h_in, w_in, c_in)

        kernel = functools.partial(_bev_fusion_kernel, tile_h=tile_h, out_h=out_h,
                                   out_w=out_w, h_in=h_in, c_in=c_in)
        out = pl.pallas_call(
            kernel,
            out_shape=jax.ShapeDtypeStruct((B, out_h, out_w, cout_p), jnp.float32),
            grid_spec=pltpu.PrefetchScalarGridSpec(
                num_scalar_prefetch=0,
                grid=(B, num_tiles),
                in_specs=[
                    pl.BlockSpec((1, h_in, w_in, c_in), lambda b, t: (b, 0, 0, 0)),
                    pl.BlockSpec((out_w + 2, w_in), lambda b, t: (0, 0)),
                    pl.BlockSpec((9, c_in, cout_p), lambda b, t: (0, 0, 0)),
                    pl.BlockSpec((1, cout_p), lambda b, t: (0, 0)),
                ],
                out_specs=pl.BlockSpec((1, tile_h, out_w, cout_p),
                                       lambda b, t: (b, t, 0, 0)),
                scratch_shapes=[pltpu.VMEM((tile_h + 2, out_w + 2, c_in), jnp.bfloat16)],
            ),
            compiler_params=pltpu.CompilerParams(
                dimension_semantics=("parallel", "parallel")),
        )(x, aw_pad_bf16, self.wk, self.bias_p)

        # (B, out_h, out_w, Cout_pad) -> NCHW, drop channel padding (glue)
        out = out[:, :, :, :self.out_channels]
        return jnp.transpose(out, (0, 3, 1, 2))

    # ------------------------------------------------------------------ #
    def __call__(self, pts_feats=None, img_feats=None, img_metas=None):
        if pts_feats is not None:
            return self._forward_pts(pts_feats[0])
        if img_feats is not None:
            # TODO(synk): LSSTransform (camera->BEV view transform) has no clean
            # self-contained Pallas equivalent; only the pts_feats path is implemented.
            raise NotImplementedError("img_feats path (LSSTransform) not implemented")
        return None


# -------------------- pure-JAX reference for verification -------------------- #
def reference_forward(x, aw, w_folded, bias, out_h, out_w):
    """f32 reference on the same bf16-rounded operands the kernel consumes."""
    B, C, H, W = x.shape
    ah = jnp.asarray(bilinear_matrix(out_h, H))
    y = jnp.einsum('oh,bchw->bcow', ah, x, precision='highest')
    y = jnp.einsum('pw,bcow->bcop', aw, y, precision='highest')
    z = jax.lax.conv_general_dilated(
        y, w_folded, window_strides=(1, 1), padding=((1, 1), (1, 1)),
        dimension_numbers=('NCHW', 'OIHW', 'NCHW'),
        precision=jax.lax.Precision.HIGHEST)
    z = z + bias[None, :, None, None]
    return jnp.maximum(z, 0.0)


if __name__ == "__main__":
    key = jax.random.PRNGKey(0)
    k_x, k_w = jax.random.split(key)

    B, C_in, C_out = 2, 8, 8
    H_in = W_in = 8
    out_h = out_w = 16

    x = jax.random.normal(k_x, (B, C_in, H_in, W_in), jnp.float32)

    model = BEVFusionPallas(C_in, C_out, out_h, out_w, key=k_w)
    out = model(pts_feats=[x])
    out = jax.block_until_ready(out)

    assert out.shape == (B, C_out, out_h, out_w), out.shape

    # Reference built from the same bf16-rounded x / interp matrix / folded weights.
    x_q = x.astype(jnp.bfloat16).astype(jnp.float32)
    _, aw_core_f32 = model._get_aw(W_in)
    ref = reference_forward(x_q, aw_core_f32, model.w_folded_f32, model.bias_vec,
                            out_h, out_w)
    ref = jax.block_until_ready(ref)

    # bf16 matmul operands (f32 accumulation) -> widened tolerance vs f32 reference.
    if not np.allclose(np.asarray(out), np.asarray(ref), rtol=3e-2, atol=3e-2):
        max_err = float(np.max(np.abs(np.asarray(out) - np.asarray(ref))))
        raise AssertionError(f"Pallas output mismatch vs reference, max_err={max_err}")

    print("KERNEL_OK")
</pallas_src>

<mosaic_0001>
module attributes {stable_mosaic.version = 11 : i64} {
  func.func @_bev_fusion_kernel(%arg0: i32, %arg1: i32, %arg2: memref<1x8x8x8xbf16, #tpu.memory_space<vmem>>, %arg3: memref<18x8xbf16, #tpu.memory_space<vmem>>, %arg4: memref<9x8x128xbf16, #tpu.memory_space<vmem>>, %arg5: memref<1x128xf32, #tpu.memory_space<vmem>>, %arg6: memref<1x8x16x128xf32, #tpu.memory_space<vmem>>, %arg7: memref<10x18x8xbf16, #tpu.memory_space<vmem>>) attributes {dimension_semantics = [#tpu.dimension_semantics<parallel>, #tpu.dimension_semantics<parallel>], iteration_bounds = array<i64: 2, 2>, scalar_prefetch = 0 : i64, scratch_operands = 1 : i64, tpu.core_type = #tpu.core_type<tc>, window_params = [{transform_indices = @transform_0, window_bounds = array<i64: 1, 8, 8, 8>}, {pipeline_mode = #tpu.pipeline_mode<synchronous>, transform_indices = @transform_1, window_bounds = array<i64: 18, 8>}, {pipeline_mode = #tpu.pipeline_mode<synchronous>, transform_indices = @transform_2, window_bounds = array<i64: 9, 8, 128>}, {pipeline_mode = #tpu.pipeline_mode<synchronous>, transform_indices = @transform_3, window_bounds = array<i64: 1, 128>}, {transform_indices = @transform_4, window_bounds = array<i64: 1, 8, 16, 128>}]} {
    %c0 = arith.constant 0 : index
    %c0_0 = arith.constant 0 : index
    %0 = vector.load %arg3[%c0, %c0_0] : memref<18x8xbf16, #tpu.memory_space<vmem>>, vector<18x8xbf16>
    %c8_i32 = arith.constant 8 : i32
    %1 = arith.muli %arg1, %c8_i32 : i32
    %c0_i32 = arith.constant 0 : i32
    %2 = arith.addi %1, %c0_i32 : i32
    %c0_i32_1 = arith.constant 0 : i32
    %3 = arith.cmpi eq, %2, %c0_i32_1 : i32
    %c17_i32 = arith.constant 17 : i32
    %4 = arith.cmpi eq, %2, %c17_i32 : i32
    %5 = arith.ori %3, %4 : i1
    %c1_i32 = arith.constant 1 : i32
    %6 = arith.subi %2, %c1_i32 : i32
    %7 = arith.sitofp %6 : i32 to f32
    %cst = arith.constant 5.000000e-01 : f32
    %8 = arith.addf %7, %cst : f32
    %cst_2 = arith.constant 5.000000e-01 : f32
    %9 = arith.mulf %8, %cst_2 : f32
    %cst_3 = arith.constant 5.000000e-01 : f32
    %10 = arith.subf %9, %cst_3 : f32
    %cst_4 = arith.constant 0.000000e+00 : f32
    %11 = arith.maximumf %10, %cst_4 : f32
    %12 = math.floor %11 : f32
    %cst_5 = arith.constant 7.000000e+00 : f32
    %13 = arith.minimumf %12, %cst_5 : f32
    %14 = arith.fptosi %13 : f32 to i32
    %c1_i32_6 = arith.constant 1 : i32
    %15 = arith.addi %14, %c1_i32_6 : i32
    %c7_i32 = arith.constant 7 : i32
    %16 = arith.minsi %15, %c7_i32 : i32
    %17 = arith.sitofp %14 : i32 to f32
    %18 = arith.subf %11, %17 : f32
    %cst_7 = arith.constant 1.000000e+00 : f32
    %19 = arith.subf %cst_7, %18 : f32
    %cst_8 = arith.constant 0.000000e+00 : f32
    %20 = arith.select %5, %cst_8, %19 : f32
    %cst_9 = arith.constant 0.000000e+00 : f32
    %21 = arith.select %5, %cst_9, %18 : f32
    %c0_10 = arith.constant 0 : index
    %22 = arith.index_cast %14 : i32 to index
    %c0_11 = arith.constant 0 : index
    %c0_12 = arith.constant 0 : index
    %23 = vector.load %arg2[%c0_10, %22, %c0_11, %c0_12] : memref<1x8x8x8xbf16, #tpu.memory_space<vmem>>, vector<1x1x8x8xbf16>
    %24 = vector.shape_cast %23 : vector<1x1x8x8xbf16> to vector<8x8xbf16>
    %25 = arith.extf %24 : vector<8x8xbf16> to vector<8x8xf32>
    %26 = vector.broadcast %20 : f32 to vector<8x8xf32>
    %27 = arith.mulf %26, %25 : vector<8x8xf32>
    %c0_13 = arith.constant 0 : index
    %28 = arith.index_cast %16 : i32 to index
    %c0_14 = arith.constant 0 : index
    %c0_15 = arith.constant 0 : index
    %29 = vector.load %arg2[%c0_13, %28, %c0_14, %c0_15] : memref<1x8x8x8xbf16, #tpu.memory_space<vmem>>, vector<1x1x8x8xbf16>
    %30 = vector.shape_cast %29 : vector<1x1x8x8xbf16> to vector<8x8xbf16>
    %31 = arith.extf %30 : vector<8x8xbf16> to vector<8x8xf32>
    %32 = vector.broadcast %21 : f32 to vector<8x8xf32>
    %33 = arith.mulf %32, %31 : vector<8x8xf32>
    %34 = arith.addf %27, %33 : vector<8x8xf32>
    %35 = arith.truncf %34 : vector<8x8xf32> to vector<8x8xbf16>
    %cst_16 = arith.constant dense<0.000000e+00> : vector<18x8xf32>
    %36 = tpu.matmul %0, %35, %cst_16 {dimension_numbers = #tpu.dot_dimension_numbers<[1], [0], [0], [1], [0, 0, 1, 1], [], []>} : vector<18x8xbf16>, vector<8x8xbf16>, vector<18x8xf32> -> vector<18x8xf32>
    %37 = arith.truncf %36 : vector<18x8xf32> to vector<18x8xbf16>
    %c0_17 = arith.constant 0 : index
    %c0_18 = arith.constant 0 : index
    %c0_19 = arith.constant 0 : index
    %38 = vector.load %arg7[%c0_17, %c0_18, %c0_19] : memref<10x18x8xbf16, #tpu.memory_space<vmem>>, vector<1x18x8xbf16>
    %39 = vector.shape_cast %38 : vector<1x18x8xbf16> to vector<18x8xbf16>
    %40 = vector.shape_cast %37 : vector<18x8xbf16> to vector<1x18x8xbf16>
    tpu.vector_store %arg7[%c0_17, %c0_18, %c0_19], %40 {strides = array<i32>} : memref<10x18x8xbf16, #tpu.memory_space<vmem>>, vector<1x18x8xbf16>,
    %c8_i32_20 = arith.constant 8 : i32
    %41 = arith.muli %arg1, %c8_i32_20 : i32
    %c1_i32_21 = arith.constant 1 : i32
    %42 = arith.addi %41, %c1_i32_21 : i32
    %c0_i32_22 = arith.constant 0 : i32
    %43 = arith.cmpi eq, %42, %c0_i32_22 : i32
    %c17_i32_23 = arith.constant 17 : i32
    %44 = arith.cmpi eq, %42, %c17_i32_23 : i32
    %45 = arith.ori %43, %44 : i1
    %c1_i32_24 = arith.constant 1 : i32
    %46 = arith.subi %42, %c1_i32_24 : i32
    %47 = arith.sitofp %46 : i32 to f32
    %cst_25 = arith.constant 5.000000e-01 : f32
    %48 = arith.addf %47, %cst_25 : f32
    %cst_26 = arith.constant 5.000000e-01 : f32
    %49 = arith.mulf %48, %cst_26 : f32
    %cst_27 = arith.constant 5.000000e-01 : f32
    %50 = arith.subf %49, %cst_27 : f32
    %cst_28 = arith.constant 0.000000e+00 : f32
    %51 = arith.maximumf %50, %cst_28 : f32
    %52 = math.floor %51 : f32
    %cst_29 = arith.constant 7.000000e+00 : f32
    %53 = arith.minimumf %52, %cst_29 : f32
    %54 = arith.fptosi %53 : f32 to i32
    %c1_i32_30 = arith.constant 1 : i32
    %55 = arith.addi %54, %c1_i32_30 : i32
    %c7_i32_31 = arith.constant 7 : i32
    %56 = arith.minsi %55, %c7_i32_31 : i32
    %57 = arith.sitofp %54 : i32 to f32
    %58 = arith.subf %51, %57 : f32
    %cst_32 = arith.constant 1.000000e+00 : f32
    %59 = arith.subf %cst_32, %58 : f32
    %cst_33 = arith.constant 0.000000e+00 : f32
    %60 = arith.select %45, %cst_33, %59 : f32
    %cst_34 = arith.constant 0.000000e+00 : f32
    %61 = arith.select %45, %cst_34, %58 : f32
    %c0_35 = arith.constant 0 : index
    %62 = arith.index_cast %54 : i32 to index
    %c0_36 = arith.constant 0 : index
    %c0_37 = arith.constant 0 : index
    %63 = vector.load %arg2[%c0_35, %62, %c0_36, %c0_37] : memref<1x8x8x8xbf16, #tpu.memory_space<vmem>>, vector<1x1x8x8xbf16>
    %64 = vector.shape_cast %63 : vector<1x1x8x8xbf16> to vector<8x8xbf16>
    %65 = arith.extf %64 : vector<8x8xbf16> to vector<8x8xf32>
    %66 = vector.broadcast %60 : f32 to vector<8x8xf32>
    %67 = arith.mulf %66, %65 : vector<8x8xf32>
    %c0_38 = arith.constant 0 : index
    %68 = arith.index_cast %56 : i32 to index
    %c0_39 = arith.constant 0 : index
    %c0_40 = arith.constant 0 : index
    %69 = vector.load %arg2[%c0_38, %68, %c0_39, %c0_40] : memref<1x8x8x8xbf16, #tpu.memory_space<vmem>>, vector<1x1x8x8xbf16>
    %70 = vector.shape_cast %69 : vector<1x1x8x8xbf16> to vector<8x8xbf16>
    %71 = arith.extf %70 : vector<8x8xbf16> to vector<8x8xf32>
    %72 = vector.broadcast %61 : f32 to vector<8x8xf32>
    %73 = arith.mulf %72, %71 : vector<8x8xf32>
    %74 = arith.addf %67, %73 : vector<8x8xf32>
    %75 = arith.truncf %74 : vector<8x8xf32> to vector<8x8xbf16>
    %cst_41 = arith.constant dense<0.000000e+00> : vector<18x8xf32>
    %76 = tpu.matmul %0, %75, %cst_41 {dimension_numbers = #tpu.dot_dimension_numbers<[1], [0], [0], [1], [0, 0, 1, 1], [], []>} : vector<18x8xbf16>, vector<8x8xbf16>, vector<18x8xf32> -> vector<18x8xf32>
    %77 = arith.truncf %76 : vector<18x8xf32> to vector<18x8xbf16>
    %c1 = arith.constant 1 : index
    %c0_42 = arith.constant 0 : index
    %c0_43 = arith.constant 0 : index
    %78 = vector.load %arg7[%c1, %c0_42, %c0_43] : memref<10x18x8xbf16, #tpu.memory_space<vmem>>, vector<1x18x8xbf16>
    %79 = vector.shape_cast %78 : vector<1x18x8xbf16> to vector<18x8xbf16>
    %80 = vector.shape_cast %77 : vector<18x8xbf16> to vector<1x18x8xbf16>
    tpu.vector_store %arg7[%c1, %c0_42, %c0_43], %80 {strides = array<i32>} : memref<10x18x8xbf16, #tpu.memory_space<vmem>>, vector<1x18x8xbf16>,
    %c8_i32_44 = arith.constant 8 : i32
    %81 = arith.muli %arg1, %c8_i32_44 : i32
    %c2_i32 = arith.constant 2 : i32
    %82 = arith.addi %81, %c2_i32 : i32
    %c0_i32_45 = arith.constant 0 : i32
    %83 = arith.cmpi eq, %82, %c0_i32_45 : i32
    %c17_i32_46 = arith.constant 17 : i32
    %84 = arith.cmpi eq, %82, %c17_i32_46 : i32
    %85 = arith.ori %83, %84 : i1
    %c1_i32_47 = arith.constant 1 : i32
    %86 = arith.subi %82, %c1_i32_47 : i32
    %87 = arith.sitofp %86 : i32 to f32
    %cst_48 = arith.constant 5.000000e-01 : f32
    %88 = arith.addf %87, %cst_48 : f32
    %cst_49 = arith.constant 5.000000e-01 : f32
    %89 = arith.mulf %88, %cst_49 : f32
    %cst_50 = arith.constant 5.000000e-01 : f32
    %90 = arith.subf %89, %cst_50 : f32
    %cst_51 = arith.constant 0.000000e+00 : f32
    %91 = arith.maximumf %90, %cst_51 : f32
    %92 = math.floor %91 : f32
    %cst_52 = arith.constant 7.000000e+00 : f32
    %93 = arith.minimumf %92, %cst_52 : f32
    %94 = arith.fptosi %93 : f32 to i32
    %c1_i32_53 = arith.constant 1 : i32
    %95 = arith.addi %94, %c1_i32_53 : i32
    %c7_i32_54 = arith.constant 7 : i32
    %96 = arith.minsi %95, %c7_i32_54 : i32
    %97 = arith.sitofp %94 : i32 to f32
    %98 = arith.subf %91, %97 : f32
    %cst_55 = arith.constant 1.000000e+00 : f32
    %99 = arith.subf %cst_55, %98 : f32
    %cst_56 = arith.constant 0.000000e+00 : f32
    %100 = arith.select %85, %cst_56, %99 : f32
    %cst_57 = arith.constant 0.000000e+00 : f32
    %101 = arith.select %85, %cst_57, %98 : f32
    %c0_58 = arith.constant 0 : index
    %102 = arith.index_cast %94 : i32 to index
    %c0_59 = arith.constant 0 : index
    %c0_60 = arith.constant 0 : index
    %103 = vector.load %arg2[%c0_58, %102, %c0_59, %c0_60] : memref<1x8x8x8xbf16, #tpu.memory_space<vmem>>, vector<1x1x8x8xbf16>
    %104 = vector.shape_cast %103 : vector<1x1x8x8xbf16> to vector<8x8xbf16>
    %105 = arith.extf %104 : vector<8x8xbf16> to vector<8x8xf32>
    %106 = vector.broadcast %100 : f32 to vector<8x8xf32>
    %107 = arith.mulf %106, %105 : vector<8x8xf32>
    %c0_61 = arith.constant 0 : index
    %108 = arith.index_cast %96 : i32 to index
    %c0_62 = arith.constant 0 : index
    %c0_63 = arith.constant 0 : index
    %109 = vector.load %arg2[%c0_61, %108, %c0_62, %c0_63] : memref<1x8x8x8xbf16, #tpu.memory_space<vmem>>, vector<1x1x8x8xbf16>
    %110 = vector.shape_cast %109 : vector<1x1x8x8xbf16> to vector<8x8xbf16>
    %111 = arith.extf %110 : vector<8x8xbf16> to vector<8x8xf32>
    %112 = vector.broadcast %101 : f32 to vector<8x8xf32>
    %113 = arith.mulf %112, %111 : vector<8x8xf32>
    %114 = arith.addf %107, %113 : vector<8x8xf32>
    %115 = arith.truncf %114 : vector<8x8xf32> to vector<8x8xbf16>
    %cst_64 = arith.constant dense<0.000000e+00> : vector<18x8xf32>
    %116 = tpu.matmul %0, %115, %cst_64 {dimension_numbers = #tpu.dot_dimension_numbers<[1], [0], [0], [1], [0, 0, 1, 1], [], []>} : vector<18x8xbf16>, vector<8x8xbf16>, vector<18x8xf32> -> vector<18x8xf32>
    %117 = arith.truncf %116 : vector<18x8xf32> to vector<18x8xbf16>
    %c2 = arith.constant 2 : index
    %c0_65 = arith.constant 0 : index
    %c0_66 = arith.constant 0 : index
    %118 = vector.load %arg7[%c2, %c0_65, %c0_66] : memref<10x18x8xbf16, #tpu.memory_space<vmem>>, vector<1x18x8xbf16>
    %119 = vector.shape_cast %118 : vector<1x18x8xbf16> to vector<18x8xbf16>
    %120 = vector.shape_cast %117 : vector<18x8xbf16> to vector<1x18x8xbf16>
    tpu.vector_store %arg7[%c2, %c0_65, %c0_66], %120 {strides = array<i32>} : memref<10x18x8xbf16, #tpu.memory_space<vmem>>, vector<1x18x8xbf16>,
    %c8_i32_67 = arith.constant 8 : i32
    %121 = arith.muli %arg1, %c8_i32_67 : i32
    %c3_i32 = arith.constant 3 : i32
    %122 = arith.addi %121, %c3_i32 : i32
    %c0_i32_68 = arith.constant 0 : i32
    %123 = arith.cmpi eq, %122, %c0_i32_68 : i32
    %c17_i32_69 = arith.constant 17 : i32
    %124 = arith.cmpi eq, %122, %c17_i32_69 : i32
    %125 = arith.ori %123, %124 : i1
    %c1_i32_70 = arith.constant 1 : i32
    %126 = arith.subi %122, %c1_i32_70 : i32
    %127 = arith.sitofp %126 : i32 to f32
    %cst_71 = arith.constant 5.000000e-01 : f32
    %128 = arith.addf %127, %cst_71 : f32
    %cst_72 = arith.constant 5.000000e-01 : f32
    %129 = arith.mulf %128, %cst_72 : f32
    %cst_73 = arith.constant 5.000000e-01 : f32
    %130 = arith.subf %129, %cst_73 : f32
    %cst_74 = arith.constant 0.000000e+00 : f32
    %131 = arith.maximumf %130, %cst_74 : f32
    %132 = math.floor %131 : f32
    %cst_75 = arith.constant 7.000000e+00 : f32
    %133 = arith.minimumf %132, %cst_75 : f32
    %134 = arith.fptosi %133 : f32 to i32
    %c1_i32_76 = arith.constant 1 : i32
    %135 = arith.addi %134, %c1_i32_76 : i32
    %c7_i32_77 = arith.constant 7 : i32
    %136 = arith.minsi %135, %c7_i32_77 : i32
    %137 = arith.sitofp %134 : i32 to f32
    %138 = arith.subf %131, %137 : f32
    %cst_78 = arith.constant 1.000000e+00 : f32
    %139 = arith.subf %cst_78, %138 : f32
    %cst_79 = arith.constant 0.000000e+00 : f32
    %140 = arith.select %125, %cst_79, %139 : f32
    %cst_80 = arith.constant 0.000000e+00 : f32
    %141 = arith.select %125, %cst_80, %138 : f32
    %c0_81 = arith.constant 0 : index
    %142 = arith.index_cast %134 : i32 to index
    %c0_82 = arith.constant 0 : index
    %c0_83 = arith.constant 0 : index
    %143 = vector.load %arg2[%c0_81, %142, %c0_82, %c0_83] : memref<1x8x8x8xbf16, #tpu.memory_space<vmem>>, vector<1x1x8x8xbf16>
    %144 = vector.shape_cast %143 : vector<1x1x8x8xbf16> to vector<8x8xbf16>
    %145 = arith.extf %144 : vector<8x8xbf16> to vector<8x8xf32>
    %146 = vector.broadcast %140 : f32 to vector<8x8xf32>
    %147 = arith.mulf %146, %145 : vector<8x8xf32>
    %c0_84 = arith.constant 0 : index
    %148 = arith.index_cast %136 : i32 to index
    %c0_85 = arith.constant 0 : index
    %c0_86 = arith.constant 0 : index
    %149 = vector.load %arg2[%c0_84, %148, %c0_85, %c0_86] : memref<1x8x8x8xbf16, #tpu.memory_space<vmem>>, vector<1x1x8x8xbf16>
    %150 = vector.shape_cast %149 : vector<1x1x8x8xbf16> to vector<8x8xbf16>
    %151 = arith.extf %150 : vector<8x8xbf16> to vector<8x8xf32>
    %152 = vector.broadcast %141 : f32 to vector<8x8xf32>
    %153 = arith.mulf %152, %151 : vector<8x8xf32>
    %154 = arith.addf %147, %153 : vector<8x8xf32>
    %155 = arith.truncf %154 : vector<8x8xf32> to vector<8x8xbf16>
    %cst_87 = arith.constant dense<0.000000e+00> : vector<18x8xf32>
    %156 = tpu.matmul %0, %155, %cst_87 {dimension_numbers = #tpu.dot_dimension_numbers<[1], [0], [0], [1], [0, 0, 1, 1], [], []>} : vector<18x8xbf16>, vector<8x8xbf16>, vector<18x8xf32> -> vector<18x8xf32>
    %157 = arith.truncf %156 : vector<18x8xf32> to vector<18x8xbf16>
    %c3 = arith.constant 3 : index
    %c0_88 = arith.constant 0 : index
    %c0_89 = arith.constant 0 : index
    %158 = vector.load %arg7[%c3, %c0_88, %c0_89] : memref<10x18x8xbf16, #tpu.memory_space<vmem>>, vector<1x18x8xbf16>
    %159 = vector.shape_cast %158 : vector<1x18x8xbf16> to vector<18x8xbf16>
    %160 = vector.shape_cast %157 : vector<18x8xbf16> to vector<1x18x8xbf16>
    tpu.vector_store %arg7[%c3, %c0_88, %c0_89], %160 {strides = array<i32>} : memref<10x18x8xbf16, #tpu.memory_space<vmem>>, vector<1x18x8xbf16>,
    %c8_i32_90 = arith.constant 8 : i32
    %161 = arith.muli %arg1, %c8_i32_90 : i32
    %c4_i32 = arith.constant 4 : i32
    %162 = arith.addi %161, %c4_i32 : i32
    %c0_i32_91 = arith.constant 0 : i32
    %163 = arith.cmpi eq, %162, %c0_i32_91 : i32
    %c17_i32_92 = arith.constant 17 : i32
    %164 = arith.cmpi eq, %162, %c17_i32_92 : i32
    %165 = arith.ori %163, %164 : i1
    %c1_i32_93 = arith.constant 1 : i32
    %166 = arith.subi %162, %c1_i32_93 : i32
    %167 = arith.sitofp %166 : i32 to f32
    %cst_94 = arith.constant 5.000000e-01 : f32
    %168 = arith.addf %167, %cst_94 : f32
    %cst_95 = arith.constant 5.000000e-01 : f32
    %169 = arith.mulf %168, %cst_95 : f32
    %cst_96 = arith.constant 5.000000e-01 : f32
    %170 = arith.subf %169, %cst_96 : f32
    %cst_97 = arith.constant 0.000000e+00 : f32
    %171 = arith.maximumf %170, %cst_97 : f32
    %172 = math.floor %171 : f32
    %cst_98 = arith.constant 7.000000e+00 : f32
    %173 = arith.minimumf %172, %cst_98 : f32
    %174 = arith.fptosi %173 : f32 to i32
    %c1_i32_99 = arith.constant 1 : i32
    %175 = arith.addi %174, %c1_i32_99 : i32
    %c7_i32_100 = arith.constant 7 : i32
    %176 = arith.minsi %175, %c7_i32_100 : i32
    %177 = arith.sitofp %174 : i32 to f32
    %178 = arith.subf %171, %177 : f32
    %cst_101 = arith.constant 1.000000e+00 : f32
    %179 = arith.subf %cst_101, %178 : f32
    %cst_102 = arith.constant 0.000000e+00 : f32
    %180 = arith.select %165, %cst_102, %179 : f32
    %cst_103 = arith.constant 0.000000e+00 : f32
    %181 = arith.select %165, %cst_103, %178 : f32
    %c0_104 = arith.constant 0 : index
    %182 = arith.index_cast %174 : i32 to index
    %c0_105 = arith.constant 0 : index
    %c0_106 = arith.constant 0 : index
    %183 = vector.load %arg2[%c0_104, %182, %c0_105, %c0_106] : memref<1x8x8x8xbf16, #tpu.memory_space<vmem>>, vector<1x1x8x8xbf16>
    %184 = vector.shape_cast %183 : vector<1x1x8x8xbf16> to vector<8x8xbf16>
    %185 = arith.extf %184 : vector<8x8xbf16> to vector<8x8xf32>
    %186 = vector.broadcast %180 : f32 to vector<8x8xf32>
    %187 = arith.mulf %186, %185 : vector<8x8xf32>
    %c0_107 = arith.constant 0 : index
    %188 = arith.index_cast %176 : i32 to index
    %c0_108 = arith.constant 0 : index
    %c0_109 = arith.constant 0 : index
    %189 = vector.load %arg2[%c0_107, %188, %c0_108, %c0_109] : memref<1x8x8x8xbf16, #tpu.memory_space<vmem>>, vector<1x1x8x8xbf16>
    %190 = vector.shape_cast %189 : vector<1x1x8x8xbf16> to vector<8x8xbf16>
    %191 = arith.extf %190 : vector<8x8xbf16> to vector<8x8xf32>
    %192 = vector.broadcast %181 : f32 to vector<8x8xf32>
    %193 = arith.mulf %192, %191 : vector<8x8xf32>
    %194 = arith.addf %187, %193 : vector<8x8xf32>
    %195 = arith.truncf %194 : vector<8x8xf32> to vector<8x8xbf16>
    %cst_110 = arith.constant dense<0.000000e+00> : vector<18x8xf32>
    %196 = tpu.matmul %0, %195, %cst_110 {dimension_numbers = #tpu.dot_dimension_numbers<[1], [0], [0], [1], [0, 0, 1, 1], [], []>} : vector<18x8xbf16>, vector<8x8xbf16>, vector<18x8xf32> -> vector<18x8xf32>
    %197 = arith.truncf %196 : vector<18x8xf32> to vector<18x8xbf16>
    %c4 = arith.constant 4 : index
    %c0_111 = arith.constant 0 : index
    %c0_112 = arith.constant 0 : index
    %198 = vector.load %arg7[%c4, %c0_111, %c0_112] : memref<10x18x8xbf16, #tpu.memory_space<vmem>>, vector<1x18x8xbf16>
    %199 = vector.shape_cast %198 : vector<1x18x8xbf16> to vector<18x8xbf16>
    %200 = vector.shape_cast %197 : vector<18x8xbf16> to vector<1x18x8xbf16>
    tpu.vector_store %arg7[%c4, %c0_111, %c0_112], %200 {strides = array<i32>} : memref<10x18x8xbf16, #tpu.memory_space<vmem>>, vector<1x18x8xbf16>,
    %c8_i32_113 = arith.constant 8 : i32
    %201 = arith.muli %arg1, %c8_i32_113 : i32
    %c5_i32 = arith.constant 5 : i32
    %202 = arith.addi %201, %c5_i32 : i32
    %c0_i32_114 = arith.constant 0 : i32
    %203 = arith.cmpi eq, %202, %c0_i32_114 : i32
    %c17_i32_115 = arith.constant 17 : i32
    %204 = arith.cmpi eq, %202, %c17_i32_115 : i32
    %205 = arith.ori %203, %204 : i1
    %c1_i32_116 = arith.constant 1 : i32
    %206 = arith.subi %202, %c1_i32_116 : i32
    %207 = arith.sitofp %206 : i32 to f32
    %cst_117 = arith.constant 5.000000e-01 : f32
    %208 = arith.addf %207, %cst_117 : f32
    %cst_118 = arith.constant 5.000000e-01 : f32
    %209 = arith.mulf %208, %cst_118 : f32
    %cst_119 = arith.constant 5.000000e-01 : f32
    %210 = arith.subf %209, %cst_119 : f32
    %cst_120 = arith.constant 0.000000e+00 : f32
    %211 = arith.maximumf %210, %cst_120 : f32
    %212 = math.floor %211 : f32
    %cst_121 = arith.constant 7.000000e+00 : f32
    %213 = arith.minimumf %212, %cst_121 : f32
    %214 = arith.fptosi %213 : f32 to i32
    %c1_i32_122 = arith.constant 1 : i32
    %215 = arith.addi %214, %c1_i32_122 : i32
    %c7_i32_123 = arith.constant 7 : i32
    %216 = arith.minsi %215, %c7_i32_123 : i32
    %217 = arith.sitofp %214 : i32 to f32
    %218 = arith.subf %211, %217 : f32
    %cst_124 = arith.constant 1.000000e+00 : f32
    %219 = arith.subf %cst_124, %218 : f32
    %cst_125 = arith.constant 0.000000e+00 : f32
    %220 = arith.select %205, %cst_125, %219 : f32
    %cst_126 = arith.constant 0.000000e+00 : f32
    %221 = arith.select %205, %cst_126, %218 : f32
    %c0_127 = arith.constant 0 : index
    %222 = arith.index_cast %214 : i32 to index
    %c0_128 = arith.constant 0 : index
    %c0_129 = arith.constant 0 : index
    %223 = vector.load %arg2[%c0_127, %222, %c0_128, %c0_129] : memref<1x8x8x8xbf16, #tpu.memory_space<vmem>>, vector<1x1x8x8xbf16>
    %224 = vector.shape_cast %223 : vector<1x1x8x8xbf16> to vector<8x8xbf16>
    %225 = arith.extf %224 : vector<8x8xbf16> to vector<8x8xf32>
    %226 = vector.broadcast %220 : f32 to vector<8x8xf32>
    %227 = arith.mulf %226, %225 : vector<8x8xf32>
    %c0_130 = arith.constant 0 : index
    %228 = arith.index_cast %216 : i32 to index
    %c0_131 = arith.constant 0 : index
    %c0_132 = arith.constant 0 : index
    %229 = vector.load %arg2[%c0_130, %228, %c0_131, %c0_132] : memref<1x8x8x8xbf16, #tpu.memory_space<vmem>>, vector<1x1x8x8xbf16>
    %230 = vector.shape_cast %229 : vector<1x1x8x8xbf16> to vector<8x8xbf16>
    %231 = arith.extf %230 : vector<8x8xbf16> to vector<8x8xf32>
    %232 = vector.broadcast %221 : f32 to vector<8x8xf32>
    %233 = arith.mulf %232, %231 : vector<8x8xf32>
    %234 = arith.addf %227, %233 : vector<8x8xf32>
    %235 = arith.truncf %234 : vector<8x8xf32> to vector<8x8xbf16>
    %cst_133 = arith.constant dense<0.000000e+00> : vector<18x8xf32>
    %236 = tpu.matmul %0, %235, %cst_133 {dimension_numbers = #tpu.dot_dimension_numbers<[1], [0], [0], [1], [0, 0, 1, 1], [], []>} : vector<18x8xbf16>, vector<8x8xbf16>, vector<18x8xf32> -> vector<18x8xf32>
    %237 = arith.truncf %236 : vector<18x8xf32> to vector<18x8xbf16>
    %c5 = arith.constant 5 : index
    %c0_134 = arith.constant 0 : index
    %c0_135 = arith.constant 0 : index
    %238 = vector.load %arg7[%c5, %c0_134, %c0_135] : memref<10x18x8xbf16, #tpu.memory_space<vmem>>, vector<1x18x8xbf16>
    %239 = vector.shape_cast %238 : vector<1x18x8xbf16> to vector<18x8xbf16>
    %240 = vector.shape_cast %237 : vector<18x8xbf16> to vector<1x18x8xbf16>
    tpu.vector_store %arg7[%c5, %c0_134, %c0_135], %240 {strides = array<i32>} : memref<10x18x8xbf16, #tpu.memory_space<vmem>>, vector<1x18x8xbf16>,
    %c8_i32_136 = arith.constant 8 : i32
    %241 = arith.muli %arg1, %c8_i32_136 : i32
    %c6_i32 = arith.constant 6 : i32
    %242 = arith.addi %241, %c6_i32 : i32
    %c0_i32_137 = arith.constant 0 : i32
    %243 = arith.cmpi eq, %242, %c0_i32_137 : i32
    %c17_i32_138 = arith.constant 17 : i32
    %244 = arith.cmpi eq, %242, %c17_i32_138 : i32
    %245 = arith.ori %243, %244 : i1
    %c1_i32_139 = arith.constant 1 : i32
    %246 = arith.subi %242, %c1_i32_139 : i32
    %247 = arith.sitofp %246 : i32 to f32
    %cst_140 = arith.constant 5.000000e-01 : f32
    %248 = arith.addf %247, %cst_140 : f32
    %cst_141 = arith.constant 5.000000e-01 : f32
    %249 = arith.mulf %248, %cst_141 : f32
    %cst_142 = arith.constant 5.000000e-01 : f32
    %250 = arith.subf %249, %cst_142 : f32
    %cst_143 = arith.constant 0.000000e+00 : f32
    %251 = arith.maximumf %250, %cst_143 : f32
    %252 = math.floor %251 : f32
    %cst_144 = arith.constant 7.000000e+00 : f32
    %253 = arith.minimumf %252, %cst_144 : f32
    %254 = arith.fptosi %253 : f32 to i32
    %c1_i32_145 = arith.constant 1 : i32
    %255 = arith.addi %254, %c1_i32_145 : i32
    %c7_i32_146 = arith.constant 7 : i32
    %256 = arith.minsi %255, %c7_i32_146 : i32
    %257 = arith.sitofp %254 : i32 to f32
    %258 = arith.subf %251, %257 : f32
    %cst_147 = arith.constant 1.000000e+00 : f32
    %259 = arith.subf %cst_147, %258 : f32
    %cst_148 = arith.constant 0.000000e+00 : f32
    %260 = arith.select %245, %cst_148, %259 : f32
    %cst_149 = arith.constant 0.000000e+00 : f32
    %261 = arith.select %245, %cst_149, %258 : f32
    %c0_150 = arith.constant 0 : index
    %262 = arith.index_cast %254 : i32 to index
    %c0_151 = arith.constant 0 : index
    %c0_152 = arith.constant 0 : index
    %263 = vector.load %arg2[%c0_150, %262, %c0_151, %c0_152] : memref<1x8x8x8xbf16, #tpu.memory_space<vmem>>, vector<1x1x8x8xbf16>
    %264 = vector.shape_cast %263 : vector<1x1x8x8xbf16> to vector<8x8xbf16>
    %265 = arith.extf %264 : vector<8x8xbf16> to vector<8x8xf32>
    %266 = vector.broadcast %260 : f32 to vector<8x8xf32>
    %267 = arith.mulf %266, %265 : vector<8x8xf32>
    %c0_153 = arith.constant 0 : index
    %268 = arith.index_cast %256 : i32 to index
    %c0_154 = arith.constant 0 : index
    %c0_155 = arith.constant 0 : index
    %269 = vector.load %arg2[%c0_153, %268, %c0_154, %c0_155] : memref<1x8x8x8xbf16, #tpu.memory_space<vmem>>, vector<1x1x8x8xbf16>
    %270 = vector.shape_cast %269 : vector<1x1x8x8xbf16> to vector<8x8xbf16>
    %271 = arith.extf %270 : vector<8x8xbf16> to vector<8x8xf32>
    %272 = vector.broadcast %261 : f32 to vector<8x8xf32>
    %273 = arith.mulf %272, %271 : vector<8x8xf32>
    %274 = arith.addf %267, %273 : vector<8x8xf32>
    %275 = arith.truncf %274 : vector<8x8xf32> to vector<8x8xbf16>
    %cst_156 = arith.constant dense<0.000000e+00> : vector<18x8xf32>
    %276 = tpu.matmul %0, %275, %cst_156 {dimension_numbers = #tpu.dot_dimension_numbers<[1], [0], [0], [1], [0, 0, 1, 1], [], []>} : vector<18x8xbf16>, vector<8x8xbf16>, vector<18x8xf32> -> vector<18x8xf32>
    %277 = arith.truncf %276 : vector<18x8xf32> to vector<18x8xbf16>
    %c6 = arith.constant 6 : index
    %c0_157 = arith.constant 0 : index
    %c0_158 = arith.constant 0 : index
    %278 = vector.load %arg7[%c6, %c0_157, %c0_158] : memref<10x18x8xbf16, #tpu.memory_space<vmem>>, vector<1x18x8xbf16>
    %279 = vector.shape_cast %278 : vector<1x18x8xbf16> to vector<18x8xbf16>
    %280 = vector.shape_cast %277 : vector<18x8xbf16> to vector<1x18x8xbf16>
    tpu.vector_store %arg7[%c6, %c0_157, %c0_158], %280 {strides = array<i32>} : memref<10x18x8xbf16, #tpu.memory_space<vmem>>, vector<1x18x8xbf16>,
    %c8_i32_159 = arith.constant 8 : i32
    %281 = arith.muli %arg1, %c8_i32_159 : i32
    %c7_i32_160 = arith.constant 7 : i32
    %282 = arith.addi %281, %c7_i32_160 : i32
    %c0_i32_161 = arith.constant 0 : i32
    %283 = arith.cmpi eq, %282, %c0_i32_161 : i32
    %c17_i32_162 = arith.constant 17 : i32
    %284 = arith.cmpi eq, %282, %c17_i32_162 : i32
    %285 = arith.ori %283, %284 : i1
    %c1_i32_163 = arith.constant 1 : i32
    %286 = arith.subi %282, %c1_i32_163 : i32
    %287 = arith.sitofp %286 : i32 to f32
    %cst_164 = arith.constant 5.000000e-01 : f32
    %288 = arith.addf %287, %cst_164 : f32
    %cst_165 = arith.constant 5.000000e-01 : f32
    %289 = arith.mulf %288, %cst_165 : f32
    %cst_166 = arith.constant 5.000000e-01 : f32
    %290 = arith.subf %289, %cst_166 : f32
    %cst_167 = arith.constant 0.000000e+00 : f32
    %291 = arith.maximumf %290, %cst_167 : f32
    %292 = math.floor %291 : f32
    %cst_168 = arith.constant 7.000000e+00 : f32
    %293 = arith.minimumf %292, %cst_168 : f32
    %294 = arith.fptosi %293 : f32 to i32
    %c1_i32_169 = arith.constant 1 : i32
    %295 = arith.addi %294, %c1_i32_169 : i32
    %c7_i32_170 = arith.constant 7 : i32
    %296 = arith.minsi %295, %c7_i32_170 : i32
    %297 = arith.sitofp %294 : i32 to f32
    %298 = arith.subf %291, %297 : f32
    %cst_171 = arith.constant 1.000000e+00 : f32
    %299 = arith.subf %cst_171, %298 : f32
    %cst_172 = arith.constant 0.000000e+00 : f32
    %300 = arith.select %285, %cst_172, %299 : f32
    %cst_173 = arith.constant 0.000000e+00 : f32
    %301 = arith.select %285, %cst_173, %298 : f32
    %c0_174 = arith.constant 0 : index
    %302 = arith.index_cast %294 : i32 to index
    %c0_175 = arith.constant 0 : index
    %c0_176 = arith.constant 0 : index
    %303 = vector.load %arg2[%c0_174, %302, %c0_175, %c0_176] : memref<1x8x8x8xbf16, #tpu.memory_space<vmem>>, vector<1x1x8x8xbf16>
    %304 = vector.shape_cast %303 : vector<1x1x8x8xbf16> to vector<8x8xbf16>
    %305 = arith.extf %304 : vector<8x8xbf16> to vector<8x8xf32>
    %306 = vector.broadcast %300 : f32 to vector<8x8xf32>
    %307 = arith.mulf %306, %305 : vector<8x8xf32>
    %c0_177 = arith.constant 0 : index
    %308 = arith.index_cast %296 : i32 to index
    %c0_178 = arith.constant 0 : index
    %c0_179 = arith.constant 0 : index
    %309 = vector.load %arg2[%c0_177, %308, %c0_178, %c0_179] : memref<1x8x8x8xbf16, #tpu.memory_space<vmem>>, vector<1x1x8x8xbf16>
    %310 = vector.shape_cast %309 : vector<1x1x8x8xbf16> to vector<8x8xbf16>
    %311 = arith.extf %310 : vector<8x8xbf16> to vector<8x8xf32>
    %312 = vector.broadcast %301 : f32 to vector<8x8xf32>
    %313 = arith.mulf %312, %311 : vector<8x8xf32>
    %314 = arith.addf %307, %313 : vector<8x8xf32>
    %315 = arith.truncf %314 : vector<8x8xf32> to vector<8x8xbf16>
    %cst_180 = arith.constant dense<0.000000e+00> : vector<18x8xf32>
    %316 = tpu.matmul %0, %315, %cst_180 {dimension_numbers = #tpu.dot_dimension_numbers<[1], [0], [0], [1], [0, 0, 1, 1], [], []>} : vector<18x8xbf16>, vector<8x8xbf16>, vector<18x8xf32> -> vector<18x8xf32>
    %317 = arith.truncf %316 : vector<18x8xf32> to vector<18x8xbf16>
    %c7 = arith.constant 7 : index
    %c0_181 = arith.constant 0 : index
    %c0_182 = arith.constant 0 : index
    %318 = vector.load %arg7[%c7, %c0_181, %c0_182] : memref<10x18x8xbf16, #tpu.memory_space<vmem>>, vector<1x18x8xbf16>
    %319 = vector.shape_cast %318 : vector<1x18x8xbf16> to vector<18x8xbf16>
    %320 = vector.shape_cast %317 : vector<18x8xbf16> to vector<1x18x8xbf16>
    tpu.vector_store %arg7[%c7, %c0_181, %c0_182], %320 {strides = array<i32>} : memref<10x18x8xbf16, #tpu.memory_space<vmem>>, vector<1x18x8xbf16>,
    %c8_i32_183 = arith.constant 8 : i32
    %321 = arith.muli %arg1, %c8_i32_183 : i32
    %c8_i32_184 = arith.constant 8 : i32
    %322 = arith.addi %321, %c8_i32_184 : i32
    %c0_i32_185 = arith.constant 0 : i32
    %323 = arith.cmpi eq, %322, %c0_i32_185 : i32
    %c17_i32_186 = arith.constant 17 : i32
    %324 = arith.cmpi eq, %322, %c17_i32_186 : i32
    %325 = arith.ori %323, %324 : i1
    %c1_i32_187 = arith.constant 1 : i32
    %326 = arith.subi %322, %c1_i32_187 : i32
    %327 = arith.sitofp %326 : i32 to f32
    %cst_188 = arith.constant 5.000000e-01 : f32
    %328 = arith.addf %327, %cst_188 : f32
    %cst_189 = arith.constant 5.000000e-01 : f32
    %329 = arith.mulf %328, %cst_189 : f32
    %cst_190 = arith.constant 5.000000e-01 : f32
    %330 = arith.subf %329, %cst_190 : f32
    %cst_191 = arith.constant 0.000000e+00 : f32
    %331 = arith.maximumf %330, %cst_191 : f32
    %332 = math.floor %331 : f32
    %cst_192 = arith.constant 7.000000e+00 : f32
    %333 = arith.minimumf %332, %cst_192 : f32
    %334 = arith.fptosi %333 : f32 to i32
    %c1_i32_193 = arith.constant 1 : i32
    %335 = arith.addi %334, %c1_i32_193 : i32
    %c7_i32_194 = arith.constant 7 : i32
    %336 = arith.minsi %335, %c7_i32_194 : i32
    %337 = arith.sitofp %334 : i32 to f32
    %338 = arith.subf %331, %337 : f32
    %cst_195 = arith.constant 1.000000e+00 : f32
    %339 = arith.subf %cst_195, %338 : f32
    %cst_196 = arith.constant 0.000000e+00 : f32
    %340 = arith.select %325, %cst_196, %339 : f32
    %cst_197 = arith.constant 0.000000e+00 : f32
    %341 = arith.select %325, %cst_197, %338 : f32
    %c0_198 = arith.constant 0 : index
    %342 = arith.index_cast %334 : i32 to index
    %c0_199 = arith.constant 0 : index
    %c0_200 = arith.constant 0 : index
    %343 = vector.load %arg2[%c0_198, %342, %c0_199, %c0_200] : memref<1x8x8x8xbf16, #tpu.memory_space<vmem>>, vector<1x1x8x8xbf16>
    %344 = vector.shape_cast %343 : vector<1x1x8x8xbf16> to vector<8x8xbf16>
    %345 = arith.extf %344 : vector<8x8xbf16> to vector<8x8xf32>
    %346 = vector.broadcast %340 : f32 to vector<8x8xf32>
    %347 = arith.mulf %346, %345 : vector<8x8xf32>
    %c0_201 = arith.constant 0 : index
    %348 = arith.index_cast %336 : i32 to index
    %c0_202 = arith.constant 0 : index
    %c0_203 = arith.constant 0 : index
    %349 = vector.load %arg2[%c0_201, %348, %c0_202, %c0_203] : memref<1x8x8x8xbf16, #tpu.memory_space<vmem>>, vector<1x1x8x8xbf16>
    %350 = vector.shape_cast %349 : vector<1x1x8x8xbf16> to vector<8x8xbf16>
    %351 = arith.extf %350 : vector<8x8xbf16> to vector<8x8xf32>
    %352 = vector.broadcast %341 : f32 to vector<8x8xf32>
    %353 = arith.mulf %352, %351 : vector<8x8xf32>
    %354 = arith.addf %347, %353 : vector<8x8xf32>
    %355 = arith.truncf %354 : vector<8x8xf32> to vector<8x8xbf16>
    %cst_204 = arith.constant dense<0.000000e+00> : vector<18x8xf32>
    %356 = tpu.matmul %0, %355, %cst_204 {dimension_numbers = #tpu.dot_dimension_numbers<[1], [0], [0], [1], [0, 0, 1, 1], [], []>} : vector<18x8xbf16>, vector<8x8xbf16>, vector<18x8xf32> -> vector<18x8xf32>
    %357 = arith.truncf %356 : vector<18x8xf32> to vector<18x8xbf16>
    %c8 = arith.constant 8 : index
    %c0_205 = arith.constant 0 : index
    %c0_206 = arith.constant 0 : index
    %358 = vector.load %arg7[%c8, %c0_205, %c0_206] : memref<10x18x8xbf16, #tpu.memory_space<vmem>>, vector<1x18x8xbf16>
    %359 = vector.shape_cast %358 : vector<1x18x8xbf16> to vector<18x8xbf16>
    %360 = vector.shape_cast %357 : vector<18x8xbf16> to vector<1x18x8xbf16>
    tpu.vector_store %arg7[%c8, %c0_205, %c0_206], %360 {strides = array<i32>} : memref<10x18x8xbf16, #tpu.memory_space<vmem>>, vector<1x18x8xbf16>,
    %c8_i32_207 = arith.constant 8 : i32
    %361 = arith.muli %arg1, %c8_i32_207 : i32
    %c9_i32 = arith.constant 9 : i32
    %362 = arith.addi %361, %c9_i32 : i32
    %c0_i32_208 = arith.constant 0 : i32
    %363 = arith.cmpi eq, %362, %c0_i32_208 : i32
    %c17_i32_209 = arith.constant 17 : i32
    %364 = arith.cmpi eq, %362, %c17_i32_209 : i32
    %365 = arith.ori %363, %364 : i1
    %c1_i32_210 = arith.constant 1 : i32
    %366 = arith.subi %362, %c1_i32_210 : i32
    %367 = arith.sitofp %366 : i32 to f32
    %cst_211 = arith.constant 5.000000e-01 : f32
    %368 = arith.addf %367, %cst_211 : f32
    %cst_212 = arith.constant 5.000000e-01 : f32
    %369 = arith.mulf %368, %cst_212 : f32
    %cst_213 = arith.constant 5.000000e-01 : f32
    %370 = arith.subf %369, %cst_213 : f32
    %cst_214 = arith.constant 0.000000e+00 : f32
    %371 = arith.maximumf %370, %cst_214 : f32
    %372 = math.floor %371 : f32
    %cst_215 = arith.constant 7.000000e+00 : f32
    %373 = arith.minimumf %372, %cst_215 : f32
    %374 = arith.fptosi %373 : f32 to i32
    %c1_i32_216 = arith.constant 1 : i32
    %375 = arith.addi %374, %c1_i32_216 : i32
    %c7_i32_217 = arith.constant 7 : i32
    %376 = arith.minsi %375, %c7_i32_217 : i32
    %377 = arith.sitofp %374 : i32 to f32
    %378 = arith.subf %371, %377 : f32
    %cst_218 = arith.constant 1.000000e+00 : f32
    %379 = arith.subf %cst_218, %378 : f32
    %cst_219 = arith.constant 0.000000e+00 : f32
    %380 = arith.select %365, %cst_219, %379 : f32
    %cst_220 = arith.constant 0.000000e+00 : f32
    %381 = arith.select %365, %cst_220, %378 : f32
    %c0_221 = arith.constant 0 : index
    %382 = arith.index_cast %374 : i32 to index
    %c0_222 = arith.constant 0 : index
    %c0_223 = arith.constant 0 : index
    %383 = vector.load %arg2[%c0_221, %382, %c0_222, %c0_223] : memref<1x8x8x8xbf16, #tpu.memory_space<vmem>>, vector<1x1x8x8xbf16>
    %384 = vector.shape_cast %383 : vector<1x1x8x8xbf16> to vector<8x8xbf16>
    %385 = arith.extf %384 : vector<8x8xbf16> to vector<8x8xf32>
    %386 = vector.broadcast %380 : f32 to vector<8x8xf32>
    %387 = arith.mulf %386, %385 : vector<8x8xf32>
    %c0_224 = arith.constant 0 : index
    %388 = arith.index_cast %376 : i32 to index
    %c0_225 = arith.constant 0 : index
    %c0_226 = arith.constant 0 : index
    %389 = vector.load %arg2[%c0_224, %388, %c0_225, %c0_226] : memref<1x8x8x8xbf16, #tpu.memory_space<vmem>>, vector<1x1x8x8xbf16>
    %390 = vector.shape_cast %389 : vector<1x1x8x8xbf16> to vector<8x8xbf16>
    %391 = arith.extf %390 : vector<8x8xbf16> to vector<8x8xf32>
    %392 = vector.broadcast %381 : f32 to vector<8x8xf32>
    %393 = arith.mulf %392, %391 : vector<8x8xf32>
    %394 = arith.addf %387, %393 : vector<8x8xf32>
    %395 = arith.truncf %394 : vector<8x8xf32> to vector<8x8xbf16>
    %cst_227 = arith.constant dense<0.000000e+00> : vector<18x8xf32>
    %396 = tpu.matmul %0, %395, %cst_227 {dimension_numbers = #tpu.dot_dimension_numbers<[1], [0], [0], [1], [0, 0, 1, 1], [], []>} : vector<18x8xbf16>, vector<8x8xbf16>, vector<18x8xf32> -> vector<18x8xf32>
    %397 = arith.truncf %396 : vector<18x8xf32> to vector<18x8xbf16>
    %c9 = arith.constant 9 : index
    %c0_228 = arith.constant 0 : index
    %c0_229 = arith.constant 0 : index
    %398 = vector.load %arg7[%c9, %c0_228, %c0_229] : memref<10x18x8xbf16, #tpu.memory_space<vmem>>, vector<1x18x8xbf16>
    %399 = vector.shape_cast %398 : vector<1x18x8xbf16> to vector<18x8xbf16>
    %400 = vector.shape_cast %397 : vector<18x8xbf16> to vector<1x18x8xbf16>
    tpu.vector_store %arg7[%c9, %c0_228, %c0_229], %400 {strides = array<i32>} : memref<10x18x8xbf16, #tpu.memory_space<vmem>>, vector<1x18x8xbf16>,
    %cst_230 = arith.constant 0.000000e+00 : f32
    %401 = vector.broadcast %cst_230 : f32 to vector<128x128xf32>
    %c0_231 = arith.constant 0 : index
    %c0_232 = arith.constant 0 : index
    %c0_233 = arith.constant 0 : index
    %402 = vector.load %arg7[%c0_231, %c0_232, %c0_233] : memref<10x18x8xbf16, #tpu.memory_space<vmem>>, vector<8x16x8xbf16>
    %403 = vector.shape_cast %402 : vector<8x16x8xbf16> to vector<128x8xbf16>
    %c0_234 = arith.constant 0 : index
    %c0_235 = arith.constant 0 : index
    %c0_236 = arith.constant 0 : index
    %404 = vector.load %arg4[%c0_234, %c0_235, %c0_236] : memref<9x8x128xbf16, #tpu.memory_space<vmem>>, vector<1x8x128xbf16>
    %405 = vector.shape_cast %404 : vector<1x8x128xbf16> to vector<8x128xbf16>
    %cst_237 = arith.constant dense<0.000000e+00> : vector<128x128xf32>
    %406 = tpu.matmul %403, %405, %cst_237 {dimension_numbers = #tpu.dot_dimension_numbers<[1], [0], [0], [1], [0, 0, 1, 1], [], []>} : vector<128x8xbf16>, vector<8x128xbf16>, vector<128x128xf32> -> vector<128x128xf32>
    %407 = arith.addf %401, %406 : vector<128x128xf32>
    %c0_238 = arith.constant 0 : index
    %c1_239 = arith.constant 1 : index
    %c0_240 = arith.constant 0 : index
    %408 = vector.load %arg7[%c0_238, %c1_239, %c0_240] : memref<10x18x8xbf16, #tpu.memory_space<vmem>>, vector<8x16x8xbf16>
    %409 = vector.shape_cast %408 : vector<8x16x8xbf16> to vector<128x8xbf16>
    %c1_241 = arith.constant 1 : index
    %c0_242 = arith.constant 0 : index
    %c0_243 = arith.constant 0 : index
    %410 = vector.load %arg4[%c1_241, %c0_242, %c0_243] : memref<9x8x128xbf16, #tpu.memory_space<vmem>>, vector<1x8x128xbf16>
    %411 = vector.shape_cast %410 : vector<1x8x128xbf16> to vector<8x128xbf16>
    %cst_244 = arith.constant dense<0.000000e+00> : vector<128x128xf32>
    %412 = tpu.matmul %409, %411, %cst_244 {dimension_numbers = #tpu.dot_dimension_numbers<[1], [0], [0], [1], [0, 0, 1, 1], [], []>} : vector<128x8xbf16>, vector<8x128xbf16>, vector<128x128xf32> -> vector<128x128xf32>
    %413 = arith.addf %407, %412 : vector<128x128xf32>
    %c0_245 = arith.constant 0 : index
    %c2_246 = arith.constant 2 : index
    %c0_247 = arith.constant 0 : index
    %414 = vector.load %arg7[%c0_245, %c2_246, %c0_247] : memref<10x18x8xbf16, #tpu.memory_space<vmem>>, vector<8x16x8xbf16>
    %415 = vector.shape_cast %414 : vector<8x16x8xbf16> to vector<128x8xbf16>
    %c2_248 = arith.constant 2 : index
    %c0_249 = arith.constant 0 : index
    %c0_250 = arith.constant 0 : index
    %416 = vector.load %arg4[%c2_248, %c0_249, %c0_250] : memref<9x8x128xbf16, #tpu.memory_space<vmem>>, vector<1x8x128xbf16>
    %417 = vector.shape_cast %416 : vector<1x8x128xbf16> to vector<8x128xbf16>
    %cst_251 = arith.constant dense<0.000000e+00> : vector<128x128xf32>
    %418 = tpu.matmul %415, %417, %cst_251 {dimension_numbers = #tpu.dot_dimension_numbers<[1], [0], [0], [1], [0, 0, 1, 1], [], []>} : vector<128x8xbf16>, vector<8x128xbf16>, vector<128x128xf32> -> vector<128x128xf32>
    %419 = arith.addf %413, %418 : vector<128x128xf32>
    %c1_252 = arith.constant 1 : index
    %c0_253 = arith.constant 0 : index
    %c0_254 = arith.constant 0 : index
    %420 = vector.load %arg7[%c1_252, %c0_253, %c0_254] : memref<10x18x8xbf16, #tpu.memory_space<vmem>>, vector<8x16x8xbf16>
    %421 = vector.shape_cast %420 : vector<8x16x8xbf16> to vector<128x8xbf16>
    %c3_255 = arith.constant 3 : index
    %c0_256 = arith.constant 0 : index
    %c0_257 = arith.constant 0 : index
    %422 = vector.load %arg4[%c3_255, %c0_256, %c0_257] : memref<9x8x128xbf16, #tpu.memory_space<vmem>>, vector<1x8x128xbf16>
    %423 = vector.shape_cast %422 : vector<1x8x128xbf16> to vector<8x128xbf16>
    %cst_258 = arith.constant dense<0.000000e+00> : vector<128x128xf32>
    %424 = tpu.matmul %421, %423, %cst_258 {dimension_numbers = #tpu.dot_dimension_numbers<[1], [0], [0], [1], [0, 0, 1, 1], [], []>} : vector<128x8xbf16>, vector<8x128xbf16>, vector<128x128xf32> -> vector<128x128xf32>
    %425 = arith.addf %419, %424 : vector<128x128xf32>
    %c1_259 = arith.constant 1 : index
    %c1_260 = arith.constant 1 : index
    %c0_261 = arith.constant 0 : index
    %426 = vector.load %arg7[%c1_259, %c1_260, %c0_261] : memref<10x18x8xbf16, #tpu.memory_space<vmem>>, vector<8x16x8xbf16>
    %427 = vector.shape_cast %426 : vector<8x16x8xbf16> to vector<128x8xbf16>
    %c4_262 = arith.constant 4 : index
    %c0_263 = arith.constant 0 : index
    %c0_264 = arith.constant 0 : index
    %428 = vector.load %arg4[%c4_262, %c0_263, %c0_264] : memref<9x8x128xbf16, #tpu.memory_space<vmem>>, vector<1x8x128xbf16>
    %429 = vector.shape_cast %428 : vector<1x8x128xbf16> to vector<8x128xbf16>
    %cst_265 = arith.constant dense<0.000000e+00> : vector<128x128xf32>
    %430 = tpu.matmul %427, %429, %cst_265 {dimension_numbers = #tpu.dot_dimension_numbers<[1], [0], [0], [1], [0, 0, 1, 1], [], []>} : vector<128x8xbf16>, vector<8x128xbf16>, vector<128x128xf32> -> vector<128x128xf32>
    %431 = arith.addf %425, %430 : vector<128x128xf32>
    %c1_266 = arith.constant 1 : index
    %c2_267 = arith.constant 2 : index
    %c0_268 = arith.constant 0 : index
    %432 = vector.load %arg7[%c1_266, %c2_267, %c0_268] : memref<10x18x8xbf16, #tpu.memory_space<vmem>>, vector<8x16x8xbf16>
    %433 = vector.shape_cast %432 : vector<8x16x8xbf16> to vector<128x8xbf16>
    %c5_269 = arith.constant 5 : index
    %c0_270 = arith.constant 0 : index
    %c0_271 = arith.constant 0 : index
    %434 = vector.load %arg4[%c5_269, %c0_270, %c0_271] : memref<9x8x128xbf16, #tpu.memory_space<vmem>>, vector<1x8x128xbf16>
    %435 = vector.shape_cast %434 : vector<1x8x128xbf16> to vector<8x128xbf16>
    %cst_272 = arith.constant dense<0.000000e+00> : vector<128x128xf32>
    %436 = tpu.matmul %433, %435, %cst_272 {dimension_numbers = #tpu.dot_dimension_numbers<[1], [0], [0], [1], [0, 0, 1, 1], [], []>} : vector<128x8xbf16>, vector<8x128xbf16>, vector<128x128xf32> -> vector<128x128xf32>
    %437 = arith.addf %431, %436 : vector<128x128xf32>
    %c2_273 = arith.constant 2 : index
    %c0_274 = arith.constant 0 : index
    %c0_275 = arith.constant 0 : index
    %438 = vector.load %arg7[%c2_273, %c0_274, %c0_275] : memref<10x18x8xbf16, #tpu.memory_space<vmem>>, vector<8x16x8xbf16>
    %439 = vector.shape_cast %438 : vector<8x16x8xbf16> to vector<128x8xbf16>
    %c6_276 = arith.constant 6 : index
    %c0_277 = arith.constant 0 : index
    %c0_278 = arith.constant 0 : index
    %440 = vector.load %arg4[%c6_276, %c0_277, %c0_278] : memref<9x8x128xbf16, #tpu.memory_space<vmem>>, vector<1x8x128xbf16>
    %441 = vector.shape_cast %440 : vector<1x8x128xbf16> to vector<8x128xbf16>
    %cst_279 = arith.constant dense<0.000000e+00> : vector<128x128xf32>
    %442 = tpu.matmul %439, %441, %cst_279 {dimension_numbers = #tpu.dot_dimension_numbers<[1], [0], [0], [1], [0, 0, 1, 1], [], []>} : vector<128x8xbf16>, vector<8x128xbf16>, vector<128x128xf32> -> vector<128x128xf32>
    %443 = arith.addf %437, %442 : vector<128x128xf32>
    %c2_280 = arith.constant 2 : index
    %c1_281 = arith.constant 1 : index
    %c0_282 = arith.constant 0 : index
    %444 = vector.load %arg7[%c2_280, %c1_281, %c0_282] : memref<10x18x8xbf16, #tpu.memory_space<vmem>>, vector<8x16x8xbf16>
    %445 = vector.shape_cast %444 : vector<8x16x8xbf16> to vector<128x8xbf16>
    %c7_283 = arith.constant 7 : index
    %c0_284 = arith.constant 0 : index
    %c0_285 = arith.constant 0 : index
    %446 = vector.load %arg4[%c7_283, %c0_284, %c0_285] : memref<9x8x128xbf16, #tpu.memory_space<vmem>>, vector<1x8x128xbf16>
    %447 = vector.shape_cast %446 : vector<1x8x128xbf16> to vector<8x128xbf16>
    %cst_286 = arith.constant dense<0.000000e+00> : vector<128x128xf32>
    %448 = tpu.matmul %445, %447, %cst_286 {dimension_numbers = #tpu.dot_dimension_numbers<[1], [0], [0], [1], [0, 0, 1, 1], [], []>} : vector<128x8xbf16>, vector<8x128xbf16>, vector<128x128xf32> -> vector<128x128xf32>
    %449 = arith.addf %443, %448 : vector<128x128xf32>
    %c2_287 = arith.constant 2 : index
    %c2_288 = arith.constant 2 : index
    %c0_289 = arith.constant 0 : index
    %450 = vector.load %arg7[%c2_287, %c2_288, %c0_289] : memref<10x18x8xbf16, #tpu.memory_space<vmem>>, vector<8x16x8xbf16>
    %451 = vector.shape_cast %450 : vector<8x16x8xbf16> to vector<128x8xbf16>
    %c8_290 = arith.constant 8 : index
    %c0_291 = arith.constant 0 : index
    %c0_292 = arith.constant 0 : index
    %452 = vector.load %arg4[%c8_290, %c0_291, %c0_292] : memref<9x8x128xbf16, #tpu.memory_space<vmem>>, vector<1x8x128xbf16>
    %453 = vector.shape_cast %452 : vector<1x8x128xbf16> to vector<8x128xbf16>
    %cst_293 = arith.constant dense<0.000000e+00> : vector<128x128xf32>
    %454 = tpu.matmul %451, %453, %cst_293 {dimension_numbers = #tpu.dot_dimension_numbers<[1], [0], [0], [1], [0, 0, 1, 1], [], []>} : vector<128x8xbf16>, vector<8x128xbf16>, vector<128x128xf32> -> vector<128x128xf32>
    %455 = arith.addf %449, %454 : vector<128x128xf32>
    %c0_294 = arith.constant 0 : index
    %c0_295 = arith.constant 0 : index
    %456 = vector.load %arg5[%c0_294, %c0_295] : memref<1x128xf32, #tpu.memory_space<vmem>>, vector<1x128xf32>
    %457 = vector.broadcast %456 : vector<1x128xf32> to vector<128x128xf32>
    %458 = arith.addf %455, %457 : vector<128x128xf32>
    %cst_296 = arith.constant 0.000000e+00 : f32
    %459 = vector.broadcast %cst_296 : f32 to vector<128x128xf32>
    %460 = arith.maximumf %458, %459 : vector<128x128xf32>
    %461 = vector.shape_cast %460 : vector<128x128xf32> to vector<8x16x128xf32>
    %c0_297 = arith.constant 0 : index
    %c0_298 = arith.constant 0 : index
    %c0_299 = arith.constant 0 : index
    %c0_300 = arith.constant 0 : index
    %462 = vector.load %arg6[%c0_297, %c0_298, %c0_299, %c0_300] : memref<1x8x16x128xf32, #tpu.memory_space<vmem>>, vector<1x8x16x128xf32>
    %463 = vector.shape_cast %462 : vector<1x8x16x128xf32> to vector<8x16x128xf32>
    %464 = vector.shape_cast %461 : vector<8x16x128xf32> to vector<1x8x16x128xf32>
    tpu.vector_store %arg6[%c0_297, %c0_298, %c0_299, %c0_300], %464 {strides = array<i32>} : memref<1x8x16x128xf32, #tpu.memory_space<vmem>>, vector<1x8x16x128xf32>,
    return
  }
  func.func @transform_0(%arg0: i32, %arg1: i32) -> (i32, i32, i32, i32) {
    %c0_i32 = arith.constant 0 : i32
    %c0_i32_0 = arith.constant 0 : i32
    %c0_i32_1 = arith.constant 0 : i32
    %c0_i32_2 = arith.constant 0 : i32
    return %arg0, %c0_i32, %c0_i32_0, %c0_i32_1 : i32, i32, i32, i32
  }
  func.func @transform_1(%arg0: i32, %arg1: i32) -> (i32, i32) {
    %c0_i32 = arith.constant 0 : i32
    %c0_i32_0 = arith.constant 0 : i32
    %c0_i32_1 = arith.constant 0 : i32
    return %c0_i32, %c0_i32_0 : i32, i32
  }
  func.func @transform_2(%arg0: i32, %arg1: i32) -> (i32, i32, i32) {
    %c0_i32 = arith.constant 0 : i32
    %c0_i32_0 = arith.constant 0 : i32
    %c0_i32_1 = arith.constant 0 : i32
    %c0_i32_2 = arith.constant 0 : i32
    return %c0_i32, %c0_i32_0, %c0_i32_1 : i32, i32, i32
  }
  func.func @transform_3(%arg0: i32, %arg1: i32) -> (i32, i32) {
    %c0_i32 = arith.constant 0 : i32
    %c0_i32_0 = arith.constant 0 : i32
    %c0_i32_1 = arith.constant 0 : i32
    return %c0_i32, %c0_i32_0 : i32, i32
  }
  func.func @transform_4(%arg0: i32, %arg1: i32) -> (i32, i32, i32, i32) {
    %c0_i32 = arith.constant 0 : i32
    %c0_i32_0 = arith.constant 0 : i32
    %c0_i32_1 = arith.constant 0 : i32
    return %arg0, %arg1, %c0_i32, %c0_i32_0 : i32, i32, i32, i32
  }
}

</mosaic_0001>

<llo_original>
// kernel: tpu_custom_call.1
$region0: #{tpu_custom_call.1}
  #allocation0 [shape = 'u32[]', space=smem, size = 0x4, offset = 0x4, fixed_abs, tag = 'smem constant byte address 0x4 - core index']
  #allocation1 [shape = 'u32[144,128]{1,0:T(1,128)}', space=vmem, size = 0x12000, scoped, tag = 'internal scratch']
  #allocation2 [shape = 'bf16[10,18,8]{2,1,0:T(8,128)(2,1)}', space=vmem, size = 0xf000, scoped, tag = 'scratch operand']
  %s0 = inlined_call_operand.hbm [shape: bf16[2,8,8,8], index: 0, kind: input, shape index: {}]
  %s1 = inlined_call_operand.vmem [shape: bf16[18,8], index: 1, kind: input, shape index: {}]
  %s2 = inlined_call_operand.hbm [shape: bf16[9,8,128], index: 2, kind: input, shape index: {}]
  %s3 = inlined_call_operand.vmem [shape: f32[1,128], index: 3, kind: input, shape index: {}]
  %s4 = inlined_call_operand.hbm [shape: f32[2,16,16,128], index: 4, kind: output, shape index: {}]
  %s5 = sld [smem:[#allocation0]]
  $region57: #{tpu_custom_call.1} parent=0
    _
  %s7 = ssub.s32 1, %s5
  %s8 = scalar_select 0, %s7, %s5
  $region1: #{tpu_custom_call.1} parent=0
    #allocation3 [shape = 'u8[32768]{0}', space=vmem, size = 0x8000, scoped, tag = 'input window, operand 0']
    #allocation4 [shape = 's32[2]{0}', space=sflag, size = 0x8, scoped, tag = 'scoped memory for tpu_custom_call.1']
    #allocation5 [shape = 's32[2]{0}', space=sflag, size = 0x8, scoped, tag = 'scoped memory for tpu_custom_call.1']
    #allocation6 [shape = 'u8[18432]{0}', space=vmem, size = 0x4800, scoped, tag = 'input window, operand 2, single buffered']
    #allocation7 [shape = 's32[1]{0}', space=sflag, size = 0x4, scoped, tag = 'scoped memory for tpu_custom_call.1']
    #allocation8 [shape = 'u8[131072]{0}', space=vmem, size = 0x20000, scoped, tag = 'output window, operand 0']
    %9 = vsyncpa [#allocation4], 0
    %s10 = scalar_lea.sflag [#allocation4], 1
    %11 = vsyncpa %s10, 0
    %12 = vsyncpa [#allocation7], 0
    %13 = vsyncpa [#allocation5], 0
    %s14 = scalar_lea.sflag [#allocation5], 1
    %15 = vsyncpa %s14, 0
    loop: start=0, step=1, limit=6
    $region2: #{tpu_custom_call.1} parent=1 // loop_pre_header
      _
    $region3: #{tpu_custom_call.1} parent=1 // loop_header
      %s17 = sphi 0, %s21
      %p18 = scmp.ge.s32.totalorder %s17, 6
      %s24 = sphi 0, %s36
      %s25 = sphi 0, %s32
      %s26 = sphi 0, %s24
      %s27 = sphi 0, %s25
      %s28 = sphi 0, %s26
      %s29 = sphi 0, %s27
      %s39 = sphi 0, %s41
      %s42 = sphi 0, %s39
      %s43 = sphi 0, %s42
      %s59 = sphi 0, %s43
      %s63 = sphi 0, %s63
      %s65 = sphi 0, %s63
      %s66 = sphi 0, %s65
      %s80 = sphi 0, %s66
      %s84 = sphi 0, %s84
      %s86 = sphi 0, %s84
      %s87 = sphi 0, %s86
      %s101 = sphi 0, %s87
      %s105 = sphi 0, %s105
      %s107 = sphi 0, %s105
      %s108 = sphi 0, %s107
      %s122 = sphi 0, %s108
      %s130 = sphi 0, %s132
      %s133 = sphi 0, %s130
      %s134 = sphi 0, %s133
      %s150 = sphi 0, %s134
    $region4: #{tpu_custom_call.1} parent=1 // loop_header_branch
      %20 = sbr.rel (%p18) target = $region8
    $region5: #{tpu_custom_call.1} parent=1 // loop_body
      %s22 = ssub.s32 %s17, 1
      %s23 = ssub.s32 %s17, 2
      %s30 = sadd.s32 1, %s25
      %p31 = scmp.ge.s32.totalorder %s30, 2
      %s32 = scalar_select %p31, 0, %s30
      %s33 = sadd.s32 1, %s24
      %s34 = scalar_select %p31, %s33, %s24
      %p35 = scmp.ge.s32.totalorder %s34, 2
      %s36 = scalar_select %p35, 0, %s34
      %s37 = ssub.s32 %s24, %s36
      %p38 = scmp.eq.s32.totalorder %s37, 0
      %s40 = sadd.s32 %s39, 1
      %s41 = scalar_select %p38, %s39, %s40
      %p44 = pneg %p38
      %p45 = scmp.eq.s32.totalorder %s17, 3
      %p46 = por %p44, %p45
      %p47 = scmp.ne.s32.totalorder %s39, %s42
      %p48 = scmp.eq.s32.totalorder %s17, 0
      %p49 = por %p47, %p48
      %p50 = scmp.ne.s32.totalorder %s39, %s42
      %p51 = scmp.eq.s32.totalorder %s22, 3
      %p52 = por %p50, %p51
      %p53 = scmp.ne.s32.totalorder %s42, %s43
      %p54 = scmp.eq.s32.totalorder %s22, 0
      %p55 = por %p53, %p54
      %p56 = scmp.ne.s32.totalorder %s42, %s43
      %p57 = scmp.eq.s32.totalorder %s23, 3
      %p58 = por %p56, %p57
      %p60 = scmp.ne.s32.totalorder %s43, %s59
      %p61 = scmp.eq.s32.totalorder %s23, 0
      %p62 = por %p60, %p61
      %s64 = sadd.s32 %s63, 1
      %p67 = scmp.eq.s32.totalorder %s17, 3
      %p68 = scmp.ne.s32.totalorder %s63, %s65
      %p69 = scmp.eq.s32.totalorder %s17, 0
      %p70 = por %p68, %p69
      %p71 = scmp.ne.s32.totalorder %s63, %s65
      %p72 = scmp.eq.s32.totalorder %s22, 3
      %p73 = por %p71, %p72
      %p74 = scmp.ne.s32.totalorder %s65, %s66
      %p75 = scmp.eq.s32.totalorder %s22, 0
      %p76 = por %p74, %p75
      %p77 = scmp.ne.s32.totalorder %s65, %s66
      %p78 = scmp.eq.s32.totalorder %s23, 3
      %p79 = por %p77, %p78
      %p81 = scmp.ne.s32.totalorder %s66, %s80
      %p82 = scmp.eq.s32.totalorder %s23, 0
      %p83 = por %p81, %p82
      %s85 = sadd.s32 %s84, 1
      %p88 = scmp.eq.s32.totalorder %s17, 3
      %p89 = scmp.ne.s32.totalorder %s84, %s86
      %p90 = scmp.eq.s32.totalorder %s17, 0
      %p91 = por %p89, %p90
      %p92 = scmp.ne.s32.totalorder %s84, %s86
      %p93 = scmp.eq.s32.totalorder %s22, 3
      %p94 = por %p92, %p93
      %p95 = scmp.ne.s32.totalorder %s86, %s87
      %p96 = scmp.eq.s32.totalorder %s22, 0
      %p97 = por %p95, %p96
      %p98 = scmp.ne.s32.totalorder %s86, %s87
      %p99 = scmp.eq.s32.totalorder %s23, 3
      %p100 = por %p98, %p99
      %p102 = scmp.ne.s32.totalorder %s87, %s101
      %p103 = scmp.eq.s32.totalorder %s23, 0
      %p104 = por %p102, %p103
      %s106 = sadd.s32 %s105, 1
      %p109 = scmp.eq.s32.totalorder %s17, 3
      %p110 = scmp.ne.s32.totalorder %s105, %s107
      %p111 = scmp.eq.s32.totalorder %s17, 0
      %p112 = por %p110, %p111
      %p113 = scmp.ne.s32.totalorder %s105, %s107
      %p114 = scmp.eq.s32.totalorder %s22, 3
      %p115 = por %p113, %p114
      %p116 = scmp.ne.s32.totalorder %s107, %s108
      %p117 = scmp.eq.s32.totalorder %s22, 0
      %p118 = por %p116, %p117
      %p119 = scmp.ne.s32.totalorder %s107, %s108
      %p120 = scmp.eq.s32.totalorder %s23, 3
      %p121 = por %p119, %p120
      %p123 = scmp.ne.s32.totalorder %s108, %s122
      %p124 = scmp.eq.s32.totalorder %s23, 0
      %p125 = por %p123, %p124
      %s126 = ssub.s32 %s24, %s36
      %s127 = ssub.s32 %s25, %s32
      %s128 = sor.u32 %s126, %s127
      %p129 = scmp.eq.s32.totalorder %s128, 0
      %s131 = sadd.s32 %s130, 1
      %s132 = scalar_select %p129, %s130, %s131
      %p135 = pneg %p129
      %p136 = scmp.eq.s32.totalorder %s17, 3
      %p137 = por %p135, %p136
      %p138 = scmp.ne.s32.totalorder %s130, %s133
      %p139 = scmp.eq.s32.totalorder %s17, 0
      %p140 = por %p138, %p139
      %p141 = scmp.ne.s32.totalorder %s130, %s133
      %p142 = scmp.eq.s32.totalorder %s22, 3
      %p143 = por %p141, %p142
      %p144 = scmp.ne.s32.totalorder %s133, %s134
      %p145 = scmp.eq.s32.totalorder %s22, 0
      %p146 = por %p144, %p145
      %p147 = scmp.ne.s32.totalorder %s133, %s134
      %p148 = scmp.eq.s32.totalorder %s23, 3
      %p149 = por %p147, %p148
      %p151 = scmp.ne.s32.totalorder %s134, %s150
      %p152 = scmp.eq.s32.totalorder %s23, 0
      %p153 = por %p151, %p152
      %p154 = scmp.le.s32.totalorder 1, %s17
      %p155 = scmp.lt.s32.totalorder %s17, 5
      %p156 = pnand %p154, %p155
      %p157 = pneg %p156
      // Predicated region
      $region9: #{tpu_custom_call.1} parent=5 // pred_check
        _
      $region10: #{tpu_custom_call.1} parent=5 // pred_check_branch
        %159 = sbr.rel (%p156) target = $region12
      $region11: #{tpu_custom_call.1} parent=5 // pred_region
        %s160 = ssub.s32 %s17, 1
        // Predicated region
        $region13: #{tpu_custom_call.1} parent=11 // pred_check
          %p161 = pneg %p76
        $region14: #{tpu_custom_call.1} parent=11 // pred_check_branch
          %163 = sbr.rel (%p161) target = $region16
        $region15: #{tpu_custom_call.1} parent=11 // pred_region
          _
        $region16: #{tpu_custom_call.1} parent=11 // pred_fallthru
          _
        // Predicated region
        $region17: #{tpu_custom_call.1} parent=11 // pred_check
          %p164 = pneg %p97
        $region18: #{tpu_custom_call.1} parent=11 // pred_check_branch
          %166 = sbr.rel (%p164) target = $region20
        $region19: #{tpu_custom_call.1} parent=11 // pred_region
          %s168 = ssub.s32 576, 576
          %169 = vsyncadd [#allocation7], %s168
          %s170 = sshll.u32 [#allocation6], 4
          %s171 = int_to_ptr.vmem [resolvable:$true] %s170
          %176 = dma.hbm_to_vmem [thread:$0]  %s2, 576, %s171, [#allocation7], 64, 64, 4
        $region20: #{tpu_custom_call.1} parent=11 // pred_fallthru
          _
        // Predicated region
        $region21: #{tpu_custom_call.1} parent=11 // pred_check
          %p177 = pneg %p118
        $region22: #{tpu_custom_call.1} parent=11 // pred_check_branch
          %179 = sbr.rel (%p177) target = $region24
        $region23: #{tpu_custom_call.1} parent=11 // pred_region
          _
        $region24: #{tpu_custom_call.1} parent=11 // pred_fallthru
          _
      $region12: #{tpu_custom_call.1} parent=5 // pred_fallthru
        _
      %p180 = scmp.lt.s32.totalorder %s17, 4
      // Predicated region
      $region25: #{tpu_custom_call.1} parent=5 // pred_check
        %p181 = pneg %p180
      $region26: #{tpu_custom_call.1} parent=5 // pred_check_branch
        %183 = sbr.rel (%p181) target = $region28
      $region27: #{tpu_custom_call.1} parent=5 // pred_region
        // Predicated region
        $region29: #{tpu_custom_call.1} parent=27 // pred_check
          %p184 = pneg %p49
        $region30: #{tpu_custom_call.1} parent=27 // pred_check_branch
          %186 = sbr.rel (%p184) target = $region32
        $region31: #{tpu_custom_call.1} parent=27 // pred_region
          %s187 = sand.u32 %s39, 1
          %s188 = scalar_lea.sflag [#allocation4], %s187
          %s189 = sand.u32 %s39, 1
          %s190 = smul.addr %s189, 32
          %s191 = scalar_lea.vmem [#allocation3], %s190
          %s193 = ssub.s32 512, 512
          %194 = vsyncadd %s188, %s193
          %s195 = smul.addr %s24, 8
          %s196 = smul.addr %s195, 64
          %s197 = scalar_lea.hbm %s0, %s196
          %s198 = sshll.u32 %s191, 4
          %s199 = int_to_ptr.vmem [resolvable:$true] %s198
          %204 = dma.hbm_to_vmem [thread:$0]  %s197, 512, %s199, %s188, 64, 64, 4
        $region32: #{tpu_custom_call.1} parent=27 // pred_fallthru
          _
      $region28: #{tpu_custom_call.1} parent=5 // pred_fallthru
        _
      %p205 = scmp.le.s32.totalorder 1, %s17
      %p206 = scmp.lt.s32.totalorder %s17, 5
      %p207 = pnand %p205, %p206
      %p208 = pneg %p207
      // Predicated region
      $region33: #{tpu_custom_call.1} parent=5 // pred_check
        _
      $region34: #{tpu_custom_call.1} parent=5 // pred_check_branch
        %210 = sbr.rel (%p207) target = $region36
      $region35: #{tpu_custom_call.1} parent=5 // pred_region
        %s211 = ssub.s32 %s17, 1
        %s212 = sand.u32 %s42, 1
        %s213 = scalar_lea.sflag [#allocation4], %s212
        %s214 = sand.u32 %s42, 1
        %s215 = smul.addr %s214, 32
        %s216 = scalar_lea.vmem [#allocation3], %s215
        // Predicated region
        $region37: #{tpu_custom_call.1} parent=35 // pred_check
          %p217 = pneg %p55
        $region38: #{tpu_custom_call.1} parent=35 // pred_check_branch
          %219 = sbr.rel (%p217) target = $region40
        $region39: #{tpu_custom_call.1} parent=35 // pred_region
          %220 = dma.done %s213, 512
        $region40: #{tpu_custom_call.1} parent=35 // pred_fallthru
          _
        // Predicated region
        $region41: #{tpu_custom_call.1} parent=35 // pred_check
          %p221 = pneg %p97
        $region42: #{tpu_custom_call.1} parent=35 // pred_check_branch
          %223 = sbr.rel (%p221) target = $region44
        $region43: #{tpu_custom_call.1} parent=35 // pred_region
          %224 = dma.done [#allocation7], 576
        $region44: #{tpu_custom_call.1} parent=35 // pred_fallthru
          _
        %s225 = sand.u32 %s42, 1
        %s226 = scalar_lea.sflag [#allocation4], %s225
        %s227 = sand.u32 %s42, 1
        %s228 = smul.addr %s227, 32
        %s229 = scalar_lea.vmem [#allocation3], %s228
        %p230 = pneg %p55
        %p231 = pneg %p52
        %p232 = pneg %p76
        %p233 = pneg %p73
        %p234 = pneg %p97
        %p235 = pneg %p94
        %p236 = pneg %p118
        %p237 = pneg %p115
        %p238 = pneg %p146
        %p239 = pneg %p143
        %s240 = sand.u32 %s133, 1
        %s241 = scalar_lea.sflag [#allocation5], %s240
        %s242 = sand.u32 %s133, 1
        %s243 = smul.addr %s242, 128
        %s244 = scalar_lea.vmem [#allocation8], %s243
        %s245 = smul.u32 8, %s27
        %v247 = vld [vmem:[%s1] sm:$0xf]
        %v248 = vld [vmem:[%s1 + $0x4] sm:$0xf]
        %v249 = vld [vmem:[%s1 + $0x8] sm:$0x1]
        %s250 = smul.u32 %s27, 8
        %p251 = scmp.eq.s32.totalorder %s250, 0
        %p252 = scmp.eq.s32.totalorder %s250, 17
        %p253 = por %p251, %p252
        %s254 = sadd.s32 %s250, 4294967295
        %s255 = scvt.s32.f32 %s254
        %s256 = sadd.f32 %s255, 0.5
        %s257 = smul.f32 %s256, 0.5
        %s258 = ssub.f32 %s257, 0.5
        %s259 = smax.f32 %s258, 0.0
        %s260 = sfloor.f32 %s259
        %s261 = smin.f32 %s260, 7.0
        %s262 = scvt.f32.s32.to.zero.pseudo %s261
        %s263 = sadd.s32 %s262, 1
        %p264 = scmp.lt.s32.totalorder %s263, 7
        %s265 = scalar_select %p264, %s263, 7
        %s266 = scvt.s32.f32 %s262
        %s267 = ssub.f32 %s259, %s266
        %s268 = ssub.f32 1.0, %s267
        %s269 = scalar_select %p253, 0.0, %s268
        %s270 = scalar_select %p253, 0.0, %s267
        %s271 = smul.addr %s262, 4
        %s272 = scalar_lea.vmem %s216, %s271 [#allocation3]
        %v273 = vld [vmem:[%s272] sm:$0xf]
        %v274 = vunpack.c.l.bf16 %v273
        %v275 = vstv %s269
        %v276 = vmul.f32 %v275, %v274
        %s277 = smul.addr %s265, 4
        %s278 = scalar_lea.vmem %s216, %s277 [#allocation3]
        %v279 = vld [vmem:[%s278] sm:$0xf]
        %v280 = vunpack.c.l.bf16 %v279
        %v281 = vstv %s270
        %v282 = vmul.f32 %v281, %v280
        %v283 = vadd.f32 %v276, %v282
        %v284 = vpack.c.bf16 %v283, %v283
        %v288 = vunpack.c.l.b16 %v247
        %v289 = vunpack.c.l.b16 %v248
        %v290 = vunpack.c.l.b16 %v249
        %v291 = vpack.c.b16 %v289, %v288
        %v292 = vpack.c.b16 %v290, %v290
        %vm293 = vcmask 64512
        %v295 = vsel %vm293, %v291, 0
        %v298 = vsel %vm293, %v292, 0
        %vm300 = vcmask 1043456
        %v302 = vsel %vm300, %v284, 0
        %304 = vmatprep.subr.bf16.mxu0 0
        %305 = vmatpush1.bf16.msra.mxu0 0
        %306 = vmatprep.subr.bf16.mxu0 0
        %307 = vmatpush1.bf16.msra.mxu0 0
        %308 = vmatprep.subr.bf16.mxu0 0
        %309 = vmatpush1.bf16.msra.mxu0 0
        %310 = vmatprep.subr.bf16.mxu0 0
        %311 = vmatpush1.bf16.msra.mxu0 0
        %312 = vmatprep.subr.bf16.mxu0 0
        %313 = vmatpush1.bf16.msra.mxu0 0
        %314 = vmatprep.subr.bf16.mxu0 0
        %315 = vmatpush1.bf16.msra.mxu0 0
        %316 = vmatprep.subr.bf16.mxu0 0
        %317 = vmatpush1.bf16.msra.mxu0 0
        %318 = vmatprep.subr.bf16.mxu0 0
        %319 = vmatpush1.bf16.msra.mxu0 %v302
        %320 = vmatprep.subr.bf16.mxu0 0
        %321 = vmatpush2.bf16.msra.mxu0 0
        %322 = vmatprep.subr.bf16.mxu0 0
        %323 = vmatpush2.bf16.msra.mxu0 0
        %324 = vmatprep.subr.bf16.mxu0 0
        %325 = vmatpush2.bf16.msra.mxu0 0
        %326 = vmatprep.subr.bf16.mxu0 0
        %327 = vmatpush2.bf16.msra.mxu0 0
        %328 = vmatprep.subr.bf16.mxu0 0
        %329 = vmatpush2.bf16.msra.mxu0 0
        %330 = vmatprep.subr.bf16.mxu0 0
        %331 = vmatpush2.bf16.msra.mxu0 0
        %332 = vmatprep.subr.bf16.mxu0 0
        %333 = vmatpush2.bf16.msra.mxu0 0
        %334 = vmatprep.subr.bf16.mxu0 0
        %335 = vmatpush2.bf16.msra.mxu0 0
        %336 = vmatprep.mubr.bf16.mxu0 0
        %337 = vmatmul.mubr.bf16.gmra.mxu0 %v295
        %v338 = vpop.f32.mrf.mxu0
        %v339 = vadd.f32 0.0, %v338
        %v340 = vpop.f32.mrf.mxu0
        %v341 = vpop.f32.mrf.mxu0
        %v342 = vadd.f32 0.0, %v341
        %v343 = vpop.f32.mrf.mxu0
        %344 = vmatprep.mubr.bf16.mxu0 0
        %345 = vmatmul.mubr.bf16.gmra.mxu0 %v298
        %v346 = vpop.f32.mrf.mxu0
        %v347 = vadd.f32 0.0, %v346
        %v348 = vpop.f32.mrf.mxu0
        %v349 = vpop.f32.mrf.mxu0
        %v350 = vpop.f32.mrf.mxu0
        %351 = vdwg.mxu0
        %v352 = vpack.c.bf16 %v342, %v339
        %v353 = vpack.c.bf16 %v347, %v347
        %v356 = vunpack.c.l.b16 %v352
        %v357 = vunpack.c.h.b16 %v352
        %v358 = vunpack.c.l.b16 %v353
        %v359 = vpack.c.b16 %v356, %v356
        %v360 = vpack.c.b16 %v357, %v357
        %v361 = vpack.c.b16 %v358, %v358
        %vm365 = vcmask 60416
        %366 = vst.msk [vmem:[#allocation2] sm:$0xf] %vm365, %v359
        %367 = vst.msk [vmem:[#allocation2 + $0x4] sm:$0xf] %vm365, %v360
        %vm368 = vcmask 57344
        %369 = vst.msk [vmem:[#allocation2 + $0x8] sm:$0x1] %vm368, %v361
        %s370 = sadd.s32 %s250, 1
        %p371 = scmp.eq.s32.totalorder %s370, 0
        %p372 = scmp.eq.s32.totalorder %s370, 17
        %p373 = por %p371, %p372
        %s374 = scvt.s32.f32 %s250
        %s375 = sadd.f32 %s374, 0.5
        %s376 = smul.f32 %s375, 0.5
        %s377 = ssub.f32 %s376, 0.5
        %s378 = smax.f32 %s377, 0.0
        %s379 = sfloor.f32 %s378
        %s380 = smin.f32 %s379, 7.0
        %s381 = scvt.f32.s32.to.zero.pseudo %s380
        %s382 = sadd.s32 %s381, 1
        %p383 = scmp.lt.s32.totalorder %s382, 7
        %s384 = scalar_select %p383, %s382, 7
        %s385 = scvt.s32.f32 %s381
        %s386 = ssub.f32 %s378, %s385
        %s387 = ssub.f32 1.0, %s386
        %s388 = scalar_select %p373, 0.0, %s387
        %s389 = scalar_select %p373, 0.0, %s386
        %s390 = smul.addr %s381, 4
        %s391 = scalar_lea.vmem %s216, %s390 [#allocation3]
        %v392 = vld [vmem:[%s391] sm:$0xf]
        %v393 = vunpack.c.l.bf16 %v392
        %v394 = vstv %s388
        %v395 = vmul.f32 %v394, %v393
        %s396 = smul.addr %s384, 4
        %s397 = scalar_lea.vmem %s216, %s396 [#allocation3]
        %v398 = vld [vmem:[%s397] sm:$0xf]
        %v399 = vunpack.c.l.bf16 %v398
        %v400 = vstv %s389
        %v401 = vmul.f32 %v400, %v399
        %v402 = vadd.f32 %v395, %v401
        %v403 = vpack.c.bf16 %v402, %v402
        %v405 = vsel %vm300, %v403, 0
        %407 = vmatprep.subr.bf16.mxu0 0
        %408 = vmatpush1.bf16.msra.mxu0 0
        %409 = vmatprep.subr.bf16.mxu0 0
        %410 = vmatpush1.bf16.msra.mxu0 0
        %411 = vmatprep.subr.bf16.mxu0 0
        %412 = vmatpush1.bf16.msra.mxu0 0
        %413 = vmatprep.subr.bf16.mxu0 0
        %414 = vmatpush1.bf16.msra.mxu0 0
        %415 = vmatprep.subr.bf16.mxu0 0
        %416 = vmatpush1.bf16.msra.mxu0 0
        %417 = vmatprep.subr.bf16.mxu0 0
        %418 = vmatpush1.bf16.msra.mxu0 0
        %419 = vmatprep.subr.bf16.mxu0 0
        %420 = vmatpush1.bf16.msra.mxu0 0
        %421 = vmatprep.subr.bf16.mxu0 0
        %422 = vmatpush1.bf16.msra.mxu0 %v405
        %423 = vmatprep.subr.bf16.mxu0 0
        %424 = vmatpush2.bf16.msra.mxu0 0
        %425 = vmatprep.subr.bf16.mxu0 0
        %426 = vmatpush2.bf16.msra.mxu0 0
        %427 = vmatprep.subr.bf16.mxu0 0
        %428 = vmatpush2.bf16.msra.mxu0 0
        %429 = vmatprep.subr.bf16.mxu0 0
        %430 = vmatpush2.bf16.msra.mxu0 0
        %431 = vmatprep.subr.bf16.mxu0 0
        %432 = vmatpush2.bf16.msra.mxu0 0
        %433 = vmatprep.subr.bf16.mxu0 0
        %434 = vmatpush2.bf16.msra.mxu0 0
        %435 = vmatprep.subr.bf16.mxu0 0
        %436 = vmatpush2.bf16.msra.mxu0 0
        %437 = vmatprep.subr.bf16.mxu0 0
        %438 = vmatpush2.bf16.msra.mxu0 0
        %439 = vmatprep.mubr.bf16.mxu0 0
        %440 = vmatmul.mubr.bf16.gmra.mxu0 %v295
        %v441 = vpop.f32.mrf.mxu0
        %v442 = vadd.f32 0.0, %v441
        %v443 = vpop.f32.mrf.mxu0
        %v444 = vpop.f32.mrf.mxu0
        %v445 = vadd.f32 0.0, %v444
        %v446 = vpop.f32.mrf.mxu0
        %447 = vmatprep.mubr.bf16.mxu0 0
        %448 = vmatmul.mubr.bf16.gmra.mxu0 %v298
        %v449 = vpop.f32.mrf.mxu0
        %v450 = vadd.f32 0.0, %v449
        %v451 = vpop.f32.mrf.mxu0
        %v452 = vpop.f32.mrf.mxu0
        %v453 = vpop.f32.mrf.mxu0
        %454 = vdwg.mxu0
        %v455 = vpack.c.bf16 %v445, %v442
        %v456 = vpack.c.bf16 %v450, %v450
        %v459 = vunpack.c.l.b16 %v455
        %v460 = vunpack.c.h.b16 %v455
        %v461 = vunpack.c.l.b16 %v456
        %v462 = vpack.c.b16 %v459, %v459
        %v463 = vpack.c.b16 %v460, %v460
        %v464 = vpack.c.b16 %v461, %v461
        %s468 = scalar_lea.vmem [#allocation2], 12
        %469 = vst.msk [vmem:[%s468] sm:$0xf] %vm365, %v462
        %470 = vst.msk [vmem:[%s468 + $0x4] sm:$0xf] %vm365, %v463
        %471 = vst.msk [vmem:[%s468 + $0x8] sm:$0x1] %vm368, %v464
        %s472 = sadd.s32 %s250, 2
        %p473 = scmp.eq.s32.totalorder %s472, 0
        %p474 = scmp.eq.s32.totalorder %s472, 17
        %p475 = por %p473, %p474
        %s476 = scvt.s32.f32 %s370
        %s477 = sadd.f32 %s476, 0.5
        %s478 = smul.f32 %s477, 0.5
        %s479 = ssub.f32 %s478, 0.5
        %s480 = smax.f32 %s479, 0.0
        %s481 = sfloor.f32 %s480
        %s482 = smin.f32 %s481, 7.0
        %s483 = scvt.f32.s32.to.zero.pseudo %s482
        %s484 = sadd.s32 %s483, 1
        %p485 = scmp.lt.s32.totalorder %s484, 7
        %s486 = scalar_select %p485, %s484, 7
        %s487 = scvt.s32.f32 %s483
        %s488 = ssub.f32 %s480, %s487
        %s489 = ssub.f32 1.0, %s488
        %s490 = scalar_select %p475, 0.0, %s489
        %s491 = scalar_select %p475, 0.0, %s488
        %s492 = smul.addr %s483, 4
        %s493 = scalar_lea.vmem %s216, %s492 [#allocation3]
        %v494 = vld [vmem:[%s493] sm:$0xf]
        %v495 = vunpack.c.l.bf16 %v494
        %v496 = vstv %s490
        %v497 = vmul.f32 %v496, %v495
        %s498 = smul.addr %s486, 4
        %s499 = scalar_lea.vmem %s216, %s498 [#allocation3]
        %v500 = vld [vmem:[%s499] sm:$0xf]
        %v501 = vunpack.c.l.bf16 %v500
        %v502 = vstv %s491
        %v503 = vmul.f32 %v502, %v501
        %v504 = vadd.f32 %v497, %v503
        %v505 = vpack.c.bf16 %v504, %v504
        %v507 = vsel %vm300, %v505, 0
        %509 = vmatprep.subr.bf16.mxu0 0
        %510 = vmatpush1.bf16.msra.mxu0 0
        %511 = vmatprep.subr.bf16.mxu0 0
        %512 = vmatpush1.bf16.msra.mxu0 0
        %513 = vmatprep.subr.bf16.mxu0 0
        %514 = vmatpush1.bf16.msra.mxu0 0
        %515 = vmatprep.subr.bf16.mxu0 0
        %516 = vmatpush1.bf16.msra.mxu0 0
        %517 = vmatprep.subr.bf16.mxu0 0
        %518 = vmatpush1.bf16.msra.mxu0 0
        %519 = vmatprep.subr.bf16.mxu0 0
        %520 = vmatpush1.bf16.msra.mxu0 0
        %521 = vmatprep.subr.bf16.mxu0 0
        %522 = vmatpush1.bf16.msra.mxu0 0
        %523 = vmatprep.subr.bf16.mxu0 0
        %524 = vmatpush1.bf16.msra.mxu0 %v507
        %525 = vmatprep.subr.bf16.mxu0 0
        %526 = vmatpush2.bf16.msra.mxu0 0
        %527 = vmatprep.subr.bf16.mxu0 0
        %528 = vmatpush2.bf16.msra.mxu0 0
        %529 = vmatprep.subr.bf16.mxu0 0
        %530 = vmatpush2.bf16.msra.mxu0 0
        %531 = vmatprep.subr.bf16.mxu0 0
        %532 = vmatpush2.bf16.msra.mxu0 0
        %533 = vmatprep.subr.bf16.mxu0 0
        %534 = vmatpush2.bf16.msra.mxu0 0
        %535 = vmatprep.subr.bf16.mxu0 0
        %536 = vmatpush2.bf16.msra.mxu0 0
        %537 = vmatprep.subr.bf16.mxu0 0
        %538 = vmatpush2.bf16.msra.mxu0 0
        %539 = vmatprep.subr.bf16.mxu0 0
        %540 = vmatpush2.bf16.msra.mxu0 0
        %541 = vmatprep.mubr.bf16.mxu0 0
        %542 = vmatmul.mubr.bf16.gmra.mxu0 %v295
        %v543 = vpop.f32.mrf.mxu0
        %v544 = vadd.f32 0.0, %v543
        %v545 = vpop.f32.mrf.mxu0
        %v546 = vpop.f32.mrf.mxu0
        %v547 = vadd.f32 0.0, %v546
        %v548 = vpop.f32.mrf.mxu0
        %549 = vmatprep.mubr.bf16.mxu0 0
        %550 = vmatmul.mubr.bf16.gmra.mxu0 %v298
        %v551 = vpop.f32.mrf.mxu0
        %v552 = vadd.f32 0.0, %v551
        %v553 = vpop.f32.mrf.mxu0
        %v554 = vpop.f32.mrf.mxu0
        %v555 = vpop.f32.mrf.mxu0
        %556 = vdwg.mxu0
        %v557 = vpack.c.bf16 %v547, %v544
        %v558 = vpack.c.bf16 %v552, %v552
        %v561 = vunpack.c.l.b16 %v557
        %v562 = vunpack.c.h.b16 %v557
        %v563 = vunpack.c.l.b16 %v558
        %v564 = vpack.c.b16 %v561, %v561
        %v565 = vpack.c.b16 %v562, %v562
        %v566 = vpack.c.b16 %v563, %v563
        %s570 = scalar_lea.vmem [#allocation2], 24
        %571 = vst.msk [vmem:[%s570] sm:$0xf] %vm365, %v564
        %572 = vst.msk [vmem:[%s570 + $0x4] sm:$0xf] %vm365, %v565
        %573 = vst.msk [vmem:[%s570 + $0x8] sm:$0x1] %vm368, %v566
        %s574 = sadd.s32 %s250, 3
        %p575 = scmp.eq.s32.totalorder %s574, 0
        %p576 = scmp.eq.s32.totalorder %s574, 17
        %p577 = por %p575, %p576
        %s578 = scvt.s32.f32 %s472
        %s579 = sadd.f32 %s578, 0.5
        %s580 = smul.f32 %s579, 0.5
        %s581 = ssub.f32 %s580, 0.5
        %s582 = smax.f32 %s581, 0.0
        %s583 = sfloor.f32 %s582
        %s584 = smin.f32 %s583, 7.0
        %s585 = scvt.f32.s32.to.zero.pseudo %s584
        %s586 = sadd.s32 %s585, 1
        %p587 = scmp.lt.s32.totalorder %s586, 7
        %s588 = scalar_select %p587, %s586, 7
        %s589 = scvt.s32.f32 %s585
        %s590 = ssub.f32 %s582, %s589
        %s591 = ssub.f32 1.0, %s590
        %s592 = scalar_select %p577, 0.0, %s591
        %s593 = scalar_select %p577, 0.0, %s590
        %s594 = smul.addr %s585, 4
        %s595 = scalar_lea.vmem %s216, %s594 [#allocation3]
        %v596 = vld [vmem:[%s595] sm:$0xf]
        %v597 = vunpack.c.l.bf16 %v596
        %v598 = vstv %s592
        %v599 = vmul.f32 %v598, %v597
        %s600 = smul.addr %s588, 4
        %s601 = scalar_lea.vmem %s216, %s600 [#allocation3]
        %v602 = vld [vmem:[%s601] sm:$0xf]
        %v603 = vunpack.c.l.bf16 %v602
        %v604 = vstv %s593
        %v605 = vmul.f32 %v604, %v603
        %v606 = vadd.f32 %v599, %v605
        %v607 = vpack.c.bf16 %v606, %v606
        %v609 = vsel %vm300, %v607, 0
        %611 = vmatprep.subr.bf16.mxu0 0
        %612 = vmatpush1.bf16.msra.mxu0 0
        %613 = vmatprep.subr.bf16.mxu0 0
        %614 = vmatpush1.bf16.msra.mxu0 0
        %615 = vmatprep.subr.bf16.mxu0 0
        %616 = vmatpush1.bf16.msra.mxu0 0
        %617 = vmatprep.subr.bf16.mxu0 0
        %618 = vmatpush1.bf16.msra.mxu0 0
        %619 = vmatprep.subr.bf16.mxu0 0
        %620 = vmatpush1.bf16.msra.mxu0 0
        %621 = vmatprep.subr.bf16.mxu0 0
        %622 = vmatpush1.bf16.msra.mxu0 0
        %623 = vmatprep.subr.bf16.mxu0 0
        %624 = vmatpush1.bf16.msra.mxu0 0
        %625 = vmatprep.subr.bf16.mxu0 0
        %626 = vmatpush1.bf16.msra.mxu0 %v609
        %627 = vmatprep.subr.bf16.mxu0 0
        %628 = vmatpush2.bf16.msra.mxu0 0
        %629 = vmatprep.subr.bf16.mxu0 0
        %630 = vmatpush2.bf16.msra.mxu0 0
        %631 = vmatprep.subr.bf16.mxu0 0
        %632 = vmatpush2.bf16.msra.mxu0 0
        %633 = vmatprep.subr.bf16.mxu0 0
        %634 = vmatpush2.bf16.msra.mxu0 0
        %635 = vmatprep.subr.bf16.mxu0 0
        %636 = vmatpush2.bf16.msra.mxu0 0
        %637 = vmatprep.subr.bf16.mxu0 0
        %638 = vmatpush2.bf16.msra.mxu0 0
        %639 = vmatprep.subr.bf16.mxu0 0
        %640 = vmatpush2.bf16.msra.mxu0 0
        %641 = vmatprep.subr.bf16.mxu0 0
        %642 = vmatpush2.bf16.msra.mxu0 0
        %643 = vmatprep.mubr.bf16.mxu0 0
        %644 = vmatmul.mubr.bf16.gmra.mxu0 %v295
        %v645 = vpop.f32.mrf.mxu0
        %v646 = vadd.f32 0.0, %v645
        %v647 = vpop.f32.mrf.mxu0
        %v648 = vpop.f32.mrf.mxu0
        %v649 = vadd.f32 0.0, %v648
        %v650 = vpop.f32.mrf.mxu0
        %651 = vmatprep.mubr.bf16.mxu0 0
        %652 = vmatmul.mubr.bf16.gmra.mxu0 %v298
        %v653 = vpop.f32.mrf.mxu0
        %v654 = vadd.f32 0.0, %v653
        %v655 = vpop.f32.mrf.mxu0
        %v656 = vpop.f32.mrf.mxu0
        %v657 = vpop.f32.mrf.mxu0
        %658 = vdwg.mxu0
        %v659 = vpack.c.bf16 %v649, %v646
        %v660 = vpack.c.bf16 %v654, %v654
        %v663 = vunpack.c.l.b16 %v659
        %v664 = vunpack.c.h.b16 %v659
        %v665 = vunpack.c.l.b16 %v660
        %v666 = vpack.c.b16 %v663, %v663
        %v667 = vpack.c.b16 %v664, %v664
        %v668 = vpack.c.b16 %v665, %v665
        %s672 = scalar_lea.vmem [#allocation2], 36
        %673 = vst.msk [vmem:[%s672] sm:$0xf] %vm365, %v666
        %674 = vst.msk [vmem:[%s672 + $0x4] sm:$0xf] %vm365, %v667
        %675 = vst.msk [vmem:[%s672 + $0x8] sm:$0x1] %vm368, %v668
        %s676 = sadd.s32 %s250, 4
        %p677 = scmp.eq.s32.totalorder %s676, 0
        %p678 = scmp.eq.s32.totalorder %s676, 17
        %p679 = por %p677, %p678
        %s680 = scvt.s32.f32 %s574
        %s681 = sadd.f32 %s680, 0.5
        %s682 = smul.f32 %s681, 0.5
        %s683 = ssub.f32 %s682, 0.5
        %s684 = smax.f32 %s683, 0.0
        %s685 = sfloor.f32 %s684
        %s686 = smin.f32 %s685, 7.0
        %s687 = scvt.f32.s32.to.zero.pseudo %s686
        %s688 = sadd.s32 %s687, 1
        %p689 = scmp.lt.s32.totalorder %s688, 7
        %s690 = scalar_select %p689, %s688, 7
        %s691 = scvt.s32.f32 %s687
        %s692 = ssub.f32 %s684, %s691
        %s693 = ssub.f32 1.0, %s692
        %s694 = scalar_select %p679, 0.0, %s693
        %s695 = scalar_select %p679, 0.0, %s692
        %s696 = smul.addr %s687, 4
        %s697 = scalar_lea.vmem %s216, %s696 [#allocation3]
        %v698 = vld [vmem:[%s697] sm:$0xf]
        %v699 = vunpack.c.l.bf16 %v698
        %v700 = vstv %s694
        %v701 = vmul.f32 %v700, %v699
        %s702 = smul.addr %s690, 4
        %s703 = scalar_lea.vmem %s216, %s702 [#allocation3]
        %v704 = vld [vmem:[%s703] sm:$0xf]
        %v705 = vunpack.c.l.bf16 %v704
        %v706 = vstv %s695
        %v707 = vmul.f32 %v706, %v705
        %v708 = vadd.f32 %v701, %v707
        %v709 = vpack.c.bf16 %v708, %v708
        %v711 = vsel %vm300, %v709, 0
        %713 = vmatprep.subr.bf16.mxu0 0
        %714 = vmatpush1.bf16.msra.mxu0 0
        %715 = vmatprep.subr.bf16.mxu0 0
        %716 = vmatpush1.bf16.msra.mxu0 0
        %717 = vmatprep.subr.bf16.mxu0 0
        %718 = vmatpush1.bf16.msra.mxu0 0
        %719 = vmatprep.subr.bf16.mxu0 0
        %720 = vmatpush1.bf16.msra.mxu0 0
        %721 = vmatprep.subr.bf16.mxu0 0
        %722 = vmatpush1.bf16.msra.mxu0 0
        %723 = vmatprep.subr.bf16.mxu0 0
        %724 = vmatpush1.bf16.msra.mxu0 0
        %725 = vmatprep.subr.bf16.mxu0 0
        %726 = vmatpush1.bf16.msra.mxu0 0
        %727 = vmatprep.subr.bf16.mxu0 0
        %728 = vmatpush1.bf16.msra.mxu0 %v711
        %729 = vmatprep.subr.bf16.mxu0 0
        %730 = vmatpush2.bf16.msra.mxu0 0
        %731 = vmatprep.subr.bf16.mxu0 0
        %732 = vmatpush2.bf16.msra.mxu0 0
        %733 = vmatprep.subr.bf16.mxu0 0
        %734 = vmatpush2.bf16.msra.mxu0 0
        %735 = vmatprep.subr.bf16.mxu0 0
        %736 = vmatpush2.bf16.msra.mxu0 0
        %737 = vmatprep.subr.bf16.mxu0 0
        %738 = vmatpush2.bf16.msra.mxu0 0
        %739 = vmatprep.subr.bf16.mxu0 0
        %740 = vmatpush2.bf16.msra.mxu0 0
        %741 = vmatprep.subr.bf16.mxu0 0
        %742 = vmatpush2.bf16.msra.mxu0 0
        %743 = vmatprep.subr.bf16.mxu0 0
        %744 = vmatpush2.bf16.msra.mxu0 0
        %745 = vmatprep.mubr.bf16.mxu0 0
        %746 = vmatmul.mubr.bf16.gmra.mxu0 %v295
        %v747 = vpop.f32.mrf.mxu0
        %v748 = vadd.f32 0.0, %v747
        %v749 = vpop.f32.mrf.mxu0
        %v750 = vpop.f32.mrf.mxu0
        %v751 = vadd.f32 0.0, %v750
        %v752 = vpop.f32.mrf.mxu0
        %753 = vmatprep.mubr.bf16.mxu0 0
        %754 = vmatmul.mubr.bf16.gmra.mxu0 %v298
        %v755 = vpop.f32.mrf.mxu0
        %v756 = vadd.f32 0.0, %v755
        %v757 = vpop.f32.mrf.mxu0
        %v758 = vpop.f32.mrf.mxu0
        %v759 = vpop.f32.mrf.mxu0
        %760 = vdwg.mxu0
        %v761 = vpack.c.bf16 %v751, %v748
        %v762 = vpack.c.bf16 %v756, %v756
        %v765 = vunpack.c.l.b16 %v761
        %v766 = vunpack.c.h.b16 %v761
        %v767 = vunpack.c.l.b16 %v762
        %v768 = vpack.c.b16 %v765, %v765
        %v769 = vpack.c.b16 %v766, %v766
        %v770 = vpack.c.b16 %v767, %v767
        %s774 = scalar_lea.vmem [#allocation2], 48
        %775 = vst.msk [vmem:[%s774] sm:$0xf] %vm365, %v768
        %776 = vst.msk [vmem:[%s774 + $0x4] sm:$0xf] %vm365, %v769
        %777 = vst.msk [vmem:[%s774 + $0x8] sm:$0x1] %vm368, %v770
        %s778 = sadd.s32 %s250, 5
        %p779 = scmp.eq.s32.totalorder %s778, 0
        %p780 = scmp.eq.s32.totalorder %s778, 17
        %p781 = por %p779, %p780
        %s782 = scvt.s32.f32 %s676
        %s783 = sadd.f32 %s782, 0.5
        %s784 = smul.f32 %s783, 0.5
        %s785 = ssub.f32 %s784, 0.5
        %s786 = smax.f32 %s785, 0.0
        %s787 = sfloor.f32 %s786
        %s788 = smin.f32 %s787, 7.0
        %s789 = scvt.f32.s32.to.zero.pseudo %s788
        %s790 = sadd.s32 %s789, 1
        %p791 = scmp.lt.s32.totalorder %s790, 7
        %s792 = scalar_select %p791, %s790, 7
        %s793 = scvt.s32.f32 %s789
        %s794 = ssub.f32 %s786, %s793
        %s795 = ssub.f32 1.0, %s794
        %s796 = scalar_select %p781, 0.0, %s795
        %s797 = scalar_select %p781, 0.0, %s794
        %s798 = smul.addr %s789, 4
        %s799 = scalar_lea.vmem %s216, %s798 [#allocation3]
        %v800 = vld [vmem:[%s799] sm:$0xf]
        %v801 = vunpack.c.l.bf16 %v800
        %v802 = vstv %s796
        %v803 = vmul.f32 %v802, %v801
        %s804 = smul.addr %s792, 4
        %s805 = scalar_lea.vmem %s216, %s804 [#allocation3]
        %v806 = vld [vmem:[%s805] sm:$0xf]
        %v807 = vunpack.c.l.bf16 %v806
        %v808 = vstv %s797
        %v809 = vmul.f32 %v808, %v807
        %v810 = vadd.f32 %v803, %v809
        %v811 = vpack.c.bf16 %v810, %v810
        %v813 = vsel %vm300, %v811, 0
        %815 = vmatprep.subr.bf16.mxu0 0
        %816 = vmatpush1.bf16.msra.mxu0 0
        %817 = vmatprep.subr.bf16.mxu0 0
        %818 = vmatpush1.bf16.msra.mxu0 0
        %819 = vmatprep.subr.bf16.mxu0 0
        %820 = vmatpush1.bf16.msra.mxu0 0
        %821 = vmatprep.subr.bf16.mxu0 0
        %822 = vmatpush1.bf16.msra.mxu0 0
        %823 = vmatprep.subr.bf16.mxu0 0
        %824 = vmatpush1.bf16.msra.mxu0 0
        %825 = vmatprep.subr.bf16.mxu0 0
        %826 = vmatpush1.bf16.msra.mxu0 0
        %827 = vmatprep.subr.bf16.mxu0 0
        %828 = vmatpush1.bf16.msra.mxu0 0
        %829 = vmatprep.subr.bf16.mxu0 0
        %830 = vmatpush1.bf16.msra.mxu0 %v813
        %831 = vmatprep.subr.bf16.mxu0 0
        %832 = vmatpush2.bf16.msra.mxu0 0
        %833 = vmatprep.subr.bf16.mxu0 0
        %834 = vmatpush2.bf16.msra.mxu0 0
        %835 = vmatprep.subr.bf16.mxu0 0
        %836 = vmatpush2.bf16.msra.mxu0 0
        %837 = vmatprep.subr.bf16.mxu0 0
        %838 = vmatpush2.bf16.msra.mxu0 0
        %839 = vmatprep.subr.bf16.mxu0 0
        %840 = vmatpush2.bf16.msra.mxu0 0
        %841 = vmatprep.subr.bf16.mxu0 0
        %842 = vmatpush2.bf16.msra.mxu0 0
        %843 = vmatprep.subr.bf16.mxu0 0
        %844 = vmatpush2.bf16.msra.mxu0 0
        %845 = vmatprep.subr.bf16.mxu0 0
        %846 = vmatpush2.bf16.msra.mxu0 0
        %847 = vmatprep.mubr.bf16.mxu0 0
        %848 = vmatmul.mubr.bf16.gmra.mxu0 %v295
        %v849 = vpop.f32.mrf.mxu0
        %v850 = vadd.f32 0.0, %v849
        %v851 = vpop.f32.mrf.mxu0
        %v852 = vpop.f32.mrf.mxu0
        %v853 = vadd.f32 0.0, %v852
        %v854 = vpop.f32.mrf.mxu0
        %855 = vmatprep.mubr.bf16.mxu0 0
        %856 = vmatmul.mubr.bf16.gmra.mxu0 %v298
        %v857 = vpop.f32.mrf.mxu0
        %v858 = vadd.f32 0.0, %v857
        %v859 = vpop.f32.mrf.mxu0
        %v860 = vpop.f32.mrf.mxu0
        %v861 = vpop.f32.mrf.mxu0
        %862 = vdwg.mxu0
        %v863 = vpack.c.bf16 %v853, %v850
        %v864 = vpack.c.bf16 %v858, %v858
        %v867 = vunpack.c.l.b16 %v863
        %v868 = vunpack.c.h.b16 %v863
        %v869 = vunpack.c.l.b16 %v864
        %v870 = vpack.c.b16 %v867, %v867
        %v871 = vpack.c.b16 %v868, %v868
        %v872 = vpack.c.b16 %v869, %v869
        %s876 = scalar_lea.vmem [#allocation2], 60
        %877 = vst.msk [vmem:[%s876] sm:$0xf] %vm365, %v870
        %878 = vst.msk [vmem:[%s876 + $0x4] sm:$0xf] %vm365, %v871
        %879 = vst.msk [vmem:[%s876 + $0x8] sm:$0x1] %vm368, %v872
        %s880 = sadd.s32 %s250, 6
        %p881 = scmp.eq.s32.totalorder %s880, 0
        %p882 = scmp.eq.s32.totalorder %s880, 17
        %p883 = por %p881, %p882
        %s884 = scvt.s32.f32 %s778
        %s885 = sadd.f32 %s884, 0.5
        %s886 = smul.f32 %s885, 0.5
        %s887 = ssub.f32 %s886, 0.5
        %s888 = smax.f32 %s887, 0.0
        %s889 = sfloor.f32 %s888
        %s890 = smin.f32 %s889, 7.0
        %s891 = scvt.f32.s32.to.zero.pseudo %s890
        %s892 = sadd.s32 %s891, 1
        %p893 = scmp.lt.s32.totalorder %s892, 7
        %s894 = scalar_select %p893, %s892, 7
        %s895 = scvt.s32.f32 %s891
        %s896 = ssub.f32 %s888, %s895
        %s897 = ssub.f32 1.0, %s896
        %s898 = scalar_select %p883, 0.0, %s897
        %s899 = scalar_select %p883, 0.0, %s896
        %s900 = smul.addr %s891, 4
        %s901 = scalar_lea.vmem %s216, %s900 [#allocation3]
        %v902 = vld [vmem:[%s901] sm:$0xf]
        %v903 = vunpack.c.l.bf16 %v902
        %v904 = vstv %s898
        %v905 = vmul.f32 %v904, %v903
        %s906 = smul.addr %s894, 4
        %s907 = scalar_lea.vmem %s216, %s906 [#allocation3]
        %v908 = vld [vmem:[%s907] sm:$0xf]
        %v909 = vunpack.c.l.bf16 %v908
        %v910 = vstv %s899
        %v911 = vmul.f32 %v910, %v909
        %v912 = vadd.f32 %v905, %v911
        %v913 = vpack.c.bf16 %v912, %v912
        %v915 = vsel %vm300, %v913, 0
        %917 = vmatprep.subr.bf16.mxu0 0
        %918 = vmatpush1.bf16.msra.mxu0 0
        %919 = vmatprep.subr.bf16.mxu0 0
        %920 = vmatpush1.bf16.msra.mxu0 0
        %921 = vmatprep.subr.bf16.mxu0 0
        %922 = vmatpush1.bf16.msra.mxu0 0
        %923 = vmatprep.subr.bf16.mxu0 0
        %924 = vmatpush1.bf16.msra.mxu0 0
        %925 = vmatprep.subr.bf16.mxu0 0
        %926 = vmatpush1.bf16.msra.mxu0 0
        %927 = vmatprep.subr.bf16.mxu0 0
        %928 = vmatpush1.bf16.msra.mxu0 0
        %929 = vmatprep.subr.bf16.mxu0 0
        %930 = vmatpush1.bf16.msra.mxu0 0
        %931 = vmatprep.subr.bf16.mxu0 0
        %932 = vmatpush1.bf16.msra.mxu0 %v915
        %933 = vmatprep.subr.bf16.mxu0 0
        %934 = vmatpush2.bf16.msra.mxu0 0
        %935 = vmatprep.subr.bf16.mxu0 0
        %936 = vmatpush2.bf16.msra.mxu0 0
        %937 = vmatprep.subr.bf16.mxu0 0
        %938 = vmatpush2.bf16.msra.mxu0 0
        %939 = vmatprep.subr.bf16.mxu0 0
        %940 = vmatpush2.bf16.msra.mxu0 0
        %941 = vmatprep.subr.bf16.mxu0 0
        %942 = vmatpush2.bf16.msra.mxu0 0
        %943 = vmatprep.subr.bf16.mxu0 0
        %944 = vmatpush2.bf16.msra.mxu0 0
        %945 = vmatprep.subr.bf16.mxu0 0
        %946 = vmatpush2.bf16.msra.mxu0 0
        %947 = vmatprep.subr.bf16.mxu0 0
        %948 = vmatpush2.bf16.msra.mxu0 0
        %949 = vmatprep.mubr.bf16.mxu0 0
        %950 = vmatmul.mubr.bf16.gmra.mxu0 %v295
        %v951 = vpop.f32.mrf.mxu0
        %v952 = vadd.f32 0.0, %v951
        %v953 = vpop.f32.mrf.mxu0
        %v954 = vpop.f32.mrf.mxu0
        %v955 = vadd.f32 0.0, %v954
        %v956 = vpop.f32.mrf.mxu0
        %957 = vmatprep.mubr.bf16.mxu0 0
        %958 = vmatmul.mubr.bf16.gmra.mxu0 %v298
        %v959 = vpop.f32.mrf.mxu0
        %v960 = vadd.f32 0.0, %v959
        %v961 = vpop.f32.mrf.mxu0
        %v962 = vpop.f32.mrf.mxu0
        %v963 = vpop.f32.mrf.mxu0
        %964 = vdwg.mxu0
        %v965 = vpack.c.bf16 %v955, %v952
        %v966 = vpack.c.bf16 %v960, %v960
        %v969 = vunpack.c.l.b16 %v965
        %v970 = vunpack.c.h.b16 %v965
        %v971 = vunpack.c.l.b16 %v966
        %v972 = vpack.c.b16 %v969, %v969
        %v973 = vpack.c.b16 %v970, %v970
        %v974 = vpack.c.b16 %v971, %v971
        %s978 = scalar_lea.vmem [#allocation2], 72
        %979 = vst.msk [vmem:[%s978] sm:$0xf] %vm365, %v972
        %980 = vst.msk [vmem:[%s978 + $0x4] sm:$0xf] %vm365, %v973
        %981 = vst.msk [vmem:[%s978 + $0x8] sm:$0x1] %vm368, %v974
        %s982 = sadd.s32 %s250, 7
        %p983 = scmp.eq.s32.totalorder %s982, 0
        %p984 = scmp.eq.s32.totalorder %s982, 17
        %p985 = por %p983, %p984
        %s986 = scvt.s32.f32 %s880
        %s987 = sadd.f32 %s986, 0.5
        %s988 = smul.f32 %s987, 0.5
        %s989 = ssub.f32 %s988, 0.5
        %s990 = smax.f32 %s989, 0.0
        %s991 = sfloor.f32 %s990
        %s992 = smin.f32 %s991, 7.0
        %s993 = scvt.f32.s32.to.zero.pseudo %s992
        %s994 = sadd.s32 %s993, 1
        %p995 = scmp.lt.s32.totalorder %s994, 7
        %s996 = scalar_select %p995, %s994, 7
        %s997 = scvt.s32.f32 %s993
        %s998 = ssub.f32 %s990, %s997
        %s999 = ssub.f32 1.0, %s998
        %s1000 = scalar_select %p985, 0.0, %s999
        %s1001 = scalar_select %p985, 0.0, %s998
        %s1002 = smul.addr %s993, 4
        %s1003 = scalar_lea.vmem %s216, %s1002 [#allocation3]
        %v1004 = vld [vmem:[%s1003] sm:$0xf]
        %v1005 = vunpack.c.l.bf16 %v1004
        %v1006 = vstv %s1000
        %v1007 = vmul.f32 %v1006, %v1005
        %s1008 = smul.addr %s996, 4
        %s1009 = scalar_lea.vmem %s216, %s1008 [#allocation3]
        %v1010 = vld [vmem:[%s1009] sm:$0xf]
        %v1011 = vunpack.c.l.bf16 %v1010
        %v1012 = vstv %s1001
        %v1013 = vmul.f32 %v1012, %v1011
        %v1014 = vadd.f32 %v1007, %v1013
        %v1015 = vpack.c.bf16 %v1014, %v1014
        %v1017 = vsel %vm300, %v1015, 0
        %1019 = vmatprep.subr.bf16.mxu0 0
        %1020 = vmatpush1.bf16.msra.mxu0 0
        %1021 = vmatprep.subr.bf16.mxu0 0
        %1022 = vmatpush1.bf16.msra.mxu0 0
        %1023 = vmatprep.subr.bf16.mxu0 0
        %1024 = vmatpush1.bf16.msra.mxu0 0
        %1025 = vmatprep.subr.bf16.mxu0 0
        %1026 = vmatpush1.bf16.msra.mxu0 0
        %1027 = vmatprep.subr.bf16.mxu0 0
        %1028 = vmatpush1.bf16.msra.mxu0 0
        %1029 = vmatprep.subr.bf16.mxu0 0
        %1030 = vmatpush1.bf16.msra.mxu0 0
        %1031 = vmatprep.subr.bf16.mxu0 0
        %1032 = vmatpush1.bf16.msra.mxu0 0
        %1033 = vmatprep.subr.bf16.mxu0 0
        %1034 = vmatpush1.bf16.msra.mxu0 %v1017
        %1035 = vmatprep.subr.bf16.mxu0 0
        %1036 = vmatpush2.bf16.msra.mxu0 0
        %1037 = vmatprep.subr.bf16.mxu0 0
        %1038 = vmatpush2.bf16.msra.mxu0 0
        %1039 = vmatprep.subr.bf16.mxu0 0
        %1040 = vmatpush2.bf16.msra.mxu0 0
        %1041 = vmatprep.subr.bf16.mxu0 0
        %1042 = vmatpush2.bf16.msra.mxu0 0
        %1043 = vmatprep.subr.bf16.mxu0 0
        %1044 = vmatpush2.bf16.msra.mxu0 0
        %1045 = vmatprep.subr.bf16.mxu0 0
        %1046 = vmatpush2.bf16.msra.mxu0 0
        %1047 = vmatprep.subr.bf16.mxu0 0
        %1048 = vmatpush2.bf16.msra.mxu0 0
        %1049 = vmatprep.subr.bf16.mxu0 0
        %1050 = vmatpush2.bf16.msra.mxu0 0
        %1051 = vmatprep.mubr.bf16.mxu0 0
        %1052 = vmatmul.mubr.bf16.gmra.mxu0 %v295
        %v1053 = vpop.f32.mrf.mxu0
        %v1054 = vadd.f32 0.0, %v1053
        %v1055 = vpop.f32.mrf.mxu0
        %v1056 = vpop.f32.mrf.mxu0
        %v1057 = vadd.f32 0.0, %v1056
        %v1058 = vpop.f32.mrf.mxu0
        %1059 = vmatprep.mubr.bf16.mxu0 0
        %1060 = vmatmul.mubr.bf16.gmra.mxu0 %v298
        %v1061 = vpop.f32.mrf.mxu0
        %v1062 = vadd.f32 0.0, %v1061
        %v1063 = vpop.f32.mrf.mxu0
        %v1064 = vpop.f32.mrf.mxu0
        %v1065 = vpop.f32.mrf.mxu0
        %1066 = vdwg.mxu0
        %v1067 = vpack.c.bf16 %v1057, %v1054
        %v1068 = vpack.c.bf16 %v1062, %v1062
        %v1071 = vunpack.c.l.b16 %v1067
        %v1072 = vunpack.c.h.b16 %v1067
        %v1073 = vunpack.c.l.b16 %v1068
        %v1074 = vpack.c.b16 %v1071, %v1071
        %v1075 = vpack.c.b16 %v1072, %v1072
        %v1076 = vpack.c.b16 %v1073, %v1073
        %s1080 = scalar_lea.vmem [#allocation2], 84
        %1081 = vst.msk [vmem:[%s1080] sm:$0xf] %vm365, %v1074
        %1082 = vst.msk [vmem:[%s1080 + $0x4] sm:$0xf] %vm365, %v1075
        %1083 = vst.msk [vmem:[%s1080 + $0x8] sm:$0x1] %vm368, %v1076
        %s1084 = sadd.s32 %s250, 8
        %p1085 = scmp.eq.s32.totalorder %s1084, 0
        %p1086 = scmp.eq.s32.totalorder %s1084, 17
        %p1087 = por %p1085, %p1086
        %s1088 = scvt.s32.f32 %s982
        %s1089 = sadd.f32 %s1088, 0.5
        %s1090 = smul.f32 %s1089, 0.5
        %s1091 = ssub.f32 %s1090, 0.5
        %s1092 = smax.f32 %s1091, 0.0
        %s1093 = sfloor.f32 %s1092
        %s1094 = smin.f32 %s1093, 7.0
        %s1095 = scvt.f32.s32.to.zero.pseudo %s1094
        %s1096 = sadd.s32 %s1095, 1
        %p1097 = scmp.lt.s32.totalorder %s1096, 7
        %s1098 = scalar_select %p1097, %s1096, 7
        %s1099 = scvt.s32.f32 %s1095
        %s1100 = ssub.f32 %s1092, %s1099
        %s1101 = ssub.f32 1.0, %s1100
        %s1102 = scalar_select %p1087, 0.0, %s1101
        %s1103 = scalar_select %p1087, 0.0, %s1100
        %s1104 = smul.addr %s1095, 4
        %s1105 = scalar_lea.vmem %s216, %s1104 [#allocation3]
        %v1106 = vld [vmem:[%s1105] sm:$0xf]
        %v1107 = vunpack.c.l.bf16 %v1106
        %v1108 = vstv %s1102
        %v1109 = vmul.f32 %v1108, %v1107
        %s1110 = smul.addr %s1098, 4
        %s1111 = scalar_lea.vmem %s216, %s1110 [#allocation3]
        %v1112 = vld [vmem:[%s1111] sm:$0xf]
        %v1113 = vunpack.c.l.bf16 %v1112
        %v1114 = vstv %s1103
        %v1115 = vmul.f32 %v1114, %v1113
        %v1116 = vadd.f32 %v1109, %v1115
        %v1117 = vpack.c.bf16 %v1116, %v1116
        %v1119 = vsel %vm300, %v1117, 0
        %1121 = vmatprep.subr.bf16.mxu0 0
        %1122 = vmatpush1.bf16.msra.mxu0 0
        %1123 = vmatprep.subr.bf16.mxu0 0
        %1124 = vmatpush1.bf16.msra.mxu0 0
        %1125 = vmatprep.subr.bf16.mxu0 0
        %1126 = vmatpush1.bf16.msra.mxu0 0
        %1127 = vmatprep.subr.bf16.mxu0 0
        %1128 = vmatpush1.bf16.msra.mxu0 0
        %1129 = vmatprep.subr.bf16.mxu0 0
        %1130 = vmatpush1.bf16.msra.mxu0 0
        %1131 = vmatprep.subr.bf16.mxu0 0
        %1132 = vmatpush1.bf16.msra.mxu0 0
        %1133 = vmatprep.subr.bf16.mxu0 0
        %1134 = vmatpush1.bf16.msra.mxu0 0
        %1135 = vmatprep.subr.bf16.mxu0 0
        %1136 = vmatpush1.bf16.msra.mxu0 %v1119
        %1137 = vmatprep.subr.bf16.mxu0 0
        %1138 = vmatpush2.bf16.msra.mxu0 0
        %1139 = vmatprep.subr.bf16.mxu0 0
        %1140 = vmatpush2.bf16.msra.mxu0 0
        %1141 = vmatprep.subr.bf16.mxu0 0
        %1142 = vmatpush2.bf16.msra.mxu0 0
        %1143 = vmatprep.subr.bf16.mxu0 0
        %1144 = vmatpush2.bf16.msra.mxu0 0
        %1145 = vmatprep.subr.bf16.mxu0 0
        %1146 = vmatpush2.bf16.msra.mxu0 0
        %1147 = vmatprep.subr.bf16.mxu0 0
        %1148 = vmatpush2.bf16.msra.mxu0 0
        %1149 = vmatprep.subr.bf16.mxu0 0
        %1150 = vmatpush2.bf16.msra.mxu0 0
        %1151 = vmatprep.subr.bf16.mxu0 0
        %1152 = vmatpush2.bf16.msra.mxu0 0
        %1153 = vmatprep.mubr.bf16.mxu0 0
        %1154 = vmatmul.mubr.bf16.gmra.mxu0 %v295
        %v1155 = vpop.f32.mrf.mxu0
        %v1156 = vadd.f32 0.0, %v1155
        %v1157 = vpop.f32.mrf.mxu0
        %v1158 = vpop.f32.mrf.mxu0
        %v1159 = vadd.f32 0.0, %v1158
        %v1160 = vpop.f32.mrf.mxu0
        %1161 = vmatprep.mubr.bf16.mxu0 0
        %1162 = vmatmul.mubr.bf16.gmra.mxu0 %v298
        %v1163 = vpop.f32.mrf.mxu0
        %v1164 = vadd.f32 0.0, %v1163
        %v1165 = vpop.f32.mrf.mxu0
        %v1166 = vpop.f32.mrf.mxu0
        %v1167 = vpop.f32.mrf.mxu0
        %1168 = vdwg.mxu0
        %v1169 = vpack.c.bf16 %v1159, %v1156
        %v1170 = vpack.c.bf16 %v1164, %v1164
        %v1173 = vunpack.c.l.b16 %v1169
        %v1174 = vunpack.c.h.b16 %v1169
        %v1175 = vunpack.c.l.b16 %v1170
        %v1176 = vpack.c.b16 %v1173, %v1173
        %v1177 = vpack.c.b16 %v1174, %v1174
        %v1178 = vpack.c.b16 %v1175, %v1175
        %s1182 = scalar_lea.vmem [#allocation2], 96
        %1183 = vst.msk [vmem:[%s1182] sm:$0xf] %vm365, %v1176
        %1184 = vst.msk [vmem:[%s1182 + $0x4] sm:$0xf] %vm365, %v1177
        %1185 = vst.msk [vmem:[%s1182 + $0x8] sm:$0x1] %vm368, %v1178
        %s1186 = sadd.s32 %s250, 9
        %p1187 = scmp.eq.s32.totalorder %s1186, 0
        %p1188 = scmp.eq.s32.totalorder %s1186, 17
        %p1189 = por %p1187, %p1188
        %s1190 = scvt.s32.f32 %s1084
        %s1191 = sadd.f32 %s1190, 0.5
        %s1192 = smul.f32 %s1191, 0.5
        %s1193 = ssub.f32 %s1192, 0.5
        %s1194 = smax.f32 %s1193, 0.0
        %s1195 = sfloor.f32 %s1194
        %s1196 = smin.f32 %s1195, 7.0
        %s1197 = scvt.f32.s32.to.zero.pseudo %s1196
        %s1198 = sadd.s32 %s1197, 1
        %p1199 = scmp.lt.s32.totalorder %s1198, 7
        %s1200 = scalar_select %p1199, %s1198, 7
        %s1201 = scvt.s32.f32 %s1197
        %s1202 = ssub.f32 %s1194, %s1201
        %s1203 = ssub.f32 1.0, %s1202
        %s1204 = scalar_select %p1189, 0.0, %s1203
        %s1205 = scalar_select %p1189, 0.0, %s1202
        %s1206 = smul.addr %s1197, 4
        %s1207 = scalar_lea.vmem %s216, %s1206 [#allocation3]
        %v1208 = vld [vmem:[%s1207] sm:$0xf]
        %v1209 = vunpack.c.l.bf16 %v1208
        %v1210 = vstv %s1204
        %v1211 = vmul.f32 %v1210, %v1209
        %s1212 = smul.addr %s1200, 4
        %s1213 = scalar_lea.vmem %s216, %s1212 [#allocation3]
        %v1214 = vld [vmem:[%s1213] sm:$0xf]
        %v1215 = vunpack.c.l.bf16 %v1214
        %v1216 = vstv %s1205
        %v1217 = vmul.f32 %v1216, %v1215
        %v1218 = vadd.f32 %v1211, %v1217
        %v1219 = vpack.c.bf16 %v1218, %v1218
        %v1221 = vsel %vm300, %v1219, 0
        %1223 = vmatprep.subr.bf16.mxu0 0
        %1224 = vmatpush1.bf16.msra.mxu0 0
        %1225 = vmatprep.subr.bf16.mxu0 0
        %1226 = vmatpush1.bf16.msra.mxu0 0
        %1227 = vmatprep.subr.bf16.mxu0 0
        %1228 = vmatpush1.bf16.msra.mxu0 0
        %1229 = vmatprep.subr.bf16.mxu0 0
        %1230 = vmatpush1.bf16.msra.mxu0 0
        %1231 = vmatprep.subr.bf16.mxu0 0
        %1232 = vmatpush1.bf16.msra.mxu0 0
        %1233 = vmatprep.subr.bf16.mxu0 0
        %1234 = vmatpush1.bf16.msra.mxu0 0
        %1235 = vmatprep.subr.bf16.mxu0 0
        %1236 = vmatpush1.bf16.msra.mxu0 0
        %1237 = vmatprep.subr.bf16.mxu0 0
        %1238 = vmatpush1.bf16.msra.mxu0 %v1221
        %1239 = vmatprep.subr.bf16.mxu0 0
        %1240 = vmatpush2.bf16.msra.mxu0 0
        %1241 = vmatprep.subr.bf16.mxu0 0
        %1242 = vmatpush2.bf16.msra.mxu0 0
        %1243 = vmatprep.subr.bf16.mxu0 0
        %1244 = vmatpush2.bf16.msra.mxu0 0
        %1245 = vmatprep.subr.bf16.mxu0 0
        %1246 = vmatpush2.bf16.msra.mxu0 0
        %1247 = vmatprep.subr.bf16.mxu0 0
        %1248 = vmatpush2.bf16.msra.mxu0 0
        %1249 = vmatprep.subr.bf16.mxu0 0
        %1250 = vmatpush2.bf16.msra.mxu0 0
        %1251 = vmatprep.subr.bf16.mxu0 0
        %1252 = vmatpush2.bf16.msra.mxu0 0
        %1253 = vmatprep.subr.bf16.mxu0 0
        %1254 = vmatpush2.bf16.msra.mxu0 0
        %1255 = vmatprep.mubr.bf16.mxu0 0
        %1256 = vmatmul.mubr.bf16.gmra.mxu0 %v295
        %v1257 = vpop.f32.mrf.mxu0
        %v1258 = vadd.f32 0.0, %v1257
        %v1259 = vpop.f32.mrf.mxu0
        %v1260 = vpop.f32.mrf.mxu0
        %v1261 = vadd.f32 0.0, %v1260
        %v1262 = vpop.f32.mrf.mxu0
        %1263 = vmatprep.mubr.bf16.mxu0 0
        %1264 = vmatmul.mubr.bf16.gmra.mxu0 %v298
        %v1265 = vpop.f32.mrf.mxu0
        %v1266 = vadd.f32 0.0, %v1265
        %v1267 = vpop.f32.mrf.mxu0
        %v1268 = vpop.f32.mrf.mxu0
        %v1269 = vpop.f32.mrf.mxu0
        %1270 = vdwg.mxu0
        %v1271 = vpack.c.bf16 %v1261, %v1258
        %v1272 = vpack.c.bf16 %v1266, %v1266
        %v1275 = vunpack.c.l.b16 %v1271
        %v1276 = vunpack.c.h.b16 %v1271
        %v1277 = vunpack.c.l.b16 %v1272
        %v1278 = vpack.c.b16 %v1275, %v1275
        %v1279 = vpack.c.b16 %v1276, %v1276
        %v1280 = vpack.c.b16 %v1277, %v1277
        %s1284 = scalar_lea.vmem [#allocation2], 108
        %1285 = vst.msk [vmem:[%s1284] sm:$0xf] %vm365, %v1278
        %1286 = vst.msk [vmem:[%s1284 + $0x4] sm:$0xf] %vm365, %v1279
        %1287 = vst.msk [vmem:[%s1284 + $0x8] sm:$0x1] %vm368, %v1280
        %v1288 = vld [vmem:[#allocation2] sm:$0xf]
        %v1289 = vld [vmem:[#allocation2 + $0x4] sm:$0xf]
        %v1290 = vld [vmem:[#allocation2 + $0xc] sm:$0xf]
        %v1291 = vld [vmem:[#allocation2 + $0x10] sm:$0xf]
        %v1292 = vld [vmem:[#allocation2 + $0x18] sm:$0xf]
        %v1293 = vld [vmem:[#allocation2 + $0x1c] sm:$0xf]
        %v1294 = vld [vmem:[#allocation2 + $0x24] sm:$0xf]
        %v1295 = vld [vmem:[#allocation2 + $0x28] sm:$0xf]
        %v1296 = vld [vmem:[#allocation2 + $0x30] sm:$0xf]
        %v1297 = vld [vmem:[#allocation2 + $0x34] sm:$0xf]
        %v1298 = vld [vmem:[#allocation2 + $0x3c] sm:$0xf]
        %v1299 = vld [vmem:[#allocation2 + $0x40] sm:$0xf]
        %v1300 = vld [vmem:[#allocation2 + $0x48] sm:$0xf]
        %v1301 = vld [vmem:[#allocation2 + $0x4c] sm:$0xf]
        %v1302 = vld [vmem:[#allocation2 + $0x54] sm:$0xf]
        %v1303 = vld [vmem:[#allocation2 + $0x58] sm:$0xf]
        %v1304 = vld [vmem:[#allocation6] sm:$0xf]
        %v1305 = vld [vmem:[#allocation2 + $0x8] sm:$0x1]
        %v1306 = vld [vmem:[#allocation2 + $0x14] sm:$0x1]
        %v1307 = vld [vmem:[#allocation2 + $0x20] sm:$0x1]
        %v1308 = vld [vmem:[#allocation2 + $0x2c] sm:$0x1]
        %v1309 = vld [vmem:[#allocation2 + $0x38] sm:$0x1]
        %v1310 = vld [vmem:[#allocation2 + $0x44] sm:$0x1]
        %v1311 = vld [vmem:[#allocation2 + $0x50] sm:$0x1]
        %v1312 = vld [vmem:[#allocation2 + $0x5c] sm:$0x1]
        %vm1313 = vsmask.f32 3328
        %vm1314 = vsmask.f32 7440
        %vm1315 = vmor %vm1313, %vm1314
        %v1317 = vshrl.u32 %v1288, 16
        %v1319 = vrot.slane %v1317, 4
        %v1320 = vshll.u32 %v1288, 16
        %v1322 = vrot.slane %v1320, 5
        %v1323 = vor.u32 %v1319, %v1322
        %v1324 = vrot.slane %v1323, 4
        %v1326 = vshll.u32 %v1289, 16
        %v1328 = vrot.slane %v1326, 5
        %v1329 = vsel %vm1315, %v1324, %v1328
        %v1330 = vshrl.u32 %v1289, 16
        %v1332 = vrot.slane %v1330, 4
        %v1333 = vor.u32 %v1332, %v1328
        %v1334 = vrot.slane %v1333, 4
        %v1336 = vshll.u32 %v1305, 16
        %v1338 = vrot.slane %v1336, 5
        %v1339 = vsel %vm1315, %v1334, %v1338
        %v1341 = vshrl.u32 %v1290, 16
        %v1343 = vrot.slane %v1341, 4
        %v1344 = vshll.u32 %v1290, 16
        %v1346 = vrot.slane %v1344, 5
        %v1347 = vor.u32 %v1343, %v1346
        %v1348 = vrot.slane %v1347, 4
        %v1350 = vshll.u32 %v1291, 16
        %v1352 = vrot.slane %v1350, 5
        %v1353 = vsel %vm1315, %v1348, %v1352
        %v1354 = vshrl.u32 %v1291, 16
        %v1356 = vrot.slane %v1354, 4
        %v1357 = vor.u32 %v1356, %v1352
        %v1358 = vrot.slane %v1357, 4
        %v1360 = vshll.u32 %v1306, 16
        %v1362 = vrot.slane %v1360, 5
        %v1363 = vsel %vm1315, %v1358, %v1362
        %v1365 = vshrl.u32 %v1292, 16
        %v1367 = vrot.slane %v1365, 4
        %v1368 = vshll.u32 %v1292, 16
        %v1370 = vrot.slane %v1368, 5
        %v1371 = vor.u32 %v1367, %v1370
        %v1372 = vrot.slane %v1371, 4
        %v1374 = vshll.u32 %v1293, 16
        %v1376 = vrot.slane %v1374, 5
        %v1377 = vsel %vm1315, %v1372, %v1376
        %v1378 = vshrl.u32 %v1293, 16
        %v1380 = vrot.slane %v1378, 4
        %v1381 = vor.u32 %v1380, %v1376
        %v1382 = vrot.slane %v1381, 4
        %v1384 = vshll.u32 %v1307, 16
        %v1386 = vrot.slane %v1384, 5
        %v1387 = vsel %vm1315, %v1382, %v1386
        %v1389 = vshrl.u32 %v1294, 16
        %v1391 = vrot.slane %v1389, 4
        %v1392 = vshll.u32 %v1294, 16
        %v1394 = vrot.slane %v1392, 5
        %v1395 = vor.u32 %v1391, %v1394
        %v1396 = vrot.slane %v1395, 4
        %v1398 = vshll.u32 %v1295, 16
        %v1400 = vrot.slane %v1398, 5
        %v1401 = vsel %vm1315, %v1396, %v1400
        %v1402 = vshrl.u32 %v1295, 16
        %v1404 = vrot.slane %v1402, 4
        %v1405 = vor.u32 %v1404, %v1400
        %v1406 = vrot.slane %v1405, 4
        %v1408 = vshll.u32 %v1308, 16
        %v1410 = vrot.slane %v1408, 5
        %v1411 = vsel %vm1315, %v1406, %v1410
        %v1413 = vshrl.u32 %v1296, 16
        %v1415 = vrot.slane %v1413, 4
        %v1416 = vshll.u32 %v1296, 16
        %v1418 = vrot.slane %v1416, 5
        %v1419 = vor.u32 %v1415, %v1418
        %v1420 = vrot.slane %v1419, 4
        %v1422 = vshll.u32 %v1297, 16
        %v1424 = vrot.slane %v1422, 5
        %v1425 = vsel %vm1315, %v1420, %v1424
        %v1426 = vshrl.u32 %v1297, 16
        %v1428 = vrot.slane %v1426, 4
        %v1429 = vor.u32 %v1428, %v1424
        %v1430 = vrot.slane %v1429, 4
        %v1432 = vshll.u32 %v1309, 16
        %v1434 = vrot.slane %v1432, 5
        %v1435 = vsel %vm1315, %v1430, %v1434
        %v1437 = vshrl.u32 %v1298, 16
        %v1439 = vrot.slane %v1437, 4
        %v1440 = vshll.u32 %v1298, 16
        %v1442 = vrot.slane %v1440, 5
        %v1443 = vor.u32 %v1439, %v1442
        %v1444 = vrot.slane %v1443, 4
        %v1446 = vshll.u32 %v1299, 16
        %v1448 = vrot.slane %v1446, 5
        %v1449 = vsel %vm1315, %v1444, %v1448
        %v1450 = vshrl.u32 %v1299, 16
        %v1452 = vrot.slane %v1450, 4
        %v1453 = vor.u32 %v1452, %v1448
        %v1454 = vrot.slane %v1453, 4
        %v1456 = vshll.u32 %v1310, 16
        %v1458 = vrot.slane %v1456, 5
        %v1459 = vsel %vm1315, %v1454, %v1458
        %v1461 = vshrl.u32 %v1300, 16
        %v1463 = vrot.slane %v1461, 4
        %v1464 = vshll.u32 %v1300, 16
        %v1466 = vrot.slane %v1464, 5
        %v1467 = vor.u32 %v1463, %v1466
        %v1468 = vrot.slane %v1467, 4
        %v1470 = vshll.u32 %v1301, 16
        %v1472 = vrot.slane %v1470, 5
        %v1473 = vsel %vm1315, %v1468, %v1472
        %v1474 = vshrl.u32 %v1301, 16
        %v1476 = vrot.slane %v1474, 4
        %v1477 = vor.u32 %v1476, %v1472
        %v1478 = vrot.slane %v1477, 4
        %v1480 = vshll.u32 %v1311, 16
        %v1482 = vrot.slane %v1480, 5
        %v1483 = vsel %vm1315, %v1478, %v1482
        %v1485 = vshrl.u32 %v1302, 16
        %v1487 = vrot.slane %v1485, 4
        %v1488 = vshll.u32 %v1302, 16
        %v1490 = vrot.slane %v1488, 5
        %v1491 = vor.u32 %v1487, %v1490
        %v1492 = vrot.slane %v1491, 4
        %v1494 = vshll.u32 %v1303, 16
        %v1496 = vrot.slane %v1494, 5
        %v1497 = vsel %vm1315, %v1492, %v1496
        %v1498 = vshrl.u32 %v1303, 16
        %v1500 = vrot.slane %v1498, 4
        %v1501 = vor.u32 %v1500, %v1496
        %v1502 = vrot.slane %v1501, 4
        %v1504 = vshll.u32 %v1312, 16
        %v1506 = vrot.slane %v1504, 5
        %v1507 = vsel %vm1315, %v1502, %v1506
        %s1508 = scalar_lea.vmem [#allocation6], 4
        %v1509 = vld [vmem:[%s1508] sm:$0xf]
        %v1510 = vunpack.c.l.b16 %v1329
        %v1511 = vunpack.c.l.b16 %v1339
        %v1512 = vunpack.c.l.b16 %v1353
        %v1513 = vunpack.c.l.b16 %v1363
        %v1514 = vunpack.c.l.b16 %v1377
        %v1515 = vunpack.c.l.b16 %v1387
        %v1516 = vunpack.c.l.b16 %v1401
        %v1517 = vunpack.c.l.b16 %v1411
        %v1518 = vunpack.c.l.b16 %v1425
        %v1519 = vunpack.c.l.b16 %v1435
        %v1520 = vunpack.c.l.b16 %v1449
        %v1521 = vunpack.c.l.b16 %v1459
        %v1522 = vunpack.c.l.b16 %v1473
        %v1523 = vunpack.c.l.b16 %v1483
        %v1524 = vunpack.c.l.b16 %v1497
        %v1525 = vunpack.c.l.b16 %v1507
        %v1526 = vpack.c.b16 %v1511, %v1510
        %v1527 = vpack.c.b16 %v1513, %v1512
        %v1528 = vpack.c.b16 %v1515, %v1514
        %v1529 = vpack.c.b16 %v1517, %v1516
        %v1530 = vpack.c.b16 %v1519, %v1518
        %v1531 = vpack.c.b16 %v1521, %v1520
        %v1532 = vpack.c.b16 %v1523, %v1522
        %v1533 = vpack.c.b16 %v1525, %v1524
        %v1535 = vsel %vm293, %v1526, 0
        %v1538 = vsel %vm293, %v1527, 0
        %v1541 = vsel %vm293, %v1528, 0
        %v1544 = vsel %vm293, %v1529, 0
        %v1547 = vsel %vm293, %v1530, 0
        %v1550 = vsel %vm293, %v1531, 0
        %v1553 = vsel %vm293, %v1532, 0
        %v1556 = vsel %vm293, %v1533, 0
        %v1559 = vsel %vm300, %v1509, 0
        %1561 = vmatprep.subr.bf16.mxu0 0
        %1562 = vmatpush1.bf16.msra.mxu0 0
        %1563 = vmatprep.subr.bf16.mxu0 0
        %1564 = vmatpush1.bf16.msra.mxu0 0
        %1565 = vmatprep.subr.bf16.mxu0 0
        %1566 = vmatpush1.bf16.msra.mxu0 0
        %1567 = vmatprep.subr.bf16.mxu0 0
        %1568 = vmatpush1.bf16.msra.mxu0 0
        %1569 = vmatprep.subr.bf16.mxu0 0
        %1570 = vmatpush1.bf16.msra.mxu0 0
        %1571 = vmatprep.subr.bf16.mxu0 0
        %1572 = vmatpush1.bf16.msra.mxu0 0
        %1573 = vmatprep.subr.bf16.mxu0 0
        %1574 = vmatpush1.bf16.msra.mxu0 0
        %1575 = vmatprep.subr.bf16.mxu0 0
        %1576 = vmatpush1.bf16.msra.mxu0 %v1559
        %1577 = vmatprep.subr.bf16.mxu0 0
        %1578 = vmatpush2.bf16.msra.mxu0 0
        %1579 = vmatprep.subr.bf16.mxu0 0
        %1580 = vmatpush2.bf16.msra.mxu0 0
        %1581 = vmatprep.subr.bf16.mxu0 0
        %1582 = vmatpush2.bf16.msra.mxu0 0
        %1583 = vmatprep.subr.bf16.mxu0 0
        %1584 = vmatpush2.bf16.msra.mxu0 0
        %1585 = vmatprep.subr.bf16.mxu0 0
        %1586 = vmatpush2.bf16.msra.mxu0 0
        %1587 = vmatprep.subr.bf16.mxu0 0
        %1588 = vmatpush2.bf16.msra.mxu0 0
        %1589 = vmatprep.subr.bf16.mxu0 0
        %1590 = vmatpush2.bf16.msra.mxu0 0
        %1591 = vmatprep.subr.bf16.mxu0 0
        %1592 = vmatpush2.bf16.msra.mxu0 0
        %1593 = vmatprep.mubr.bf16.mxu0 0
        %1594 = vmatmul.mubr.bf16.gmra.mxu0 %v1535
        %v1595 = vpop.f32.mrf.mxu0
        %v1596 = vadd.f32 0.0, %v1595
        %v1597 = vpop.f32.mrf.mxu0
        %v1598 = vpop.f32.mrf.mxu0
        %v1599 = vadd.f32 0.0, %v1598
        %v1600 = vpop.f32.mrf.mxu0
        %1601 = vmatprep.mubr.bf16.mxu0 0
        %1602 = vmatmul.mubr.bf16.gmra.mxu0 %v1538
        %v1603 = vpop.f32.mrf.mxu0
        %v1604 = vadd.f32 0.0, %v1603
        %v1605 = vpop.f32.mrf.mxu0
        %v1606 = vpop.f32.mrf.mxu0
        %v1607 = vadd.f32 0.0, %v1606
        %v1608 = vpop.f32.mrf.mxu0
        %1609 = vmatprep.mubr.bf16.mxu0 0
        %1610 = vmatmul.mubr.bf16.gmra.mxu0 %v1541
        %v1611 = vpop.f32.mrf.mxu0
        %v1612 = vadd.f32 0.0, %v1611
        %v1613 = vpop.f32.mrf.mxu0
        %v1614 = vpop.f32.mrf.mxu0
        %v1615 = vadd.f32 0.0, %v1614
        %v1616 = vpop.f32.mrf.mxu0
        %1617 = vmatprep.mubr.bf16.mxu0 0
        %1618 = vmatmul.mubr.bf16.gmra.mxu0 %v1544
        %v1619 = vpop.f32.mrf.mxu0
        %v1620 = vadd.f32 0.0, %v1619
        %v1621 = vpop.f32.mrf.mxu0
        %v1622 = vpop.f32.mrf.mxu0
        %v1623 = vadd.f32 0.0, %v1622
        %v1624 = vpop.f32.mrf.mxu0
        %1625 = vmatprep.mubr.bf16.mxu0 0
        %1626 = vmatmul.mubr.bf16.gmra.mxu0 %v1547
        %v1627 = vpop.f32.mrf.mxu0
        %v1628 = vadd.f32 0.0, %v1627
        %v1629 = vpop.f32.mrf.mxu0
        %v1630 = vpop.f32.mrf.mxu0
        %v1631 = vadd.f32 0.0, %v1630
        %v1632 = vpop.f32.mrf.mxu0
        %1633 = vmatprep.mubr.bf16.mxu0 0
        %1634 = vmatmul.mubr.bf16.gmra.mxu0 %v1550
        %v1635 = vpop.f32.mrf.mxu0
        %v1636 = vadd.f32 0.0, %v1635
        %v1637 = vpop.f32.mrf.mxu0
        %v1638 = vpop.f32.mrf.mxu0
        %v1639 = vadd.f32 0.0, %v1638
        %v1640 = vpop.f32.mrf.mxu0
        %1641 = vmatprep.mubr.bf16.mxu0 0
        %1642 = vmatmul.mubr.bf16.gmra.mxu0 %v1553
        %v1643 = vpop.f32.mrf.mxu0
        %v1644 = vadd.f32 0.0, %v1643
        %v1645 = vpop.f32.mrf.mxu0
        %v1646 = vpop.f32.mrf.mxu0
        %v1647 = vadd.f32 0.0, %v1646
        %v1648 = vpop.f32.mrf.mxu0
        %1649 = vmatprep.mubr.bf16.mxu0 0
        %1650 = vmatmul.mubr.bf16.gmra.mxu0 %v1556
        %v1651 = vpop.f32.mrf.mxu0
        %v1652 = vadd.f32 0.0, %v1651
        %v1653 = vpop.f32.mrf.mxu0
        %v1654 = vpop.f32.mrf.mxu0
        %v1655 = vadd.f32 0.0, %v1654
        %v1656 = vpop.f32.mrf.mxu0
        %1657 = vdwg.mxu0
        %v1674 = vunpack.c.l.b16 %v1288
        %v1675 = vunpack.c.l.b16 %v1289
        %v1676 = vunpack.c.l.b16 %v1290
        %v1677 = vunpack.c.l.b16 %v1291
        %v1678 = vunpack.c.l.b16 %v1292
        %v1679 = vunpack.c.l.b16 %v1293
        %v1680 = vunpack.c.l.b16 %v1294
        %v1681 = vunpack.c.l.b16 %v1295
        %v1682 = vunpack.c.l.b16 %v1296
        %v1683 = vunpack.c.l.b16 %v1297
        %v1684 = vunpack.c.l.b16 %v1298
        %v1685 = vunpack.c.l.b16 %v1299
        %v1686 = vunpack.c.l.b16 %v1300
        %v1687 = vunpack.c.l.b16 %v1301
        %v1688 = vunpack.c.l.b16 %v1302
        %v1689 = vunpack.c.l.b16 %v1303
        %v1690 = vpack.c.b16 %v1675, %v1674
        %v1691 = vpack.c.b16 %v1677, %v1676
        %v1692 = vpack.c.b16 %v1679, %v1678
        %v1693 = vpack.c.b16 %v1681, %v1680
        %v1694 = vpack.c.b16 %v1683, %v1682
        %v1695 = vpack.c.b16 %v1685, %v1684
        %v1696 = vpack.c.b16 %v1687, %v1686
        %v1697 = vpack.c.b16 %v1689, %v1688
        %v1699 = vsel %vm293, %v1690, 0
        %v1702 = vsel %vm293, %v1691, 0
        %v1705 = vsel %vm293, %v1692, 0
        %v1708 = vsel %vm293, %v1693, 0
        %v1711 = vsel %vm293, %v1694, 0
        %v1714 = vsel %vm293, %v1695, 0
        %v1717 = vsel %vm293, %v1696, 0
        %v1720 = vsel %vm293, %v1697, 0
        %v1723 = vsel %vm300, %v1304, 0
        %1725 = vmatprep.subr.bf16.mxu0 0
        %1726 = vmatpush1.bf16.msra.mxu0 0
        %1727 = vmatprep.subr.bf16.mxu0 0
        %1728 = vmatpush1.bf16.msra.mxu0 0
        %1729 = vmatprep.subr.bf16.mxu0 0
        %1730 = vmatpush1.bf16.msra.mxu0 0
        %1731 = vmatprep.subr.bf16.mxu0 0
        %1732 = vmatpush1.bf16.msra.mxu0 0
        %1733 = vmatprep.subr.bf16.mxu0 0
        %1734 = vmatpush1.bf16.msra.mxu0 0
        %1735 = vmatprep.subr.bf16.mxu0 0
        %1736 = vmatpush1.bf16.msra.mxu0 0
        %1737 = vmatprep.subr.bf16.mxu0 0
        %1738 = vmatpush1.bf16.msra.mxu0 0
        %1739 = vmatprep.subr.bf16.mxu0 0
        %1740 = vmatpush1.bf16.msra.mxu0 %v1723
        %1741 = vmatprep.subr.bf16.mxu0 0
        %1742 = vmatpush2.bf16.msra.mxu0 0
        %1743 = vmatprep.subr.bf16.mxu0 0
        %1744 = vmatpush2.bf16.msra.mxu0 0
        %1745 = vmatprep.subr.bf16.mxu0 0
        %1746 = vmatpush2.bf16.msra.mxu0 0
        %1747 = vmatprep.subr.bf16.mxu0 0
        %1748 = vmatpush2.bf16.msra.mxu0 0
        %1749 = vmatprep.subr.bf16.mxu0 0
        %1750 = vmatpush2.bf16.msra.mxu0 0
        %1751 = vmatprep.subr.bf16.mxu0 0
        %1752 = vmatpush2.bf16.msra.mxu0 0
        %1753 = vmatprep.subr.bf16.mxu0 0
        %1754 = vmatpush2.bf16.msra.mxu0 0
        %1755 = vmatprep.subr.bf16.mxu0 0
        %1756 = vmatpush2.bf16.msra.mxu0 0
        %1757 = vmatprep.mubr.bf16.mxu0 0
        %1758 = vmatmul.mubr.bf16.gmra.mxu0 %v1699
        %v1759 = vpop.f32.mrf.mxu0
        %v1760 = vadd.f32 %v1596, %v1759
        %v1761 = vpop.f32.mrf.mxu0
        %v1762 = vpop.f32.mrf.mxu0
        %v1763 = vadd.f32 %v1599, %v1762
        %v1764 = vpop.f32.mrf.mxu0
        %1765 = vmatprep.mubr.bf16.mxu0 0
        %1766 = vmatmul.mubr.bf16.gmra.mxu0 %v1702
        %v1767 = vpop.f32.mrf.mxu0
        %v1768 = vadd.f32 %v1604, %v1767
        %v1769 = vpop.f32.mrf.mxu0
        %v1770 = vpop.f32.mrf.mxu0
        %v1771 = vadd.f32 %v1607, %v1770
        %v1772 = vpop.f32.mrf.mxu0
        %1773 = vmatprep.mubr.bf16.mxu0 0
        %1774 = vmatmul.mubr.bf16.gmra.mxu0 %v1705
        %v1775 = vpop.f32.mrf.mxu0
        %v1776 = vadd.f32 %v1612, %v1775
        %v1777 = vpop.f32.mrf.mxu0
        %v1778 = vpop.f32.mrf.mxu0
        %v1779 = vadd.f32 %v1615, %v1778
        %v1780 = vpop.f32.mrf.mxu0
        %1781 = vmatprep.mubr.bf16.mxu0 0
        %1782 = vmatmul.mubr.bf16.gmra.mxu0 %v1708
        %v1783 = vpop.f32.mrf.mxu0
        %v1784 = vadd.f32 %v1620, %v1783
        %v1785 = vpop.f32.mrf.mxu0
        %v1786 = vpop.f32.mrf.mxu0
        %v1787 = vadd.f32 %v1623, %v1786
        %v1788 = vpop.f32.mrf.mxu0
        %1789 = vmatprep.mubr.bf16.mxu0 0
        %1790 = vmatmul.mubr.bf16.gmra.mxu0 %v1711
        %v1791 = vpop.f32.mrf.mxu0
        %v1792 = vadd.f32 %v1628, %v1791
        %v1793 = vpop.f32.mrf.mxu0
        %v1794 = vpop.f32.mrf.mxu0
        %v1795 = vadd.f32 %v1631, %v1794
        %v1796 = vpop.f32.mrf.mxu0
        %1797 = vmatprep.mubr.bf16.mxu0 0
        %1798 = vmatmul.mubr.bf16.gmra.mxu0 %v1714
        %v1799 = vpop.f32.mrf.mxu0
        %v1800 = vadd.f32 %v1636, %v1799
        %v1801 = vpop.f32.mrf.mxu0
        %v1802 = vpop.f32.mrf.mxu0
        %v1803 = vadd.f32 %v1639, %v1802
        %v1804 = vpop.f32.mrf.mxu0
        %1805 = vmatprep.mubr.bf16.mxu0 0
        %1806 = vmatmul.mubr.bf16.gmra.mxu0 %v1717
        %v1807 = vpop.f32.mrf.mxu0
        %v1808 = vadd.f32 %v1644, %v1807
        %v1809 = vpop.f32.mrf.mxu0
        %v1810 = vpop.f32.mrf.mxu0
        %v1811 = vadd.f32 %v1647, %v1810
        %v1812 = vpop.f32.mrf.mxu0
        %1813 = vmatprep.mubr.bf16.mxu0 0
        %1814 = vmatmul.mubr.bf16.gmra.mxu0 %v1720
        %v1815 = vpop.f32.mrf.mxu0
        %v1816 = vadd.f32 %v1652, %v1815
        %v1817 = vpop.f32.mrf.mxu0
        %v1818 = vpop.f32.mrf.mxu0
        %v1819 = vadd.f32 %v1655, %v1818
        %v1820 = vpop.f32.mrf.mxu0
        %1821 = vdwg.mxu0
        %v1822 = vld [vmem:[#allocation2] sm:$0xe]
        %v1823 = vld [vmem:[#allocation2 + $0xc] sm:$0xe]
        %v1824 = vld [vmem:[#allocation2 + $0x18] sm:$0xe]
        %v1825 = vld [vmem:[#allocation2 + $0x24] sm:$0xe]
        %v1826 = vld [vmem:[#allocation2 + $0x30] sm:$0xe]
        %v1827 = vld [vmem:[#allocation2 + $0x3c] sm:$0xe]
        %v1828 = vld [vmem:[#allocation2 + $0x48] sm:$0xe]
        %v1829 = vld [vmem:[#allocation2 + $0x54] sm:$0xe]
        %vm1846 = vcmask 1042432
        %vm1847 = vcmask 1046532
        %vm1848 = vmor %vm1846, %vm1847
        %v1849 = vrot.slane %v1822, 5
        %v1850 = vrot.slane %v1849, 4
        %v1851 = vrot.slane %v1289, 5
        %v1852 = vsel %vm1848, %v1850, %v1851
        %v1853 = vrot.slane %v1851, 4
        %v1854 = vrot.slane %v1305, 5
        %v1855 = vsel %vm1848, %v1853, %v1854
        %v1856 = vrot.slane %v1823, 5
        %v1857 = vrot.slane %v1856, 4
        %v1858 = vrot.slane %v1291, 5
        %v1859 = vsel %vm1848, %v1857, %v1858
        %v1860 = vrot.slane %v1858, 4
        %v1861 = vrot.slane %v1306, 5
        %v1862 = vsel %vm1848, %v1860, %v1861
        %v1863 = vrot.slane %v1824, 5
        %v1864 = vrot.slane %v1863, 4
        %v1865 = vrot.slane %v1293, 5
        %v1866 = vsel %vm1848, %v1864, %v1865
        %v1867 = vrot.slane %v1865, 4
        %v1868 = vrot.slane %v1307, 5
        %v1869 = vsel %vm1848, %v1867, %v1868
        %v1870 = vrot.slane %v1825, 5
        %v1871 = vrot.slane %v1870, 4
        %v1872 = vrot.slane %v1295, 5
        %v1873 = vsel %vm1848, %v1871, %v1872
        %v1874 = vrot.slane %v1872, 4
        %v1875 = vrot.slane %v1308, 5
        %v1876 = vsel %vm1848, %v1874, %v1875
        %v1877 = vrot.slane %v1826, 5
        %v1878 = vrot.slane %v1877, 4
        %v1879 = vrot.slane %v1297, 5
        %v1880 = vsel %vm1848, %v1878, %v1879
        %v1881 = vrot.slane %v1879, 4
        %v1882 = vrot.slane %v1309, 5
        %v1883 = vsel %vm1848, %v1881, %v1882
        %v1884 = vrot.slane %v1827, 5
        %v1885 = vrot.slane %v1884, 4
        %v1886 = vrot.slane %v1299, 5
        %v1887 = vsel %vm1848, %v1885, %v1886
        %v1888 = vrot.slane %v1886, 4
        %v1889 = vrot.slane %v1310, 5
        %v1890 = vsel %vm1848, %v1888, %v1889
        %v1891 = vrot.slane %v1828, 5
        %v1892 = vrot.slane %v1891, 4
        %v1893 = vrot.slane %v1301, 5
        %v1894 = vsel %vm1848, %v1892, %v1893
        %v1895 = vrot.slane %v1893, 4
        %v1896 = vrot.slane %v1311, 5
        %v1897 = vsel %vm1848, %v1895, %v1896
        %v1898 = vrot.slane %v1829, 5
        %v1899 = vrot.slane %v1898, 4
        %v1900 = vrot.slane %v1303, 5
        %v1901 = vsel %vm1848, %v1899, %v1900
        %v1902 = vrot.slane %v1900, 4
        %v1903 = vrot.slane %v1312, 5
        %v1904 = vsel %vm1848, %v1902, %v1903
        %s1905 = scalar_lea.vmem [#allocation6], 8
        %v1906 = vld [vmem:[%s1905] sm:$0xf]
        %v1907 = vunpack.c.l.b16 %v1852
        %v1908 = vunpack.c.l.b16 %v1855
        %v1909 = vunpack.c.l.b16 %v1859
        %v1910 = vunpack.c.l.b16 %v1862
        %v1911 = vunpack.c.l.b16 %v1866
        %v1912 = vunpack.c.l.b16 %v1869
        %v1913 = vunpack.c.l.b16 %v1873
        %v1914 = vunpack.c.l.b16 %v1876
        %v1915 = vunpack.c.l.b16 %v1880
        %v1916 = vunpack.c.l.b16 %v1883
        %v1917 = vunpack.c.l.b16 %v1887
        %v1918 = vunpack.c.l.b16 %v1890
        %v1919 = vunpack.c.l.b16 %v1894
        %v1920 = vunpack.c.l.b16 %v1897
        %v1921 = vunpack.c.l.b16 %v1901
        %v1922 = vunpack.c.l.b16 %v1904
        %v1923 = vpack.c.b16 %v1908, %v1907
        %v1924 = vpack.c.b16 %v1910, %v1909
        %v1925 = vpack.c.b16 %v1912, %v1911
        %v1926 = vpack.c.b16 %v1914, %v1913
        %v1927 = vpack.c.b16 %v1916, %v1915
        %v1928 = vpack.c.b16 %v1918, %v1917
        %v1929 = vpack.c.b16 %v1920, %v1919
        %v1930 = vpack.c.b16 %v1922, %v1921
        %v1932 = vsel %vm293, %v1923, 0
        %v1935 = vsel %vm293, %v1924, 0
        %v1938 = vsel %vm293, %v1925, 0
        %v1941 = vsel %vm293, %v1926, 0
        %v1944 = vsel %vm293, %v1927, 0
        %v1947 = vsel %vm293, %v1928, 0
        %v1950 = vsel %vm293, %v1929, 0
        %v1953 = vsel %vm293, %v1930, 0
        %v1956 = vsel %vm300, %v1906, 0
        %1958 = vmatprep.subr.bf16.mxu0 0
        %1959 = vmatpush1.bf16.msra.mxu0 0
        %1960 = vmatprep.subr.bf16.mxu0 0
        %1961 = vmatpush1.bf16.msra.mxu0 0
        %1962 = vmatprep.subr.bf16.mxu0 0
        %1963 = vmatpush1.bf16.msra.mxu0 0
        %1964 = vmatprep.subr.bf16.mxu0 0
        %1965 = vmatpush1.bf16.msra.mxu0 0
        %1966 = vmatprep.subr.bf16.mxu0 0
        %1967 = vmatpush1.bf16.msra.mxu0 0
        %1968 = vmatprep.subr.bf16.mxu0 0
        %1969 = vmatpush1.bf16.msra.mxu0 0
        %1970 = vmatprep.subr.bf16.mxu0 0
        %1971 = vmatpush1.bf16.msra.mxu0 0
        %1972 = vmatprep.subr.bf16.mxu0 0
        %1973 = vmatpush1.bf16.msra.mxu0 %v1956
        %1974 = vmatprep.subr.bf16.mxu0 0
        %1975 = vmatpush2.bf16.msra.mxu0 0
        %1976 = vmatprep.subr.bf16.mxu0 0
        %1977 = vmatpush2.bf16.msra.mxu0 0
        %1978 = vmatprep.subr.bf16.mxu0 0
        %1979 = vmatpush2.bf16.msra.mxu0 0
        %1980 = vmatprep.subr.bf16.mxu0 0
        %1981 = vmatpush2.bf16.msra.mxu0 0
        %1982 = vmatprep.subr.bf16.mxu0 0
        %1983 = vmatpush2.bf16.msra.mxu0 0
        %1984 = vmatprep.subr.bf16.mxu0 0
        %1985 = vmatpush2.bf16.msra.mxu0 0
        %1986 = vmatprep.subr.bf16.mxu0 0
        %1987 = vmatpush2.bf16.msra.mxu0 0
        %1988 = vmatprep.subr.bf16.mxu0 0
        %1989 = vmatpush2.bf16.msra.mxu0 0
        %1990 = vmatprep.mubr.bf16.mxu0 0
        %1991 = vmatmul.mubr.bf16.gmra.mxu0 %v1932
        %v1992 = vpop.f32.mrf.mxu0
        %v1993 = vadd.f32 0.0, %v1992
        %v1994 = vpop.f32.mrf.mxu0
        %v1995 = vpop.f32.mrf.mxu0
        %v1996 = vadd.f32 0.0, %v1995
        %v1997 = vpop.f32.mrf.mxu0
        %1998 = vmatprep.mubr.bf16.mxu0 0
        %1999 = vmatmul.mubr.bf16.gmra.mxu0 %v1935
        %v2000 = vpop.f32.mrf.mxu0
        %v2001 = vadd.f32 0.0, %v2000
        %v2002 = vpop.f32.mrf.mxu0
        %v2003 = vpop.f32.mrf.mxu0
        %v2004 = vadd.f32 0.0, %v2003
        %v2005 = vpop.f32.mrf.mxu0
        %2006 = vmatprep.mubr.bf16.mxu0 0
        %2007 = vmatmul.mubr.bf16.gmra.mxu0 %v1938
        %v2008 = vpop.f32.mrf.mxu0
        %v2009 = vadd.f32 0.0, %v2008
        %v2010 = vpop.f32.mrf.mxu0
        %v2011 = vpop.f32.mrf.mxu0
        %v2012 = vadd.f32 0.0, %v2011
        %v2013 = vpop.f32.mrf.mxu0
        %2014 = vmatprep.mubr.bf16.mxu0 0
        %2015 = vmatmul.mubr.bf16.gmra.mxu0 %v1941
        %v2016 = vpop.f32.mrf.mxu0
        %v2017 = vadd.f32 0.0, %v2016
        %v2018 = vpop.f32.mrf.mxu0
        %v2019 = vpop.f32.mrf.mxu0
        %v2020 = vadd.f32 0.0, %v2019
        %v2021 = vpop.f32.mrf.mxu0
        %2022 = vmatprep.mubr.bf16.mxu0 0
        %2023 = vmatmul.mubr.bf16.gmra.mxu0 %v1944
        %v2024 = vpop.f32.mrf.mxu0
        %v2025 = vadd.f32 0.0, %v2024
        %v2026 = vpop.f32.mrf.mxu0
        %v2027 = vpop.f32.mrf.mxu0
        %v2028 = vadd.f32 0.0, %v2027
        %v2029 = vpop.f32.mrf.mxu0
        %2030 = vmatprep.mubr.bf16.mxu0 0
        %2031 = vmatmul.mubr.bf16.gmra.mxu0 %v1947
        %v2032 = vpop.f32.mrf.mxu0
        %v2033 = vadd.f32 0.0, %v2032
        %v2034 = vpop.f32.mrf.mxu0
        %v2035 = vpop.f32.mrf.mxu0
        %v2036 = vadd.f32 0.0, %v2035
        %v2037 = vpop.f32.mrf.mxu0
        %2038 = vmatprep.mubr.bf16.mxu0 0
        %2039 = vmatmul.mubr.bf16.gmra.mxu0 %v1950
        %v2040 = vpop.f32.mrf.mxu0
        %v2041 = vadd.f32 0.0, %v2040
        %v2042 = vpop.f32.mrf.mxu0
        %v2043 = vpop.f32.mrf.mxu0
        %v2044 = vadd.f32 0.0, %v2043
        %v2045 = vpop.f32.mrf.mxu0
        %2046 = vmatprep.mubr.bf16.mxu0 0
        %2047 = vmatmul.mubr.bf16.gmra.mxu0 %v1953
        %v2048 = vpop.f32.mrf.mxu0
        %v2049 = vadd.f32 0.0, %v2048
        %v2050 = vpop.f32.mrf.mxu0
        %v2051 = vpop.f32.mrf.mxu0
        %v2052 = vadd.f32 0.0, %v2051
        %v2053 = vpop.f32.mrf.mxu0
        %2054 = vdwg.mxu0
        %v2055 = vadd.f32 %v1760, %v1993
        %v2056 = vadd.f32 %v1763, %v1996
        %v2057 = vadd.f32 %v1768, %v2001
        %v2058 = vadd.f32 %v1771, %v2004
        %v2059 = vadd.f32 %v1776, %v2009
        %v2060 = vadd.f32 %v1779, %v2012
        %v2061 = vadd.f32 %v1784, %v2017
        %v2062 = vadd.f32 %v1787, %v2020
        %v2063 = vadd.f32 %v1792, %v2025
        %v2064 = vadd.f32 %v1795, %v2028
        %v2065 = vadd.f32 %v1800, %v2033
        %v2066 = vadd.f32 %v1803, %v2036
        %v2067 = vadd.f32 %v1808, %v2041
        %v2068 = vadd.f32 %v1811, %v2044
        %v2069 = vadd.f32 %v1816, %v2049
        %v2070 = vadd.f32 %v1819, %v2052
        %v2071 = vld [vmem:[%s468] sm:$0xf]
        %v2072 = vld [vmem:[%s468 + $0x4] sm:$0xf]
        %v2073 = vld [vmem:[%s468 + $0xc] sm:$0xf]
        %v2074 = vld [vmem:[%s468 + $0x10] sm:$0xf]
        %v2075 = vld [vmem:[%s468 + $0x18] sm:$0xf]
        %v2076 = vld [vmem:[%s468 + $0x1c] sm:$0xf]
        %v2077 = vld [vmem:[%s468 + $0x24] sm:$0xf]
        %v2078 = vld [vmem:[%s468 + $0x28] sm:$0xf]
        %v2079 = vld [vmem:[%s468 + $0x30] sm:$0xf]
        %v2080 = vld [vmem:[%s468 + $0x34] sm:$0xf]
        %v2081 = vld [vmem:[%s468 + $0x3c] sm:$0xf]
        %v2082 = vld [vmem:[%s468 + $0x40] sm:$0xf]
        %v2083 = vld [vmem:[%s468 + $0x48] sm:$0xf]
        %v2084 = vld [vmem:[%s468 + $0x4c] sm:$0xf]
        %v2085 = vld [vmem:[%s468 + $0x54] sm:$0xf]
        %v2086 = vld [vmem:[%s468 + $0x58] sm:$0xf]
        %s2087 = scalar_lea.vmem [#allocation6], 12
        %v2088 = vld [vmem:[%s2087] sm:$0xf]
        %v2105 = vunpack.c.l.b16 %v2071
        %v2106 = vunpack.c.l.b16 %v2072
        %v2107 = vunpack.c.l.b16 %v2073
        %v2108 = vunpack.c.l.b16 %v2074
        %v2109 = vunpack.c.l.b16 %v2075
        %v2110 = vunpack.c.l.b16 %v2076
        %v2111 = vunpack.c.l.b16 %v2077
        %v2112 = vunpack.c.l.b16 %v2078
        %v2113 = vunpack.c.l.b16 %v2079
        %v2114 = vunpack.c.l.b16 %v2080
        %v2115 = vunpack.c.l.b16 %v2081
        %v2116 = vunpack.c.l.b16 %v2082
        %v2117 = vunpack.c.l.b16 %v2083
        %v2118 = vunpack.c.l.b16 %v2084
        %v2119 = vunpack.c.l.b16 %v2085
        %v2120 = vunpack.c.l.b16 %v2086
        %v2121 = vpack.c.b16 %v2106, %v2105
        %v2122 = vpack.c.b16 %v2108, %v2107
        %v2123 = vpack.c.b16 %v2110, %v2109
        %v2124 = vpack.c.b16 %v2112, %v2111
        %v2125 = vpack.c.b16 %v2114, %v2113
        %v2126 = vpack.c.b16 %v2116, %v2115
        %v2127 = vpack.c.b16 %v2118, %v2117
        %v2128 = vpack.c.b16 %v2120, %v2119
        %v2130 = vsel %vm293, %v2121, 0
        %v2133 = vsel %vm293, %v2122, 0
        %v2136 = vsel %vm293, %v2123, 0
        %v2139 = vsel %vm293, %v2124, 0
        %v2142 = vsel %vm293, %v2125, 0
        %v2145 = vsel %vm293, %v2126, 0
        %v2148 = vsel %vm293, %v2127, 0
        %v2151 = vsel %vm293, %v2128, 0
        %v2154 = vsel %vm300, %v2088, 0
        %2156 = vmatprep.subr.bf16.mxu0 0
        %2157 = vmatpush1.bf16.msra.mxu0 0
        %2158 = vmatprep.subr.bf16.mxu0 0
        %2159 = vmatpush1.bf16.msra.mxu0 0
        %2160 = vmatprep.subr.bf16.mxu0 0
        %2161 = vmatpush1.bf16.msra.mxu0 0
        %2162 = vmatprep.subr.bf16.mxu0 0
        %2163 = vmatpush1.bf16.msra.mxu0 0
        %2164 = vmatprep.subr.bf16.mxu0 0
        %2165 = vmatpush1.bf16.msra.mxu0 0
        %2166 = vmatprep.subr.bf16.mxu0 0
        %2167 = vmatpush1.bf16.msra.mxu0 0
        %2168 = vmatprep.subr.bf16.mxu0 0
        %2169 = vmatpush1.bf16.msra.mxu0 0
        %2170 = vmatprep.subr.bf16.mxu0 0
        %2171 = vmatpush1.bf16.msra.mxu0 %v2154
        %2172 = vmatprep.subr.bf16.mxu0 0
        %2173 = vmatpush2.bf16.msra.mxu0 0
        %2174 = vmatprep.subr.bf16.mxu0 0
        %2175 = vmatpush2.bf16.msra.mxu0 0
        %2176 = vmatprep.subr.bf16.mxu0 0
        %2177 = vmatpush2.bf16.msra.mxu0 0
        %2178 = vmatprep.subr.bf16.mxu0 0
        %2179 = vmatpush2.bf16.msra.mxu0 0
        %2180 = vmatprep.subr.bf16.mxu0 0
        %2181 = vmatpush2.bf16.msra.mxu0 0
        %2182 = vmatprep.subr.bf16.mxu0 0
        %2183 = vmatpush2.bf16.msra.mxu0 0
        %2184 = vmatprep.subr.bf16.mxu0 0
        %2185 = vmatpush2.bf16.msra.mxu0 0
        %2186 = vmatprep.subr.bf16.mxu0 0
        %2187 = vmatpush2.bf16.msra.mxu0 0
        %2188 = vmatprep.mubr.bf16.mxu0 0
        %2189 = vmatmul.mubr.bf16.gmra.mxu0 %v2130
        %v2190 = vpop.f32.mrf.mxu0
        %v2191 = vadd.f32 0.0, %v2190
        %v2192 = vpop.f32.mrf.mxu0
        %v2193 = vpop.f32.mrf.mxu0
        %v2194 = vadd.f32 0.0, %v2193
        %v2195 = vpop.f32.mrf.mxu0
        %2196 = vmatprep.mubr.bf16.mxu0 0
        %2197 = vmatmul.mubr.bf16.gmra.mxu0 %v2133
        %v2198 = vpop.f32.mrf.mxu0
        %v2199 = vadd.f32 0.0, %v2198
        %v2200 = vpop.f32.mrf.mxu0
        %v2201 = vpop.f32.mrf.mxu0
        %v2202 = vadd.f32 0.0, %v2201
        %v2203 = vpop.f32.mrf.mxu0
        %2204 = vmatprep.mubr.bf16.mxu0 0
        %2205 = vmatmul.mubr.bf16.gmra.mxu0 %v2136
        %v2206 = vpop.f32.mrf.mxu0
        %v2207 = vadd.f32 0.0, %v2206
        %v2208 = vpop.f32.mrf.mxu0
        %v2209 = vpop.f32.mrf.mxu0
        %v2210 = vadd.f32 0.0, %v2209
        %v2211 = vpop.f32.mrf.mxu0
        %2212 = vmatprep.mubr.bf16.mxu0 0
        %2213 = vmatmul.mubr.bf16.gmra.mxu0 %v2139
        %v2214 = vpop.f32.mrf.mxu0
        %v2215 = vadd.f32 0.0, %v2214
        %v2216 = vpop.f32.mrf.mxu0
        %v2217 = vpop.f32.mrf.mxu0
        %v2218 = vadd.f32 0.0, %v2217
        %v2219 = vpop.f32.mrf.mxu0
        %2220 = vmatprep.mubr.bf16.mxu0 0
        %2221 = vmatmul.mubr.bf16.gmra.mxu0 %v2142
        %v2222 = vpop.f32.mrf.mxu0
        %v2223 = vadd.f32 0.0, %v2222
        %v2224 = vpop.f32.mrf.mxu0
        %v2225 = vpop.f32.mrf.mxu0
        %v2226 = vadd.f32 0.0, %v2225
        %v2227 = vpop.f32.mrf.mxu0
        %2228 = vmatprep.mubr.bf16.mxu0 0
        %2229 = vmatmul.mubr.bf16.gmra.mxu0 %v2145
        %v2230 = vpop.f32.mrf.mxu0
        %v2231 = vadd.f32 0.0, %v2230
        %v2232 = vpop.f32.mrf.mxu0
        %v2233 = vpop.f32.mrf.mxu0
        %v2234 = vadd.f32 0.0, %v2233
        %v2235 = vpop.f32.mrf.mxu0
        %2236 = vmatprep.mubr.bf16.mxu0 0
        %2237 = vmatmul.mubr.bf16.gmra.mxu0 %v2148
        %v2238 = vpop.f32.mrf.mxu0
        %v2239 = vadd.f32 0.0, %v2238
        %v2240 = vpop.f32.mrf.mxu0
        %v2241 = vpop.f32.mrf.mxu0
        %v2242 = vadd.f32 0.0, %v2241
        %v2243 = vpop.f32.mrf.mxu0
        %2244 = vmatprep.mubr.bf16.mxu0 0
        %2245 = vmatmul.mubr.bf16.gmra.mxu0 %v2151
        %v2246 = vpop.f32.mrf.mxu0
        %v2247 = vadd.f32 0.0, %v2246
        %v2248 = vpop.f32.mrf.mxu0
        %v2249 = vpop.f32.mrf.mxu0
        %v2250 = vadd.f32 0.0, %v2249
        %v2251 = vpop.f32.mrf.mxu0
        %2252 = vdwg.mxu0
        %v2253 = vadd.f32 %v2055, %v2191
        %v2254 = vadd.f32 %v2056, %v2194
        %v2255 = vadd.f32 %v2057, %v2199
        %v2256 = vadd.f32 %v2058, %v2202
        %v2257 = vadd.f32 %v2059, %v2207
        %v2258 = vadd.f32 %v2060, %v2210
        %v2259 = vadd.f32 %v2061, %v2215
        %v2260 = vadd.f32 %v2062, %v2218
        %v2261 = vadd.f32 %v2063, %v2223
        %v2262 = vadd.f32 %v2064, %v2226
        %v2263 = vadd.f32 %v2065, %v2231
        %v2264 = vadd.f32 %v2066, %v2234
        %v2265 = vadd.f32 %v2067, %v2239
        %v2266 = vadd.f32 %v2068, %v2242
        %v2267 = vadd.f32 %v2069, %v2247
        %v2268 = vadd.f32 %v2070, %v2250
        %v2269 = vld [vmem:[%s468] sm:$0xf]
        %v2270 = vld [vmem:[%s468 + $0x4] sm:$0xf]
        %v2271 = vld [vmem:[%s468 + $0x8] sm:$0x1]
        %v2272 = vld [vmem:[%s468 + $0xc] sm:$0xf]
        %v2273 = vld [vmem:[%s468 + $0x10] sm:$0xf]
        %v2274 = vld [vmem:[%s468 + $0x14] sm:$0x1]
        %v2275 = vld [vmem:[%s468 + $0x18] sm:$0xf]
        %v2276 = vld [vmem:[%s468 + $0x1c] sm:$0xf]
        %v2277 = vld [vmem:[%s468 + $0x20] sm:$0x1]
        %v2278 = vld [vmem:[%s468 + $0x24] sm:$0xf]
        %v2279 = vld [vmem:[%s468 + $0x28] sm:$0xf]
        %v2280 = vld [vmem:[%s468 + $0x2c] sm:$0x1]
        %v2281 = vld [vmem:[%s468 + $0x30] sm:$0xf]
        %v2282 = vld [vmem:[%s468 + $0x34] sm:$0xf]
        %v2283 = vld [vmem:[%s468 + $0x38] sm:$0x1]
        %v2284 = vld [vmem:[%s468 + $0x3c] sm:$0xf]
        %v2285 = vld [vmem:[%s468 + $0x40] sm:$0xf]
        %v2286 = vld [vmem:[%s468 + $0x44] sm:$0x1]
        %v2287 = vld [vmem:[%s468 + $0x48] sm:$0xf]
        %v2288 = vld [vmem:[%s468 + $0x4c] sm:$0xf]
        %v2289 = vld [vmem:[%s468 + $0x50] sm:$0x1]
        %v2290 = vld [vmem:[%s468 + $0x54] sm:$0xf]
        %v2291 = vld [vmem:[%s468 + $0x58] sm:$0xf]
        %v2292 = vld [vmem:[%s468 + $0x5c] sm:$0x1]
        %v2294 = vshrl.u32 %v2269, 16
        %v2296 = vrot.slane %v2294, 4
        %v2297 = vshll.u32 %v2269, 16
        %v2299 = vrot.slane %v2297, 5
        %v2300 = vor.u32 %v2296, %v2299
        %v2301 = vrot.slane %v2300, 4
        %v2303 = vshll.u32 %v2270, 16
        %v2305 = vrot.slane %v2303, 5
        %v2306 = vsel %vm1315, %v2301, %v2305
        %v2307 = vshrl.u32 %v2270, 16
        %v2309 = vrot.slane %v2307, 4
        %v2310 = vor.u32 %v2309, %v2305
        %v2311 = vrot.slane %v2310, 4
        %v2313 = vshll.u32 %v2271, 16
        %v2315 = vrot.slane %v2313, 5
        %v2316 = vsel %vm1315, %v2311, %v2315
        %v2318 = vshrl.u32 %v2272, 16
        %v2320 = vrot.slane %v2318, 4
        %v2321 = vshll.u32 %v2272, 16
        %v2323 = vrot.slane %v2321, 5
        %v2324 = vor.u32 %v2320, %v2323
        %v2325 = vrot.slane %v2324, 4
        %v2327 = vshll.u32 %v2273, 16
        %v2329 = vrot.slane %v2327, 5
        %v2330 = vsel %vm1315, %v2325, %v2329
        %v2331 = vshrl.u32 %v2273, 16
        %v2333 = vrot.slane %v2331, 4
        %v2334 = vor.u32 %v2333, %v2329
        %v2335 = vrot.slane %v2334, 4
        %v2337 = vshll.u32 %v2274, 16
        %v2339 = vrot.slane %v2337, 5
        %v2340 = vsel %vm1315, %v2335, %v2339
        %v2342 = vshrl.u32 %v2275, 16
        %v2344 = vrot.slane %v2342, 4
        %v2345 = vshll.u32 %v2275, 16
        %v2347 = vrot.slane %v2345, 5
        %v2348 = vor.u32 %v2344, %v2347
        %v2349 = vrot.slane %v2348, 4
        %v2351 = vshll.u32 %v2276, 16
        %v2353 = vrot.slane %v2351, 5
        %v2354 = vsel %vm1315, %v2349, %v2353
        %v2355 = vshrl.u32 %v2276, 16
        %v2357 = vrot.slane %v2355, 4
        %v2358 = vor.u32 %v2357, %v2353
        %v2359 = vrot.slane %v2358, 4
        %v2361 = vshll.u32 %v2277, 16
        %v2363 = vrot.slane %v2361, 5
        %v2364 = vsel %vm1315, %v2359, %v2363
        %v2366 = vshrl.u32 %v2278, 16
        %v2368 = vrot.slane %v2366, 4
        %v2369 = vshll.u32 %v2278, 16
        %v2371 = vrot.slane %v2369, 5
        %v2372 = vor.u32 %v2368, %v2371
        %v2373 = vrot.slane %v2372, 4
        %v2375 = vshll.u32 %v2279, 16
        %v2377 = vrot.slane %v2375, 5
        %v2378 = vsel %vm1315, %v2373, %v2377
        %v2379 = vshrl.u32 %v2279, 16
        %v2381 = vrot.slane %v2379, 4
        %v2382 = vor.u32 %v2381, %v2377
        %v2383 = vrot.slane %v2382, 4
        %v2385 = vshll.u32 %v2280, 16
        %v2387 = vrot.slane %v2385, 5
        %v2388 = vsel %vm1315, %v2383, %v2387
        %v2390 = vshrl.u32 %v2281, 16
        %v2392 = vrot.slane %v2390, 4
        %v2393 = vshll.u32 %v2281, 16
        %v2395 = vrot.slane %v2393, 5
        %v2396 = vor.u32 %v2392, %v2395
        %v2397 = vrot.slane %v2396, 4
        %v2399 = vshll.u32 %v2282, 16
        %v2401 = vrot.slane %v2399, 5
        %v2402 = vsel %vm1315, %v2397, %v2401
        %v2403 = vshrl.u32 %v2282, 16
        %v2405 = vrot.slane %v2403, 4
        %v2406 = vor.u32 %v2405, %v2401
        %v2407 = vrot.slane %v2406, 4
        %v2409 = vshll.u32 %v2283, 16
        %v2411 = vrot.slane %v2409, 5
        %v2412 = vsel %vm1315, %v2407, %v2411
        %v2414 = vshrl.u32 %v2284, 16
        %v2416 = vrot.slane %v2414, 4
        %v2417 = vshll.u32 %v2284, 16
        %v2419 = vrot.slane %v2417, 5
        %v2420 = vor.u32 %v2416, %v2419
        %v2421 = vrot.slane %v2420, 4
        %v2423 = vshll.u32 %v2285, 16
        %v2425 = vrot.slane %v2423, 5
        %v2426 = vsel %vm1315, %v2421, %v2425
        %v2427 = vshrl.u32 %v2285, 16
        %v2429 = vrot.slane %v2427, 4
        %v2430 = vor.u32 %v2429, %v2425
        %v2431 = vrot.slane %v2430, 4
        %v2433 = vshll.u32 %v2286, 16
        %v2435 = vrot.slane %v2433, 5
        %v2436 = vsel %vm1315, %v2431, %v2435
        %v2438 = vshrl.u32 %v2287, 16
        %v2440 = vrot.slane %v2438, 4
        %v2441 = vshll.u32 %v2287, 16
        %v2443 = vrot.slane %v2441, 5
        %v2444 = vor.u32 %v2440, %v2443
        %v2445 = vrot.slane %v2444, 4
        %v2447 = vshll.u32 %v2288, 16
        %v2449 = vrot.slane %v2447, 5
        %v2450 = vsel %vm1315, %v2445, %v2449
        %v2451 = vshrl.u32 %v2288, 16
        %v2453 = vrot.slane %v2451, 4
        %v2454 = vor.u32 %v2453, %v2449
        %v2455 = vrot.slane %v2454, 4
        %v2457 = vshll.u32 %v2289, 16
        %v2459 = vrot.slane %v2457, 5
        %v2460 = vsel %vm1315, %v2455, %v2459
        %v2462 = vshrl.u32 %v2290, 16
        %v2464 = vrot.slane %v2462, 4
        %v2465 = vshll.u32 %v2290, 16
        %v2467 = vrot.slane %v2465, 5
        %v2468 = vor.u32 %v2464, %v2467
        %v2469 = vrot.slane %v2468, 4
        %v2471 = vshll.u32 %v2291, 16
        %v2473 = vrot.slane %v2471, 5
        %v2474 = vsel %vm1315, %v2469, %v2473
        %v2475 = vshrl.u32 %v2291, 16
        %v2477 = vrot.slane %v2475, 4
        %v2478 = vor.u32 %v2477, %v2473
        %v2479 = vrot.slane %v2478, 4
        %v2481 = vshll.u32 %v2292, 16
        %v2483 = vrot.slane %v2481, 5
        %v2484 = vsel %vm1315, %v2479, %v2483
        %s2485 = scalar_lea.vmem [#allocation6], 16
        %v2486 = vld [vmem:[%s2485] sm:$0xf]
        %v2487 = vunpack.c.l.b16 %v2306
        %v2488 = vunpack.c.l.b16 %v2316
        %v2489 = vunpack.c.l.b16 %v2330
        %v2490 = vunpack.c.l.b16 %v2340
        %v2491 = vunpack.c.l.b16 %v2354
        %v2492 = vunpack.c.l.b16 %v2364
        %v2493 = vunpack.c.l.b16 %v2378
        %v2494 = vunpack.c.l.b16 %v2388
        %v2495 = vunpack.c.l.b16 %v2402
        %v2496 = vunpack.c.l.b16 %v2412
        %v2497 = vunpack.c.l.b16 %v2426
        %v2498 = vunpack.c.l.b16 %v2436
        %v2499 = vunpack.c.l.b16 %v2450
        %v2500 = vunpack.c.l.b16 %v2460
        %v2501 = vunpack.c.l.b16 %v2474
        %v2502 = vunpack.c.l.b16 %v2484
        %v2503 = vpack.c.b16 %v2488, %v2487
        %v2504 = vpack.c.b16 %v2490, %v2489
        %v2505 = vpack.c.b16 %v2492, %v2491
        %v2506 = vpack.c.b16 %v2494, %v2493
        %v2507 = vpack.c.b16 %v2496, %v2495
        %v2508 = vpack.c.b16 %v2498, %v2497
        %v2509 = vpack.c.b16 %v2500, %v2499
        %v2510 = vpack.c.b16 %v2502, %v2501
        %v2512 = vsel %vm293, %v2503, 0
        %v2515 = vsel %vm293, %v2504, 0
        %v2518 = vsel %vm293, %v2505, 0
        %v2521 = vsel %vm293, %v2506, 0
        %v2524 = vsel %vm293, %v2507, 0
        %v2527 = vsel %vm293, %v2508, 0
        %v2530 = vsel %vm293, %v2509, 0
        %v2533 = vsel %vm293, %v2510, 0
        %v2536 = vsel %vm300, %v2486, 0
        %2538 = vmatprep.subr.bf16.mxu0 0
        %2539 = vmatpush1.bf16.msra.mxu0 0
        %2540 = vmatprep.subr.bf16.mxu0 0
        %2541 = vmatpush1.bf16.msra.mxu0 0
        %2542 = vmatprep.subr.bf16.mxu0 0
        %2543 = vmatpush1.bf16.msra.mxu0 0
        %2544 = vmatprep.subr.bf16.mxu0 0
        %2545 = vmatpush1.bf16.msra.mxu0 0
        %2546 = vmatprep.subr.bf16.mxu0 0
        %2547 = vmatpush1.bf16.msra.mxu0 0
        %2548 = vmatprep.subr.bf16.mxu0 0
        %2549 = vmatpush1.bf16.msra.mxu0 0
        %2550 = vmatprep.subr.bf16.mxu0 0
        %2551 = vmatpush1.bf16.msra.mxu0 0
        %2552 = vmatprep.subr.bf16.mxu0 0
        %2553 = vmatpush1.bf16.msra.mxu0 %v2536
        %2554 = vmatprep.subr.bf16.mxu0 0
        %2555 = vmatpush2.bf16.msra.mxu0 0
        %2556 = vmatprep.subr.bf16.mxu0 0
        %2557 = vmatpush2.bf16.msra.mxu0 0
        %2558 = vmatprep.subr.bf16.mxu0 0
        %2559 = vmatpush2.bf16.msra.mxu0 0
        %2560 = vmatprep.subr.bf16.mxu0 0
        %2561 = vmatpush2.bf16.msra.mxu0 0
        %2562 = vmatprep.subr.bf16.mxu0 0
        %2563 = vmatpush2.bf16.msra.mxu0 0
        %2564 = vmatprep.subr.bf16.mxu0 0
        %2565 = vmatpush2.bf16.msra.mxu0 0
        %2566 = vmatprep.subr.bf16.mxu0 0
        %2567 = vmatpush2.bf16.msra.mxu0 0
        %2568 = vmatprep.subr.bf16.mxu0 0
        %2569 = vmatpush2.bf16.msra.mxu0 0
        %2570 = vmatprep.mubr.bf16.mxu0 0
        %2571 = vmatmul.mubr.bf16.gmra.mxu0 %v2512
        %v2572 = vpop.f32.mrf.mxu0
        %v2573 = vadd.f32 0.0, %v2572
        %v2574 = vpop.f32.mrf.mxu0
        %v2575 = vpop.f32.mrf.mxu0
        %v2576 = vadd.f32 0.0, %v2575
        %v2577 = vpop.f32.mrf.mxu0
        %2578 = vmatprep.mubr.bf16.mxu0 0
        %2579 = vmatmul.mubr.bf16.gmra.mxu0 %v2515
        %v2580 = vpop.f32.mrf.mxu0
        %v2581 = vadd.f32 0.0, %v2580
        %v2582 = vpop.f32.mrf.mxu0
        %v2583 = vpop.f32.mrf.mxu0
        %v2584 = vadd.f32 0.0, %v2583
        %v2585 = vpop.f32.mrf.mxu0
        %2586 = vmatprep.mubr.bf16.mxu0 0
        %2587 = vmatmul.mubr.bf16.gmra.mxu0 %v2518
        %v2588 = vpop.f32.mrf.mxu0
        %v2589 = vadd.f32 0.0, %v2588
        %v2590 = vpop.f32.mrf.mxu0
        %v2591 = vpop.f32.mrf.mxu0
        %v2592 = vadd.f32 0.0, %v2591
        %v2593 = vpop.f32.mrf.mxu0
        %2594 = vmatprep.mubr.bf16.mxu0 0
        %2595 = vmatmul.mubr.bf16.gmra.mxu0 %v2521
        %v2596 = vpop.f32.mrf.mxu0
        %v2597 = vadd.f32 0.0, %v2596
        %v2598 = vpop.f32.mrf.mxu0
        %v2599 = vpop.f32.mrf.mxu0
        %v2600 = vadd.f32 0.0, %v2599
        %v2601 = vpop.f32.mrf.mxu0
        %2602 = vmatprep.mubr.bf16.mxu0 0
        %2603 = vmatmul.mubr.bf16.gmra.mxu0 %v2524
        %v2604 = vpop.f32.mrf.mxu0
        %v2605 = vadd.f32 0.0, %v2604
        %v2606 = vpop.f32.mrf.mxu0
        %v2607 = vpop.f32.mrf.mxu0
        %v2608 = vadd.f32 0.0, %v2607
        %v2609 = vpop.f32.mrf.mxu0
        %2610 = vmatprep.mubr.bf16.mxu0 0
        %2611 = vmatmul.mubr.bf16.gmra.mxu0 %v2527
        %v2612 = vpop.f32.mrf.mxu0
        %v2613 = vadd.f32 0.0, %v2612
        %v2614 = vpop.f32.mrf.mxu0
        %v2615 = vpop.f32.mrf.mxu0
        %v2616 = vadd.f32 0.0, %v2615
        %v2617 = vpop.f32.mrf.mxu0
        %2618 = vmatprep.mubr.bf16.mxu0 0
        %2619 = vmatmul.mubr.bf16.gmra.mxu0 %v2530
        %v2620 = vpop.f32.mrf.mxu0
        %v2621 = vadd.f32 0.0, %v2620
        %v2622 = vpop.f32.mrf.mxu0
        %v2623 = vpop.f32.mrf.mxu0
        %v2624 = vadd.f32 0.0, %v2623
        %v2625 = vpop.f32.mrf.mxu0
        %2626 = vmatprep.mubr.bf16.mxu0 0
        %2627 = vmatmul.mubr.bf16.gmra.mxu0 %v2533
        %v2628 = vpop.f32.mrf.mxu0
        %v2629 = vadd.f32 0.0, %v2628
        %v2630 = vpop.f32.mrf.mxu0
        %v2631 = vpop.f32.mrf.mxu0
        %v2632 = vadd.f32 0.0, %v2631
        %v2633 = vpop.f32.mrf.mxu0
        %2634 = vdwg.mxu0
        %v2635 = vadd.f32 %v2253, %v2573
        %v2636 = vadd.f32 %v2254, %v2576
        %v2637 = vadd.f32 %v2255, %v2581
        %v2638 = vadd.f32 %v2256, %v2584
        %v2639 = vadd.f32 %v2257, %v2589
        %v2640 = vadd.f32 %v2258, %v2592
        %v2641 = vadd.f32 %v2259, %v2597
        %v2642 = vadd.f32 %v2260, %v2600
        %v2643 = vadd.f32 %v2261, %v2605
        %v2644 = vadd.f32 %v2262, %v2608
        %v2645 = vadd.f32 %v2263, %v2613
        %v2646 = vadd.f32 %v2264, %v2616
        %v2647 = vadd.f32 %v2265, %v2621
        %v2648 = vadd.f32 %v2266, %v2624
        %v2649 = vadd.f32 %v2267, %v2629
        %v2650 = vadd.f32 %v2268, %v2632
        %v2651 = vld [vmem:[%s468] sm:$0xe]
        %v2652 = vld [vmem:[%s468 + $0xc] sm:$0xe]
        %v2653 = vld [vmem:[%s468 + $0x18] sm:$0xe]
        %v2654 = vld [vmem:[%s468 + $0x24] sm:$0xe]
        %v2655 = vld [vmem:[%s468 + $0x30] sm:$0xe]
        %v2656 = vld [vmem:[%s468 + $0x3c] sm:$0xe]
        %v2657 = vld [vmem:[%s468 + $0x48] sm:$0xe]
        %v2658 = vld [vmem:[%s468 + $0x54] sm:$0xe]
        %v2683 = vrot.slane %v2651, 5
        %v2684 = vrot.slane %v2683, 4
        %v2685 = vrot.slane %v2270, 5
        %v2686 = vsel %vm1848, %v2684, %v2685
        %v2687 = vrot.slane %v2685, 4
        %v2688 = vrot.slane %v2271, 5
        %v2689 = vsel %vm1848, %v2687, %v2688
        %v2690 = vrot.slane %v2652, 5
        %v2691 = vrot.slane %v2690, 4
        %v2692 = vrot.slane %v2273, 5
        %v2693 = vsel %vm1848, %v2691, %v2692
        %v2694 = vrot.slane %v2692, 4
        %v2695 = vrot.slane %v2274, 5
        %v2696 = vsel %vm1848, %v2694, %v2695
        %v2697 = vrot.slane %v2653, 5
        %v2698 = vrot.slane %v2697, 4
        %v2699 = vrot.slane %v2276, 5
        %v2700 = vsel %vm1848, %v2698, %v2699
        %v2701 = vrot.slane %v2699, 4
        %v2702 = vrot.slane %v2277, 5
        %v2703 = vsel %vm1848, %v2701, %v2702
        %v2704 = vrot.slane %v2654, 5
        %v2705 = vrot.slane %v2704, 4
        %v2706 = vrot.slane %v2279, 5
        %v2707 = vsel %vm1848, %v2705, %v2706
        %v2708 = vrot.slane %v2706, 4
        %v2709 = vrot.slane %v2280, 5
        %v2710 = vsel %vm1848, %v2708, %v2709
        %v2711 = vrot.slane %v2655, 5
        %v2712 = vrot.slane %v2711, 4
        %v2713 = vrot.slane %v2282, 5
        %v2714 = vsel %vm1848, %v2712, %v2713
        %v2715 = vrot.slane %v2713, 4
        %v2716 = vrot.slane %v2283, 5
        %v2717 = vsel %vm1848, %v2715, %v2716
        %v2718 = vrot.slane %v2656, 5
        %v2719 = vrot.slane %v2718, 4
        %v2720 = vrot.slane %v2285, 5
        %v2721 = vsel %vm1848, %v2719, %v2720
        %v2722 = vrot.slane %v2720, 4
        %v2723 = vrot.slane %v2286, 5
        %v2724 = vsel %vm1848, %v2722, %v2723
        %v2725 = vrot.slane %v2657, 5
        %v2726 = vrot.slane %v2725, 4
        %v2727 = vrot.slane %v2288, 5
        %v2728 = vsel %vm1848, %v2726, %v2727
        %v2729 = vrot.slane %v2727, 4
        %v2730 = vrot.slane %v2289, 5
        %v2731 = vsel %vm1848, %v2729, %v2730
        %v2732 = vrot.slane %v2658, 5
        %v2733 = vrot.slane %v2732, 4
        %v2734 = vrot.slane %v2291, 5
        %v2735 = vsel %vm1848, %v2733, %v2734
        %v2736 = vrot.slane %v2734, 4
        %v2737 = vrot.slane %v2292, 5
        %v2738 = vsel %vm1848, %v2736, %v2737
        %s2739 = scalar_lea.vmem [#allocation6], 20
        %v2740 = vld [vmem:[%s2739] sm:$0xf]
        %v2741 = vunpack.c.l.b16 %v2686
        %v2742 = vunpack.c.l.b16 %v2689
        %v2743 = vunpack.c.l.b16 %v2693
        %v2744 = vunpack.c.l.b16 %v2696
        %v2745 = vunpack.c.l.b16 %v2700
        %v2746 = vunpack.c.l.b16 %v2703
        %v2747 = vunpack.c.l.b16 %v2707
        %v2748 = vunpack.c.l.b16 %v2710
        %v2749 = vunpack.c.l.b16 %v2714
        %v2750 = vunpack.c.l.b16 %v2717
        %v2751 = vunpack.c.l.b16 %v2721
        %v2752 = vunpack.c.l.b16 %v2724
        %v2753 = vunpack.c.l.b16 %v2728
        %v2754 = vunpack.c.l.b16 %v2731
        %v2755 = vunpack.c.l.b16 %v2735
        %v2756 = vunpack.c.l.b16 %v2738
        %v2757 = vpack.c.b16 %v2742, %v2741
        %v2758 = vpack.c.b16 %v2744, %v2743
        %v2759 = vpack.c.b16 %v2746, %v2745
        %v2760 = vpack.c.b16 %v2748, %v2747
        %v2761 = vpack.c.b16 %v2750, %v2749
        %v2762 = vpack.c.b16 %v2752, %v2751
        %v2763 = vpack.c.b16 %v2754, %v2753
        %v2764 = vpack.c.b16 %v2756, %v2755
        %v2766 = vsel %vm293, %v2757, 0
        %v2769 = vsel %vm293, %v2758, 0
        %v2772 = vsel %vm293, %v2759, 0
        %v2775 = vsel %vm293, %v2760, 0
        %v2778 = vsel %vm293, %v2761, 0
        %v2781 = vsel %vm293, %v2762, 0
        %v2784 = vsel %vm293, %v2763, 0
        %v2787 = vsel %vm293, %v2764, 0
        %v2790 = vsel %vm300, %v2740, 0
        %2792 = vmatprep.subr.bf16.mxu0 0
        %2793 = vmatpush1.bf16.msra.mxu0 0
        %2794 = vmatprep.subr.bf16.mxu0 0
        %2795 = vmatpush1.bf16.msra.mxu0 0
        %2796 = vmatprep.subr.bf16.mxu0 0
        %2797 = vmatpush1.bf16.msra.mxu0 0
        %2798 = vmatprep.subr.bf16.mxu0 0
        %2799 = vmatpush1.bf16.msra.mxu0 0
        %2800 = vmatprep.subr.bf16.mxu0 0
        %2801 = vmatpush1.bf16.msra.mxu0 0
        %2802 = vmatprep.subr.bf16.mxu0 0
        %2803 = vmatpush1.bf16.msra.mxu0 0
        %2804 = vmatprep.subr.bf16.mxu0 0
        %2805 = vmatpush1.bf16.msra.mxu0 0
        %2806 = vmatprep.subr.bf16.mxu0 0
        %2807 = vmatpush1.bf16.msra.mxu0 %v2790
        %2808 = vmatprep.subr.bf16.mxu0 0
        %2809 = vmatpush2.bf16.msra.mxu0 0
        %2810 = vmatprep.subr.bf16.mxu0 0
        %2811 = vmatpush2.bf16.msra.mxu0 0
        %2812 = vmatprep.subr.bf16.mxu0 0
        %2813 = vmatpush2.bf16.msra.mxu0 0
        %2814 = vmatprep.subr.bf16.mxu0 0
        %2815 = vmatpush2.bf16.msra.mxu0 0
        %2816 = vmatprep.subr.bf16.mxu0 0
        %2817 = vmatpush2.bf16.msra.mxu0 0
        %2818 = vmatprep.subr.bf16.mxu0 0
        %2819 = vmatpush2.bf16.msra.mxu0 0
        %2820 = vmatprep.subr.bf16.mxu0 0
        %2821 = vmatpush2.bf16.msra.mxu0 0
        %2822 = vmatprep.subr.bf16.mxu0 0
        %2823 = vmatpush2.bf16.msra.mxu0 0
        %2824 = vmatprep.mubr.bf16.mxu0 0
        %2825 = vmatmul.mubr.bf16.gmra.mxu0 %v2766
        %v2826 = vpop.f32.mrf.mxu0
        %v2827 = vadd.f32 0.0, %v2826
        %v2828 = vpop.f32.mrf.mxu0
        %v2829 = vpop.f32.mrf.mxu0
        %v2830 = vadd.f32 0.0, %v2829
        %v2831 = vpop.f32.mrf.mxu0
        %2832 = vmatprep.mubr.bf16.mxu0 0
        %2833 = vmatmul.mubr.bf16.gmra.mxu0 %v2769
        %v2834 = vpop.f32.mrf.mxu0
        %v2835 = vadd.f32 0.0, %v2834
        %v2836 = vpop.f32.mrf.mxu0
        %v2837 = vpop.f32.mrf.mxu0
        %v2838 = vadd.f32 0.0, %v2837
        %v2839 = vpop.f32.mrf.mxu0
        %2840 = vmatprep.mubr.bf16.mxu0 0
        %2841 = vmatmul.mubr.bf16.gmra.mxu0 %v2772
        %v2842 = vpop.f32.mrf.mxu0
        %v2843 = vadd.f32 0.0, %v2842
        %v2844 = vpop.f32.mrf.mxu0
        %v2845 = vpop.f32.mrf.mxu0
        %v2846 = vadd.f32 0.0, %v2845
        %v2847 = vpop.f32.mrf.mxu0
        %2848 = vmatprep.mubr.bf16.mxu0 0
        %2849 = vmatmul.mubr.bf16.gmra.mxu0 %v2775
        %v2850 = vpop.f32.mrf.mxu0
        %v2851 = vadd.f32 0.0, %v2850
        %v2852 = vpop.f32.mrf.mxu0
        %v2853 = vpop.f32.mrf.mxu0
        %v2854 = vadd.f32 0.0, %v2853
        %v2855 = vpop.f32.mrf.mxu0
        %2856 = vmatprep.mubr.bf16.mxu0 0
        %2857 = vmatmul.mubr.bf16.gmra.mxu0 %v2778
        %v2858 = vpop.f32.mrf.mxu0
        %v2859 = vadd.f32 0.0, %v2858
        %v2860 = vpop.f32.mrf.mxu0
        %v2861 = vpop.f32.mrf.mxu0
        %v2862 = vadd.f32 0.0, %v2861
        %v2863 = vpop.f32.mrf.mxu0
        %2864 = vmatprep.mubr.bf16.mxu0 0
        %2865 = vmatmul.mubr.bf16.gmra.mxu0 %v2781
        %v2866 = vpop.f32.mrf.mxu0
        %v2867 = vadd.f32 0.0, %v2866
        %v2868 = vpop.f32.mrf.mxu0
        %v2869 = vpop.f32.mrf.mxu0
        %v2870 = vadd.f32 0.0, %v2869
        %v2871 = vpop.f32.mrf.mxu0
        %2872 = vmatprep.mubr.bf16.mxu0 0
        %2873 = vmatmul.mubr.bf16.gmra.mxu0 %v2784
        %v2874 = vpop.f32.mrf.mxu0
        %v2875 = vadd.f32 0.0, %v2874
        %v2876 = vpop.f32.mrf.mxu0
        %v2877 = vpop.f32.mrf.mxu0
        %v2878 = vadd.f32 0.0, %v2877
        %v2879 = vpop.f32.mrf.mxu0
        %2880 = vmatprep.mubr.bf16.mxu0 0
        %2881 = vmatmul.mubr.bf16.gmra.mxu0 %v2787
        %v2882 = vpop.f32.mrf.mxu0
        %v2883 = vadd.f32 0.0, %v2882
        %v2884 = vpop.f32.mrf.mxu0
        %v2885 = vpop.f32.mrf.mxu0
        %v2886 = vadd.f32 0.0, %v2885
        %v2887 = vpop.f32.mrf.mxu0
        %2888 = vdwg.mxu0
        %v2889 = vadd.f32 %v2635, %v2827
        %v2890 = vadd.f32 %v2636, %v2830
        %v2891 = vadd.f32 %v2637, %v2835
        %v2892 = vadd.f32 %v2638, %v2838
        %v2893 = vadd.f32 %v2639, %v2843
        %v2894 = vadd.f32 %v2640, %v2846
        %v2895 = vadd.f32 %v2641, %v2851
        %v2896 = vadd.f32 %v2642, %v2854
        %v2897 = vadd.f32 %v2643, %v2859
        %v2898 = vadd.f32 %v2644, %v2862
        %v2899 = vadd.f32 %v2645, %v2867
        %v2900 = vadd.f32 %v2646, %v2870
        %v2901 = vadd.f32 %v2647, %v2875
        %v2902 = vadd.f32 %v2648, %v2878
        %v2903 = vadd.f32 %v2649, %v2883
        %v2904 = vadd.f32 %v2650, %v2886
        %v2905 = vld [vmem:[%s570] sm:$0xf]
        %v2906 = vld [vmem:[%s570 + $0x4] sm:$0xf]
        %v2907 = vld [vmem:[%s570 + $0xc] sm:$0xf]
        %v2908 = vld [vmem:[%s570 + $0x10] sm:$0xf]
        %v2909 = vld [vmem:[%s570 + $0x18] sm:$0xf]
        %v2910 = vld [vmem:[%s570 + $0x1c] sm:$0xf]
        %v2911 = vld [vmem:[%s570 + $0x24] sm:$0xf]
        %v2912 = vld [vmem:[%s570 + $0x28] sm:$0xf]
        %v2913 = vld [vmem:[%s570 + $0x30] sm:$0xf]
        %v2914 = vld [vmem:[%s570 + $0x34] sm:$0xf]
        %v2915 = vld [vmem:[%s570 + $0x3c] sm:$0xf]
        %v2916 = vld [vmem:[%s570 + $0x40] sm:$0xf]
        %v2917 = vld [vmem:[%s570 + $0x48] sm:$0xf]
        %v2918 = vld [vmem:[%s570 + $0x4c] sm:$0xf]
        %v2919 = vld [vmem:[%s570 + $0x54] sm:$0xf]
        %v2920 = vld [vmem:[%s570 + $0x58] sm:$0xf]
        %s2921 = scalar_lea.vmem [#allocation6], 24
        %v2922 = vld [vmem:[%s2921] sm:$0xf]
        %v2939 = vunpack.c.l.b16 %v2905
        %v2940 = vunpack.c.l.b16 %v2906
        %v2941 = vunpack.c.l.b16 %v2907
        %v2942 = vunpack.c.l.b16 %v2908
        %v2943 = vunpack.c.l.b16 %v2909
        %v2944 = vunpack.c.l.b16 %v2910
        %v2945 = vunpack.c.l.b16 %v2911
        %v2946 = vunpack.c.l.b16 %v2912
        %v2947 = vunpack.c.l.b16 %v2913
        %v2948 = vunpack.c.l.b16 %v2914
        %v2949 = vunpack.c.l.b16 %v2915
        %v2950 = vunpack.c.l.b16 %v2916
        %v2951 = vunpack.c.l.b16 %v2917
        %v2952 = vunpack.c.l.b16 %v2918
        %v2953 = vunpack.c.l.b16 %v2919
        %v2954 = vunpack.c.l.b16 %v2920
        %v2955 = vpack.c.b16 %v2940, %v2939
        %v2956 = vpack.c.b16 %v2942, %v2941
        %v2957 = vpack.c.b16 %v2944, %v2943
        %v2958 = vpack.c.b16 %v2946, %v2945
        %v2959 = vpack.c.b16 %v2948, %v2947
        %v2960 = vpack.c.b16 %v2950, %v2949
        %v2961 = vpack.c.b16 %v2952, %v2951
        %v2962 = vpack.c.b16 %v2954, %v2953
        %v2964 = vsel %vm293, %v2955, 0
        %v2967 = vsel %vm293, %v2956, 0
        %v2970 = vsel %vm293, %v2957, 0
        %v2973 = vsel %vm293, %v2958, 0
        %v2976 = vsel %vm293, %v2959, 0
        %v2979 = vsel %vm293, %v2960, 0
        %v2982 = vsel %vm293, %v2961, 0
        %v2985 = vsel %vm293, %v2962, 0
        %v2988 = vsel %vm300, %v2922, 0
        %2990 = vmatprep.subr.bf16.mxu0 0
        %2991 = vmatpush1.bf16.msra.mxu0 0
        %2992 = vmatprep.subr.bf16.mxu0 0
        %2993 = vmatpush1.bf16.msra.mxu0 0
        %2994 = vmatprep.subr.bf16.mxu0 0
        %2995 = vmatpush1.bf16.msra.mxu0 0
        %2996 = vmatprep.subr.bf16.mxu0 0
        %2997 = vmatpush1.bf16.msra.mxu0 0
        %2998 = vmatprep.subr.bf16.mxu0 0
        %2999 = vmatpush1.bf16.msra.mxu0 0
        %3000 = vmatprep.subr.bf16.mxu0 0
        %3001 = vmatpush1.bf16.msra.mxu0 0
        %3002 = vmatprep.subr.bf16.mxu0 0
        %3003 = vmatpush1.bf16.msra.mxu0 0
        %3004 = vmatprep.subr.bf16.mxu0 0
        %3005 = vmatpush1.bf16.msra.mxu0 %v2988
        %3006 = vmatprep.subr.bf16.mxu0 0
        %3007 = vmatpush2.bf16.msra.mxu0 0
        %3008 = vmatprep.subr.bf16.mxu0 0
        %3009 = vmatpush2.bf16.msra.mxu0 0
        %3010 = vmatprep.subr.bf16.mxu0 0
        %3011 = vmatpush2.bf16.msra.mxu0 0
        %3012 = vmatprep.subr.bf16.mxu0 0
        %3013 = vmatpush2.bf16.msra.mxu0 0
        %3014 = vmatprep.subr.bf16.mxu0 0
        %3015 = vmatpush2.bf16.msra.mxu0 0
        %3016 = vmatprep.subr.bf16.mxu0 0
        %3017 = vmatpush2.bf16.msra.mxu0 0
        %3018 = vmatprep.subr.bf16.mxu0 0
        %3019 = vmatpush2.bf16.msra.mxu0 0
        %3020 = vmatprep.subr.bf16.mxu0 0
        %3021 = vmatpush2.bf16.msra.mxu0 0
        %3022 = vmatprep.mubr.bf16.mxu0 0
        %3023 = vmatmul.mubr.bf16.gmra.mxu0 %v2964
        %v3024 = vpop.f32.mrf.mxu0
        %v3025 = vadd.f32 0.0, %v3024
        %v3026 = vpop.f32.mrf.mxu0
        %v3027 = vpop.f32.mrf.mxu0
        %v3028 = vadd.f32 0.0, %v3027
        %v3029 = vpop.f32.mrf.mxu0
        %3030 = vmatprep.mubr.bf16.mxu0 0
        %3031 = vmatmul.mubr.bf16.gmra.mxu0 %v2967
        %v3032 = vpop.f32.mrf.mxu0
        %v3033 = vadd.f32 0.0, %v3032
        %v3034 = vpop.f32.mrf.mxu0
        %v3035 = vpop.f32.mrf.mxu0
        %v3036 = vadd.f32 0.0, %v3035
        %v3037 = vpop.f32.mrf.mxu0
        %3038 = vmatprep.mubr.bf16.mxu0 0
        %3039 = vmatmul.mubr.bf16.gmra.mxu0 %v2970
        %v3040 = vpop.f32.mrf.mxu0
        %v3041 = vadd.f32 0.0, %v3040
        %v3042 = vpop.f32.mrf.mxu0
        %v3043 = vpop.f32.mrf.mxu0
        %v3044 = vadd.f32 0.0, %v3043
        %v3045 = vpop.f32.mrf.mxu0
        %3046 = vmatprep.mubr.bf16.mxu0 0
        %3047 = vmatmul.mubr.bf16.gmra.mxu0 %v2973
        %v3048 = vpop.f32.mrf.mxu0
        %v3049 = vadd.f32 0.0, %v3048
        %v3050 = vpop.f32.mrf.mxu0
        %v3051 = vpop.f32.mrf.mxu0
        %v3052 = vadd.f32 0.0, %v3051
        %v3053 = vpop.f32.mrf.mxu0
        %3054 = vmatprep.mubr.bf16.mxu0 0
        %3055 = vmatmul.mubr.bf16.gmra.mxu0 %v2976
        %v3056 = vpop.f32.mrf.mxu0
        %v3057 = vadd.f32 0.0, %v3056
        %v3058 = vpop.f32.mrf.mxu0
        %v3059 = vpop.f32.mrf.mxu0
        %v3060 = vadd.f32 0.0, %v3059
        %v3061 = vpop.f32.mrf.mxu0
        %3062 = vmatprep.mubr.bf16.mxu0 0
        %3063 = vmatmul.mubr.bf16.gmra.mxu0 %v2979
        %v3064 = vpop.f32.mrf.mxu0
        %v3065 = vadd.f32 0.0, %v3064
        %v3066 = vpop.f32.mrf.mxu0
        %v3067 = vpop.f32.mrf.mxu0
        %v3068 = vadd.f32 0.0, %v3067
        %v3069 = vpop.f32.mrf.mxu0
        %3070 = vmatprep.mubr.bf16.mxu0 0
        %3071 = vmatmul.mubr.bf16.gmra.mxu0 %v2982
        %v3072 = vpop.f32.mrf.mxu0
        %v3073 = vadd.f32 0.0, %v3072
        %v3074 = vpop.f32.mrf.mxu0
        %v3075 = vpop.f32.mrf.mxu0
        %v3076 = vadd.f32 0.0, %v3075
        %v3077 = vpop.f32.mrf.mxu0
        %3078 = vmatprep.mubr.bf16.mxu0 0
        %3079 = vmatmul.mubr.bf16.gmra.mxu0 %v2985
        %v3080 = vpop.f32.mrf.mxu0
        %v3081 = vadd.f32 0.0, %v3080
        %v3082 = vpop.f32.mrf.mxu0
        %v3083 = vpop.f32.mrf.mxu0
        %v3084 = vadd.f32 0.0, %v3083
        %v3085 = vpop.f32.mrf.mxu0
        %3086 = vdwg.mxu0
        %v3087 = vadd.f32 %v2889, %v3025
        %v3088 = vadd.f32 %v2890, %v3028
        %v3089 = vadd.f32 %v2891, %v3033
        %v3090 = vadd.f32 %v2892, %v3036
        %v3091 = vadd.f32 %v2893, %v3041
        %v3092 = vadd.f32 %v2894, %v3044
        %v3093 = vadd.f32 %v2895, %v3049
        %v3094 = vadd.f32 %v2896, %v3052
        %v3095 = vadd.f32 %v2897, %v3057
        %v3096 = vadd.f32 %v2898, %v3060
        %v3097 = vadd.f32 %v2899, %v3065
        %v3098 = vadd.f32 %v2900, %v3068
        %v3099 = vadd.f32 %v2901, %v3073
        %v3100 = vadd.f32 %v2902, %v3076
        %v3101 = vadd.f32 %v2903, %v3081
        %v3102 = vadd.f32 %v2904, %v3084
        %v3103 = vld [vmem:[%s570] sm:$0xf]
        %v3104 = vld [vmem:[%s570 + $0x4] sm:$0xf]
        %v3105 = vld [vmem:[%s570 + $0x8] sm:$0x1]
        %v3106 = vld [vmem:[%s570 + $0xc] sm:$0xf]
        %v3107 = vld [vmem:[%s570 + $0x10] sm:$0xf]
        %v3108 = vld [vmem:[%s570 + $0x14] sm:$0x1]
        %v3109 = vld [vmem:[%s570 + $0x18] sm:$0xf]
        %v3110 = vld [vmem:[%s570 + $0x1c] sm:$0xf]
        %v3111 = vld [vmem:[%s570 + $0x20] sm:$0x1]
        %v3112 = vld [vmem:[%s570 + $0x24] sm:$0xf]
        %v3113 = vld [vmem:[%s570 + $0x28] sm:$0xf]
        %v3114 = vld [vmem:[%s570 + $0x2c] sm:$0x1]
        %v3115 = vld [vmem:[%s570 + $0x30] sm:$0xf]
        %v3116 = vld [vmem:[%s570 + $0x34] sm:$0xf]
        %v3117 = vld [vmem:[%s570 + $0x38] sm:$0x1]
        %v3118 = vld [vmem:[%s570 + $0x3c] sm:$0xf]
        %v3119 = vld [vmem:[%s570 + $0x40] sm:$0xf]
        %v3120 = vld [vmem:[%s570 + $0x44] sm:$0x1]
        %v3121 = vld [vmem:[%s570 + $0x48] sm:$0xf]
        %v3122 = vld [vmem:[%s570 + $0x4c] sm:$0xf]
        %v3123 = vld [vmem:[%s570 + $0x50] sm:$0x1]
        %v3124 = vld [vmem:[%s570 + $0x54] sm:$0xf]
        %v3125 = vld [vmem:[%s570 + $0x58] sm:$0xf]
        %v3126 = vld [vmem:[%s570 + $0x5c] sm:$0x1]
        %v3128 = vshrl.u32 %v3103, 16
        %v3130 = vrot.slane %v3128, 4
        %v3131 = vshll.u32 %v3103, 16
        %v3133 = vrot.slane %v3131, 5
        %v3134 = vor.u32 %v3130, %v3133
        %v3135 = vrot.slane %v3134, 4
        %v3137 = vshll.u32 %v3104, 16
        %v3139 = vrot.slane %v3137, 5
        %v3140 = vsel %vm1315, %v3135, %v3139
        %v3141 = vshrl.u32 %v3104, 16
        %v3143 = vrot.slane %v3141, 4
        %v3144 = vor.u32 %v3143, %v3139
        %v3145 = vrot.slane %v3144, 4
        %v3147 = vshll.u32 %v3105, 16
        %v3149 = vrot.slane %v3147, 5
        %v3150 = vsel %vm1315, %v3145, %v3149
        %v3152 = vshrl.u32 %v3106, 16
        %v3154 = vrot.slane %v3152, 4
        %v3155 = vshll.u32 %v3106, 16
        %v3157 = vrot.slane %v3155, 5
        %v3158 = vor.u32 %v3154, %v3157
        %v3159 = vrot.slane %v3158, 4
        %v3161 = vshll.u32 %v3107, 16
        %v3163 = vrot.slane %v3161, 5
        %v3164 = vsel %vm1315, %v3159, %v3163
        %v3165 = vshrl.u32 %v3107, 16
        %v3167 = vrot.slane %v3165, 4
        %v3168 = vor.u32 %v3167, %v3163
        %v3169 = vrot.slane %v3168, 4
        %v3171 = vshll.u32 %v3108, 16
        %v3173 = vrot.slane %v3171, 5
        %v3174 = vsel %vm1315, %v3169, %v3173
        %v3176 = vshrl.u32 %v3109, 16
        %v3178 = vrot.slane %v3176, 4
        %v3179 = vshll.u32 %v3109, 16
        %v3181 = vrot.slane %v3179, 5
        %v3182 = vor.u32 %v3178, %v3181
        %v3183 = vrot.slane %v3182, 4
        %v3185 = vshll.u32 %v3110, 16
        %v3187 = vrot.slane %v3185, 5
        %v3188 = vsel %vm1315, %v3183, %v3187
        %v3189 = vshrl.u32 %v3110, 16
        %v3191 = vrot.slane %v3189, 4
        %v3192 = vor.u32 %v3191, %v3187
        %v3193 = vrot.slane %v3192, 4
        %v3195 = vshll.u32 %v3111, 16
        %v3197 = vrot.slane %v3195, 5
        %v3198 = vsel %vm1315, %v3193, %v3197
        %v3200 = vshrl.u32 %v3112, 16
        %v3202 = vrot.slane %v3200, 4
        %v3203 = vshll.u32 %v3112, 16
        %v3205 = vrot.slane %v3203, 5
        %v3206 = vor.u32 %v3202, %v3205
        %v3207 = vrot.slane %v3206, 4
        %v3209 = vshll.u32 %v3113, 16
        %v3211 = vrot.slane %v3209, 5
        %v3212 = vsel %vm1315, %v3207, %v3211
        %v3213 = vshrl.u32 %v3113, 16
        %v3215 = vrot.slane %v3213, 4
        %v3216 = vor.u32 %v3215, %v3211
        %v3217 = vrot.slane %v3216, 4
        %v3219 = vshll.u32 %v3114, 16
        %v3221 = vrot.slane %v3219, 5
        %v3222 = vsel %vm1315, %v3217, %v3221
        %v3224 = vshrl.u32 %v3115, 16
        %v3226 = vrot.slane %v3224, 4
        %v3227 = vshll.u32 %v3115, 16
        %v3229 = vrot.slane %v3227, 5
        %v3230 = vor.u32 %v3226, %v3229
        %v3231 = vrot.slane %v3230, 4
        %v3233 = vshll.u32 %v3116, 16
        %v3235 = vrot.slane %v3233, 5
        %v3236 = vsel %vm1315, %v3231, %v3235
        %v3237 = vshrl.u32 %v3116, 16
        %v3239 = vrot.slane %v3237, 4
        %v3240 = vor.u32 %v3239, %v3235
        %v3241 = vrot.slane %v3240, 4
        %v3243 = vshll.u32 %v3117, 16
        %v3245 = vrot.slane %v3243, 5
        %v3246 = vsel %vm1315, %v3241, %v3245
        %v3248 = vshrl.u32 %v3118, 16
        %v3250 = vrot.slane %v3248, 4
        %v3251 = vshll.u32 %v3118, 16
        %v3253 = vrot.slane %v3251, 5
        %v3254 = vor.u32 %v3250, %v3253
        %v3255 = vrot.slane %v3254, 4
        %v3257 = vshll.u32 %v3119, 16
        %v3259 = vrot.slane %v3257, 5
        %v3260 = vsel %vm1315, %v3255, %v3259
        %v3261 = vshrl.u32 %v3119, 16
        %v3263 = vrot.slane %v3261, 4
        %v3264 = vor.u32 %v3263, %v3259
        %v3265 = vrot.slane %v3264, 4
        %v3267 = vshll.u32 %v3120, 16
        %v3269 = vrot.slane %v3267, 5
        %v3270 = vsel %vm1315, %v3265, %v3269
        %v3272 = vshrl.u32 %v3121, 16
        %v3274 = vrot.slane %v3272, 4
        %v3275 = vshll.u32 %v3121, 16
        %v3277 = vrot.slane %v3275, 5
        %v3278 = vor.u32 %v3274, %v3277
        %v3279 = vrot.slane %v3278, 4
        %v3281 = vshll.u32 %v3122, 16
        %v3283 = vrot.slane %v3281, 5
        %v3284 = vsel %vm1315, %v3279, %v3283
        %v3285 = vshrl.u32 %v3122, 16
        %v3287 = vrot.slane %v3285, 4
        %v3288 = vor.u32 %v3287, %v3283
        %v3289 = vrot.slane %v3288, 4
        %v3291 = vshll.u32 %v3123, 16
        %v3293 = vrot.slane %v3291, 5
        %v3294 = vsel %vm1315, %v3289, %v3293
        %v3296 = vshrl.u32 %v3124, 16
        %v3298 = vrot.slane %v3296, 4
        %v3299 = vshll.u32 %v3124, 16
        %v3301 = vrot.slane %v3299, 5
        %v3302 = vor.u32 %v3298, %v3301
        %v3303 = vrot.slane %v3302, 4
        %v3305 = vshll.u32 %v3125, 16
        %v3307 = vrot.slane %v3305, 5
        %v3308 = vsel %vm1315, %v3303, %v3307
        %v3309 = vshrl.u32 %v3125, 16
        %v3311 = vrot.slane %v3309, 4
        %v3312 = vor.u32 %v3311, %v3307
        %v3313 = vrot.slane %v3312, 4
        %v3315 = vshll.u32 %v3126, 16
        %v3317 = vrot.slane %v3315, 5
        %v3318 = vsel %vm1315, %v3313, %v3317
        %s3319 = scalar_lea.vmem [#allocation6], 28
        %v3320 = vld [vmem:[%s3319] sm:$0xf]
        %v3321 = vunpack.c.l.b16 %v3140
        %v3322 = vunpack.c.l.b16 %v3150
        %v3323 = vunpack.c.l.b16 %v3164
        %v3324 = vunpack.c.l.b16 %v3174
        %v3325 = vunpack.c.l.b16 %v3188
        %v3326 = vunpack.c.l.b16 %v3198
        %v3327 = vunpack.c.l.b16 %v3212
        %v3328 = vunpack.c.l.b16 %v3222
        %v3329 = vunpack.c.l.b16 %v3236
        %v3330 = vunpack.c.l.b16 %v3246
        %v3331 = vunpack.c.l.b16 %v3260
        %v3332 = vunpack.c.l.b16 %v3270
        %v3333 = vunpack.c.l.b16 %v3284
        %v3334 = vunpack.c.l.b16 %v3294
        %v3335 = vunpack.c.l.b16 %v3308
        %v3336 = vunpack.c.l.b16 %v3318
        %v3337 = vpack.c.b16 %v3322, %v3321
        %v3338 = vpack.c.b16 %v3324, %v3323
        %v3339 = vpack.c.b16 %v3326, %v3325
        %v3340 = vpack.c.b16 %v3328, %v3327
        %v3341 = vpack.c.b16 %v3330, %v3329
        %v3342 = vpack.c.b16 %v3332, %v3331
        %v3343 = vpack.c.b16 %v3334, %v3333
        %v3344 = vpack.c.b16 %v3336, %v3335
        %v3346 = vsel %vm293, %v3337, 0
        %v3349 = vsel %vm293, %v3338, 0
        %v3352 = vsel %vm293, %v3339, 0
        %v3355 = vsel %vm293, %v3340, 0
        %v3358 = vsel %vm293, %v3341, 0
        %v3361 = vsel %vm293, %v3342, 0
        %v3364 = vsel %vm293, %v3343, 0
        %v3367 = vsel %vm293, %v3344, 0
        %v3370 = vsel %vm300, %v3320, 0
        %3372 = vmatprep.subr.bf16.mxu0 0
        %3373 = vmatpush1.bf16.msra.mxu0 0
        %3374 = vmatprep.subr.bf16.mxu0 0
        %3375 = vmatpush1.bf16.msra.mxu0 0
        %3376 = vmatprep.subr.bf16.mxu0 0
        %3377 = vmatpush1.bf16.msra.mxu0 0
        %3378 = vmatprep.subr.bf16.mxu0 0
        %3379 = vmatpush1.bf16.msra.mxu0 0
        %3380 = vmatprep.subr.bf16.mxu0 0
        %3381 = vmatpush1.bf16.msra.mxu0 0
        %3382 = vmatprep.subr.bf16.mxu0 0
        %3383 = vmatpush1.bf16.msra.mxu0 0
        %3384 = vmatprep.subr.bf16.mxu0 0
        %3385 = vmatpush1.bf16.msra.mxu0 0
        %3386 = vmatprep.subr.bf16.mxu0 0
        %3387 = vmatpush1.bf16.msra.mxu0 %v3370
        %3388 = vmatprep.subr.bf16.mxu0 0
        %3389 = vmatpush2.bf16.msra.mxu0 0
        %3390 = vmatprep.subr.bf16.mxu0 0
        %3391 = vmatpush2.bf16.msra.mxu0 0
        %3392 = vmatprep.subr.bf16.mxu0 0
        %3393 = vmatpush2.bf16.msra.mxu0 0
        %3394 = vmatprep.subr.bf16.mxu0 0
        %3395 = vmatpush2.bf16.msra.mxu0 0
        %3396 = vmatprep.subr.bf16.mxu0 0
        %3397 = vmatpush2.bf16.msra.mxu0 0
        %3398 = vmatprep.subr.bf16.mxu0 0
        %3399 = vmatpush2.bf16.msra.mxu0 0
        %3400 = vmatprep.subr.bf16.mxu0 0
        %3401 = vmatpush2.bf16.msra.mxu0 0
        %3402 = vmatprep.subr.bf16.mxu0 0
        %3403 = vmatpush2.bf16.msra.mxu0 0
        %3404 = vmatprep.mubr.bf16.mxu0 0
        %3405 = vmatmul.mubr.bf16.gmra.mxu0 %v3346
        %v3406 = vpop.f32.mrf.mxu0
        %v3407 = vadd.f32 0.0, %v3406
        %v3408 = vpop.f32.mrf.mxu0
        %v3409 = vpop.f32.mrf.mxu0
        %v3410 = vadd.f32 0.0, %v3409
        %v3411 = vpop.f32.mrf.mxu0
        %3412 = vmatprep.mubr.bf16.mxu0 0
        %3413 = vmatmul.mubr.bf16.gmra.mxu0 %v3349
        %v3414 = vpop.f32.mrf.mxu0
        %v3415 = vadd.f32 0.0, %v3414
        %v3416 = vpop.f32.mrf.mxu0
        %v3417 = vpop.f32.mrf.mxu0
        %v3418 = vadd.f32 0.0, %v3417
        %v3419 = vpop.f32.mrf.mxu0
        %3420 = vmatprep.mubr.bf16.mxu0 0
        %3421 = vmatmul.mubr.bf16.gmra.mxu0 %v3352
        %v3422 = vpop.f32.mrf.mxu0
        %v3423 = vadd.f32 0.0, %v3422
        %v3424 = vpop.f32.mrf.mxu0
        %v3425 = vpop.f32.mrf.mxu0
        %v3426 = vadd.f32 0.0, %v3425
        %v3427 = vpop.f32.mrf.mxu0
        %3428 = vmatprep.mubr.bf16.mxu0 0
        %3429 = vmatmul.mubr.bf16.gmra.mxu0 %v3355
        %v3430 = vpop.f32.mrf.mxu0
        %v3431 = vadd.f32 0.0, %v3430
        %v3432 = vpop.f32.mrf.mxu0
        %v3433 = vpop.f32.mrf.mxu0
        %v3434 = vadd.f32 0.0, %v3433
        %v3435 = vpop.f32.mrf.mxu0
        %3436 = vmatprep.mubr.bf16.mxu0 0
        %3437 = vmatmul.mubr.bf16.gmra.mxu0 %v3358
        %v3438 = vpop.f32.mrf.mxu0
        %v3439 = vadd.f32 0.0, %v3438
        %v3440 = vpop.f32.mrf.mxu0
        %v3441 = vpop.f32.mrf.mxu0
        %v3442 = vadd.f32 0.0, %v3441
        %v3443 = vpop.f32.mrf.mxu0
        %3444 = vmatprep.mubr.bf16.mxu0 0
        %3445 = vmatmul.mubr.bf16.gmra.mxu0 %v3361
        %v3446 = vpop.f32.mrf.mxu0
        %v3447 = vadd.f32 0.0, %v3446
        %v3448 = vpop.f32.mrf.mxu0
        %v3449 = vpop.f32.mrf.mxu0
        %v3450 = vadd.f32 0.0, %v3449
        %v3451 = vpop.f32.mrf.mxu0
        %3452 = vmatprep.mubr.bf16.mxu0 0
        %3453 = vmatmul.mubr.bf16.gmra.mxu0 %v3364
        %v3454 = vpop.f32.mrf.mxu0
        %v3455 = vadd.f32 0.0, %v3454
        %v3456 = vpop.f32.mrf.mxu0
        %v3457 = vpop.f32.mrf.mxu0
        %v3458 = vadd.f32 0.0, %v3457
        %v3459 = vpop.f32.mrf.mxu0
        %3460 = vmatprep.mubr.bf16.mxu0 0
        %3461 = vmatmul.mubr.bf16.gmra.mxu0 %v3367
        %v3462 = vpop.f32.mrf.mxu0
        %v3463 = vadd.f32 0.0, %v3462
        %v3464 = vpop.f32.mrf.mxu0
        %v3465 = vpop.f32.mrf.mxu0
        %v3466 = vadd.f32 0.0, %v3465
        %v3467 = vpop.f32.mrf.mxu0
        %3468 = vdwg.mxu0
        %v3469 = vadd.f32 %v3087, %v3407
        %v3470 = vadd.f32 %v3088, %v3410
        %v3471 = vadd.f32 %v3089, %v3415
        %v3472 = vadd.f32 %v3090, %v3418
        %v3473 = vadd.f32 %v3091, %v3423
        %v3474 = vadd.f32 %v3092, %v3426
        %v3475 = vadd.f32 %v3093, %v3431
        %v3476 = vadd.f32 %v3094, %v3434
        %v3477 = vadd.f32 %v3095, %v3439
        %v3478 = vadd.f32 %v3096, %v3442
        %v3479 = vadd.f32 %v3097, %v3447
        %v3480 = vadd.f32 %v3098, %v3450
        %v3481 = vadd.f32 %v3099, %v3455
        %v3482 = vadd.f32 %v3100, %v3458
        %v3483 = vadd.f32 %v3101, %v3463
        %v3484 = vadd.f32 %v3102, %v3466
        %v3485 = vld [vmem:[%s570] sm:$0xe]
        %v3486 = vld [vmem:[%s570 + $0xc] sm:$0xe]
        %v3487 = vld [vmem:[%s570 + $0x18] sm:$0xe]
        %v3488 = vld [vmem:[%s570 + $0x24] sm:$0xe]
        %v3489 = vld [vmem:[%s570 + $0x30] sm:$0xe]
        %v3490 = vld [vmem:[%s570 + $0x3c] sm:$0xe]
        %v3491 = vld [vmem:[%s570 + $0x48] sm:$0xe]
        %v3492 = vld [vmem:[%s570 + $0x54] sm:$0xe]
        %v3517 = vrot.slane %v3485, 5
        %v3518 = vrot.slane %v3517, 4
        %v3519 = vrot.slane %v3104, 5
        %v3520 = vsel %vm1848, %v3518, %v3519
        %v3521 = vrot.slane %v3519, 4
        %v3522 = vrot.slane %v3105, 5
        %v3523 = vsel %vm1848, %v3521, %v3522
        %v3524 = vrot.slane %v3486, 5
        %v3525 = vrot.slane %v3524, 4
        %v3526 = vrot.slane %v3107, 5
        %v3527 = vsel %vm1848, %v3525, %v3526
        %v3528 = vrot.slane %v3526, 4
        %v3529 = vrot.slane %v3108, 5
        %v3530 = vsel %vm1848, %v3528, %v3529
        %v3531 = vrot.slane %v3487, 5
        %v3532 = vrot.slane %v3531, 4
        %v3533 = vrot.slane %v3110, 5
        %v3534 = vsel %vm1848, %v3532, %v3533
        %v3535 = vrot.slane %v3533, 4
        %v3536 = vrot.slane %v3111, 5
        %v3537 = vsel %vm1848, %v3535, %v3536
        %v3538 = vrot.slane %v3488, 5
        %v3539 = vrot.slane %v3538, 4
        %v3540 = vrot.slane %v3113, 5
        %v3541 = vsel %vm1848, %v3539, %v3540
        %v3542 = vrot.slane %v3540, 4
        %v3543 = vrot.slane %v3114, 5
        %v3544 = vsel %vm1848, %v3542, %v3543
        %v3545 = vrot.slane %v3489, 5
        %v3546 = vrot.slane %v3545, 4
        %v3547 = vrot.slane %v3116, 5
        %v3548 = vsel %vm1848, %v3546, %v3547
        %v3549 = vrot.slane %v3547, 4
        %v3550 = vrot.slane %v3117, 5
        %v3551 = vsel %vm1848, %v3549, %v3550
        %v3552 = vrot.slane %v3490, 5
        %v3553 = vrot.slane %v3552, 4
        %v3554 = vrot.slane %v3119, 5
        %v3555 = vsel %vm1848, %v3553, %v3554
        %v3556 = vrot.slane %v3554, 4
        %v3557 = vrot.slane %v3120, 5
        %v3558 = vsel %vm1848, %v3556, %v3557
        %v3559 = vrot.slane %v3491, 5
        %v3560 = vrot.slane %v3559, 4
        %v3561 = vrot.slane %v3122, 5
        %v3562 = vsel %vm1848, %v3560, %v3561
        %v3563 = vrot.slane %v3561, 4
        %v3564 = vrot.slane %v3123, 5
        %v3565 = vsel %vm1848, %v3563, %v3564
        %v3566 = vrot.slane %v3492, 5
        %v3567 = vrot.slane %v3566, 4
        %v3568 = vrot.slane %v3125, 5
        %v3569 = vsel %vm1848, %v3567, %v3568
        %v3570 = vrot.slane %v3568, 4
        %v3571 = vrot.slane %v3126, 5
        %v3572 = vsel %vm1848, %v3570, %v3571
        %s3573 = scalar_lea.vmem [#allocation6], 32
        %v3574 = vld [vmem:[%s3573] sm:$0xf]
        %v3575 = vunpack.c.l.b16 %v3520
        %v3576 = vunpack.c.l.b16 %v3523
        %v3577 = vunpack.c.l.b16 %v3527
        %v3578 = vunpack.c.l.b16 %v3530
        %v3579 = vunpack.c.l.b16 %v3534
        %v3580 = vunpack.c.l.b16 %v3537
        %v3581 = vunpack.c.l.b16 %v3541
        %v3582 = vunpack.c.l.b16 %v3544
        %v3583 = vunpack.c.l.b16 %v3548
        %v3584 = vunpack.c.l.b16 %v3551
        %v3585 = vunpack.c.l.b16 %v3555
        %v3586 = vunpack.c.l.b16 %v3558
        %v3587 = vunpack.c.l.b16 %v3562
        %v3588 = vunpack.c.l.b16 %v3565
        %v3589 = vunpack.c.l.b16 %v3569
        %v3590 = vunpack.c.l.b16 %v3572
        %v3591 = vpack.c.b16 %v3576, %v3575
        %v3592 = vpack.c.b16 %v3578, %v3577
        %v3593 = vpack.c.b16 %v3580, %v3579
        %v3594 = vpack.c.b16 %v3582, %v3581
        %v3595 = vpack.c.b16 %v3584, %v3583
        %v3596 = vpack.c.b16 %v3586, %v3585
        %v3597 = vpack.c.b16 %v3588, %v3587
        %v3598 = vpack.c.b16 %v3590, %v3589
        %v3600 = vsel %vm293, %v3591, 0
        %v3603 = vsel %vm293, %v3592, 0
        %v3606 = vsel %vm293, %v3593, 0
        %v3609 = vsel %vm293, %v3594, 0
        %v3612 = vsel %vm293, %v3595, 0
        %v3615 = vsel %vm293, %v3596, 0
        %v3618 = vsel %vm293, %v3597, 0
        %v3621 = vsel %vm293, %v3598, 0
        %v3624 = vsel %vm300, %v3574, 0
        %3626 = vmatprep.subr.bf16.mxu0 0
        %3627 = vmatpush1.bf16.msra.mxu0 0
        %3628 = vmatprep.subr.bf16.mxu0 0
        %3629 = vmatpush1.bf16.msra.mxu0 0
        %3630 = vmatprep.subr.bf16.mxu0 0
        %3631 = vmatpush1.bf16.msra.mxu0 0
        %3632 = vmatprep.subr.bf16.mxu0 0
        %3633 = vmatpush1.bf16.msra.mxu0 0
        %3634 = vmatprep.subr.bf16.mxu0 0
        %3635 = vmatpush1.bf16.msra.mxu0 0
        %3636 = vmatprep.subr.bf16.mxu0 0
        %3637 = vmatpush1.bf16.msra.mxu0 0
        %3638 = vmatprep.subr.bf16.mxu0 0
        %3639 = vmatpush1.bf16.msra.mxu0 0
        %3640 = vmatprep.subr.bf16.mxu0 0
        %3641 = vmatpush1.bf16.msra.mxu0 %v3624
        %3642 = vmatprep.subr.bf16.mxu0 0
        %3643 = vmatpush2.bf16.msra.mxu0 0
        %3644 = vmatprep.subr.bf16.mxu0 0
        %3645 = vmatpush2.bf16.msra.mxu0 0
        %3646 = vmatprep.subr.bf16.mxu0 0
        %3647 = vmatpush2.bf16.msra.mxu0 0
        %3648 = vmatprep.subr.bf16.mxu0 0
        %3649 = vmatpush2.bf16.msra.mxu0 0
        %3650 = vmatprep.subr.bf16.mxu0 0
        %3651 = vmatpush2.bf16.msra.mxu0 0
        %3652 = vmatprep.subr.bf16.mxu0 0
        %3653 = vmatpush2.bf16.msra.mxu0 0
        %3654 = vmatprep.subr.bf16.mxu0 0
        %3655 = vmatpush2.bf16.msra.mxu0 0
        %3656 = vmatprep.subr.bf16.mxu0 0
        %3657 = vmatpush2.bf16.msra.mxu0 0
        %3658 = vmatprep.mubr.bf16.mxu0 0
        %3659 = vmatmul.mubr.bf16.gmra.mxu0 %v3600
        %v3660 = vpop.f32.mrf.mxu0
        %v3661 = vadd.f32 0.0, %v3660
        %v3662 = vpop.f32.mrf.mxu0
        %v3663 = vpop.f32.mrf.mxu0
        %v3664 = vadd.f32 0.0, %v3663
        %v3665 = vpop.f32.mrf.mxu0
        %3666 = vmatprep.mubr.bf16.mxu0 0
        %3667 = vmatmul.mubr.bf16.gmra.mxu0 %v3603
        %v3668 = vpop.f32.mrf.mxu0
        %v3669 = vadd.f32 0.0, %v3668
        %v3670 = vpop.f32.mrf.mxu0
        %v3671 = vpop.f32.mrf.mxu0
        %v3672 = vadd.f32 0.0, %v3671
        %v3673 = vpop.f32.mrf.mxu0
        %3674 = vmatprep.mubr.bf16.mxu0 0
        %3675 = vmatmul.mubr.bf16.gmra.mxu0 %v3606
        %v3676 = vpop.f32.mrf.mxu0
        %v3677 = vadd.f32 0.0, %v3676
        %v3678 = vpop.f32.mrf.mxu0
        %v3679 = vpop.f32.mrf.mxu0
        %v3680 = vadd.f32 0.0, %v3679
        %v3681 = vpop.f32.mrf.mxu0
        %3682 = vmatprep.mubr.bf16.mxu0 0
        %3683 = vmatmul.mubr.bf16.gmra.mxu0 %v3609
        %v3684 = vpop.f32.mrf.mxu0
        %v3685 = vadd.f32 0.0, %v3684
        %v3686 = vpop.f32.mrf.mxu0
        %v3687 = vpop.f32.mrf.mxu0
        %v3688 = vadd.f32 0.0, %v3687
        %v3689 = vpop.f32.mrf.mxu0
        %3690 = vmatprep.mubr.bf16.mxu0 0
        %3691 = vmatmul.mubr.bf16.gmra.mxu0 %v3612
        %v3692 = vpop.f32.mrf.mxu0
        %v3693 = vadd.f32 0.0, %v3692
        %v3694 = vpop.f32.mrf.mxu0
        %v3695 = vpop.f32.mrf.mxu0
        %v3696 = vadd.f32 0.0, %v3695
        %v3697 = vpop.f32.mrf.mxu0
        %3698 = vmatprep.mubr.bf16.mxu0 0
        %3699 = vmatmul.mubr.bf16.gmra.mxu0 %v3615
        %v3700 = vpop.f32.mrf.mxu0
        %v3701 = vadd.f32 0.0, %v3700
        %v3702 = vpop.f32.mrf.mxu0
        %v3703 = vpop.f32.mrf.mxu0
        %v3704 = vadd.f32 0.0, %v3703
        %v3705 = vpop.f32.mrf.mxu0
        %3706 = vmatprep.mubr.bf16.mxu0 0
        %3707 = vmatmul.mubr.bf16.gmra.mxu0 %v3618
        %v3708 = vpop.f32.mrf.mxu0
        %v3709 = vadd.f32 0.0, %v3708
        %v3710 = vpop.f32.mrf.mxu0
        %v3711 = vpop.f32.mrf.mxu0
        %v3712 = vadd.f32 0.0, %v3711
        %v3713 = vpop.f32.mrf.mxu0
        %3714 = vmatprep.mubr.bf16.mxu0 0
        %3715 = vmatmul.mubr.bf16.gmra.mxu0 %v3621
        %v3716 = vpop.f32.mrf.mxu0
        %v3717 = vadd.f32 0.0, %v3716
        %v3718 = vpop.f32.mrf.mxu0
        %v3719 = vpop.f32.mrf.mxu0
        %v3720 = vadd.f32 0.0, %v3719
        %v3721 = vpop.f32.mrf.mxu0
        %3722 = vdwg.mxu0
        %v3723 = vadd.f32 %v3469, %v3661
        %v3724 = vadd.f32 %v3470, %v3664
        %v3725 = vadd.f32 %v3471, %v3669
        %v3726 = vadd.f32 %v3472, %v3672
        %v3727 = vadd.f32 %v3473, %v3677
        %v3728 = vadd.f32 %v3474, %v3680
        %v3729 = vadd.f32 %v3475, %v3685
        %v3730 = vadd.f32 %v3476, %v3688
        %v3731 = vadd.f32 %v3477, %v3693
        %v3732 = vadd.f32 %v3478, %v3696
        %v3733 = vadd.f32 %v3479, %v3701
        %v3734 = vadd.f32 %v3480, %v3704
        %v3735 = vadd.f32 %v3481, %v3709
        %v3736 = vadd.f32 %v3482, %v3712
        %v3737 = vadd.f32 %v3483, %v3717
        %v3738 = vadd.f32 %v3484, %v3720
        %v3739 = vld [vmem:[%s3] sm:$0x1]
        %v3741 = vlaneseq
        %v3742 = vshrl.u32 %v3741, 7
        %v3743 = vsub.s32 0, %v3742
        %v3744 = vrot.slane %v3739, %v3743
        %v3746 = vadd.f32 %v3723, %v3744
        %v3747 = vadd.f32 %v3724, %v3744
        %v3748 = vadd.f32 %v3725, %v3744
        %v3749 = vadd.f32 %v3726, %v3744
        %v3750 = vadd.f32 %v3727, %v3744
        %v3751 = vadd.f32 %v3728, %v3744
        %v3752 = vadd.f32 %v3729, %v3744
        %v3753 = vadd.f32 %v3730, %v3744
        %v3754 = vadd.f32 %v3731, %v3744
        %v3755 = vadd.f32 %v3732, %v3744
        %v3756 = vadd.f32 %v3733, %v3744
        %v3757 = vadd.f32 %v3734, %v3744
        %v3758 = vadd.f32 %v3735, %v3744
        %v3759 = vadd.f32 %v3736, %v3744
        %v3760 = vadd.f32 %v3737, %v3744
        %v3761 = vadd.f32 %v3738, %v3744
        %v3762 = vmax.f32 %v3746, 0.0
        %v3763 = vmax.f32 %v3747, 0.0
        %v3764 = vmax.f32 %v3748, 0.0
        %v3765 = vmax.f32 %v3749, 0.0
        %v3766 = vmax.f32 %v3750, 0.0
        %v3767 = vmax.f32 %v3751, 0.0
        %v3768 = vmax.f32 %v3752, 0.0
        %v3769 = vmax.f32 %v3753, 0.0
        %v3770 = vmax.f32 %v3754, 0.0
        %v3771 = vmax.f32 %v3755, 0.0
        %v3772 = vmax.f32 %v3756, 0.0
        %v3773 = vmax.f32 %v3757, 0.0
        %v3774 = vmax.f32 %v3758, 0.0
        %v3775 = vmax.f32 %v3759, 0.0
        %v3776 = vmax.f32 %v3760, 0.0
        %v3777 = vmax.f32 %v3761, 0.0
        %3778 = vst [vmem:[%s244] sm:$0xff] %v3762
        %3779 = vst [vmem:[%s244 + $0x8] sm:$0xff] %v3763
        %3780 = vst [vmem:[%s244 + $0x10] sm:$0xff] %v3764
        %3781 = vst [vmem:[%s244 + $0x18] sm:$0xff] %v3765
        %3782 = vst [vmem:[%s244 + $0x20] sm:$0xff] %v3766
        %3783 = vst [vmem:[%s244 + $0x28] sm:$0xff] %v3767
        %3784 = vst [vmem:[%s244 + $0x30] sm:$0xff] %v3768
        %3785 = vst [vmem:[%s244 + $0x38] sm:$0xff] %v3769
        %3786 = vst [vmem:[%s244 + $0x40] sm:$0xff] %v3770
        %3787 = vst [vmem:[%s244 + $0x48] sm:$0xff] %v3771
        %3788 = vst [vmem:[%s244 + $0x50] sm:$0xff] %v3772
        %3789 = vst [vmem:[%s244 + $0x58] sm:$0xff] %v3773
        %3790 = vst [vmem:[%s244 + $0x60] sm:$0xff] %v3774
        %3791 = vst [vmem:[%s244 + $0x68] sm:$0xff] %v3775
        %3792 = vst [vmem:[%s244 + $0x70] sm:$0xff] %v3776
        %3793 = vst [vmem:[%s244 + $0x78] sm:$0xff] %v3777
        %s3794 = sand.u32 %s133, 1
        %s3795 = scalar_lea.sflag [#allocation5], %s3794
        %s3796 = sand.u32 %s133, 1
        %s3797 = smul.addr %s3796, 128
        %s3798 = scalar_lea.vmem [#allocation8], %s3797
        // Predicated region
        $region45: #{tpu_custom_call.1} parent=35 // pred_check
          %p3799 = pneg %p143
        $region46: #{tpu_custom_call.1} parent=35 // pred_check_branch
          %3801 = sbr.rel (%p3799) target = $region48
        $region47: #{tpu_custom_call.1} parent=35 // pred_region
          %s3802 = smul.u32 8, %s27
          %s3804 = ssub.s32 2048, 2048
          %3805 = vsyncadd %s3795, %s3804
          %s3806 = smul.addr %s3802, 2
          %s3807 = smul.addr %s26, 32
          %s3808 = sadd.s32 %s3806, %s3807
          %s3809 = smul.addr %s3808, 128
          %s3810 = scalar_lea.hbm %s4, %s3809
          %s3811 = sshll.u32 %s3798, 4
          %s3812 = int_to_ptr.vmem [resolvable:$true] %s3811
          %3817 = dma.vmem_to_hbm [thread:$0]  %s3812, 2048, %s3810, %s3795, 128, 128, 8
        $region48: #{tpu_custom_call.1} parent=35 // pred_fallthru
          _
      $region36: #{tpu_custom_call.1} parent=5 // pred_fallthru
        _
      %p3818 = scmp.le.s32.totalorder 2, %s17
      // Predicated region
      $region49: #{tpu_custom_call.1} parent=5 // pred_check
        %p3819 = pneg %p3818
      $region50: #{tpu_custom_call.1} parent=5 // pred_check_branch
        %3821 = sbr.rel (%p3819) target = $region52
      $region51: #{tpu_custom_call.1} parent=5 // pred_region
        %s3822 = ssub.s32 %s17, 2
        // Predicated region
        $region53: #{tpu_custom_call.1} parent=51 // pred_check
          %p3823 = pneg %p149
        $region54: #{tpu_custom_call.1} parent=51 // pred_check_branch
          %3825 = sbr.rel (%p3823) target = $region56
        $region55: #{tpu_custom_call.1} parent=51 // pred_region
          %s3826 = sand.u32 %s134, 1
          %s3827 = scalar_lea.sflag [#allocation5], %s3826
          %s3828 = sand.u32 %s134, 1
          %s3829 = smul.addr %s3828, 128
          %s3830 = scalar_lea.vmem [#allocation8], %s3829
          %3831 = dma.done %s3827, 2048
        $region56: #{tpu_custom_call.1} parent=51 // pred_fallthru
          _
      $region52: #{tpu_custom_call.1} parent=5 // pred_fallthru
        _
    $region6: #{tpu_custom_call.1} parent=1 // loop_footer
      %s21 = sadd.s32 1, %s17
    $region7: #{tpu_custom_call.1} parent=1 // loop_footer_branch
      %16 = sbr.rel target = $region3
    $region8: #{tpu_custom_call.1} parent=1 // loop_exit
      _
    %3832 = vsyncpa [#allocation4], 1
    %s3833 = scalar_lea.sflag [#allocation4], 1
    %3834 = vsyncpa %s3833, 1
    %3835 = vsyncpa [#allocation7], 1
    %3836 = vsyncpa [#allocation5], 1
    %s3837 = scalar_lea.sflag [#allocation5], 1
    %3838 = vsyncpa %s3837, 1

</llo_original>
